<compile_context>
chip_gen: v7x
topology: tpu7x:2x2x1
jax: 0.10.0
libtpu: 0.0.40
codegen_flags: <defaults>
</compile_context>

<pallas_src>
import functools

import jax
import jax.numpy as jnp
import numpy as np
from jax.experimental import pallas as pl
from jax.experimental.pallas import tpu as pltpu

EPS = 1e-5


def _round_up(v, m):
    return ((v + m - 1) // m) * m


def _pick_vmem_limit():
    """Per-generation VMEM budget: ~75% of physical, capped (v7x: 48 MiB)."""
    try:
        cap = pltpu.get_tpu_info().vmem_capacity_bytes
        return int(min(cap * 3 // 4, 110 * 1024 * 1024))
    except Exception:
        return 48 * 1024 * 1024  # conservative fallback: fits v7x's 64 MiB


def _pick_tile_rows(m, cin, cmid, cout, vmem_limit, max_tile_rows):
    """Rows per tile for the M-tiled kernels: biggest tile within the VMEM
    budget that is a multiple of 8 and divides M."""
    assert m % 8 == 0, "flattened pixel axis must be sublane (8) aligned"
    # Worst-case live bytes per flattened row across the M-tiled kernels,
    # x2 for input/output double buffering.
    bytes_per_row = 2 * (4 * cin + 12 * cmid + 12 * cout)
    budget = vmem_limit // 2  # headroom for weights + compiler scratch
    tm = budget // max(bytes_per_row, 1)
    tm = int(max(8, min(tm, max_tile_rows, m)))
    tm -= tm % 8
    tm = max(tm, 8)
    while m % tm:
        tm -= 8
    return tm


# ------------------------------- kernels ----------------------------------- #

def _conv1_kernel(x_ref, w1_ref, y1_ref, sum_ref, sq_ref):
    # 1x1 conv as [tm,Cin]x[Cin,Cmid] matmul; bf16 MXU inputs, f32 accumulate.
    y = jnp.dot(x_ref[...].astype(jnp.bfloat16), w1_ref[...],
                preferred_element_type=jnp.float32)
    y1_ref[...] = y.astype(jnp.bfloat16)
    # Per-tile BN1 partial stats (single sweep: sum and sum of squares).
    sum_ref[0] = jnp.sum(y, axis=0, keepdims=True)
    sq_ref[0] = jnp.sum(y * y, axis=0, keepdims=True)


def _make_conv3x3_kernel(*, h, w, cmid, halo):
    """3x3 conv (pad=1) over one image, with BN1+ReLU fused on the input."""
    hw = h * w

    def kernel(y1_ref, s1_ref, t1_ref, w2_ref, y2_ref, sum_ref, sq_ref,
               h1pad_ref):
        # BN1 apply (scale/shift precomputed host-side) + ReLU; f32 VPU math.
        h1 = jnp.maximum(
            y1_ref[0].astype(jnp.float32) * s1_ref[...] + t1_ref[...], 0.0)

        # bf16 zero-haloed copy: every 3x3 tap is a static sublane-shifted slice.
        zeros = jnp.zeros((halo, cmid), jnp.bfloat16)
        h1pad_ref[pl.ds(0, halo), :] = zeros
        h1pad_ref[pl.ds(halo + hw, halo), :] = zeros
        h1pad_ref[pl.ds(halo, hw), :] = h1.astype(jnp.bfloat16)

        # Hoisted column-validity masks; row validity is covered by the halo.
        col = jax.lax.broadcasted_iota(jnp.int32, (hw, 1), 0) % w
        mask_l = (col >= 1).astype(jnp.float32)      # may read column-1 neighbor
        mask_r = (col <= w - 2).astype(jnp.float32)  # may read column+1 neighbor

        def tap(dh, dw):
            return h1pad_ref[pl.ds(halo + dh * w + dw, hw), :]

        def group(dw):
            # Three same-column taps; accumulation starts from a dot (no zeros).
            g = jnp.dot(tap(-1, dw), w2_ref[0 + (dw + 1)],
                        preferred_element_type=jnp.float32)
            g = g + jnp.dot(tap(0, dw), w2_ref[3 + (dw + 1)],
                            preferred_element_type=jnp.float32)
            g = g + jnp.dot(tap(1, dw), w2_ref[6 + (dw + 1)],
                            preferred_element_type=jnp.float32)
            return g

        acc = group(0)                        # center column: no mask needed
        acc = acc + mask_l * group(-1)        # masked at image column 0
        acc = acc + mask_r * group(+1)        # masked at image column W-1

        y2_ref[0] = acc.astype(jnp.bfloat16)
        sum_ref[0] = jnp.sum(acc, axis=0, keepdims=True)
        sq_ref[0] = jnp.sum(acc * acc, axis=0, keepdims=True)

    return kernel


def _conv3_kernel(y2_ref, s2_ref, t2_ref, w3_ref, y3_ref, sum_ref, sq_ref):
    # BN2 apply + ReLU fused into the 1x1 expansion conv.
    h2 = jnp.maximum(
        y2_ref[...].astype(jnp.float32) * s2_ref[...] + t2_ref[...], 0.0)
    y3 = jnp.dot(h2.astype(jnp.bfloat16), w3_ref[...],
                 preferred_element_type=jnp.float32)
    y3_ref[...] = y3.astype(jnp.bfloat16)
    sum_ref[0] = jnp.sum(y3, axis=0, keepdims=True)
    sq_ref[0] = jnp.sum(y3 * y3, axis=0, keepdims=True)


def _residual_kernel(y3_ref, x_ref, s3_ref, t3_ref, o_ref):
    # BN3 apply + identity add + final ReLU (single fused elementwise pass).
    o_ref[...] = jnp.maximum(
        y3_ref[...].astype(jnp.float32) * s3_ref[...] + t3_ref[...] + x_ref[...],
        0.0)


# ---------------------- host-side (tiny) BN combine ------------------------- #

def _bn_affine(psum, psq, gamma, beta, m):
    """Combine per-tile partial sums into the training-mode (biased-variance)
    BN folded into one per-channel affine: y*scale + shift."""
    s = jnp.sum(psum, axis=(0, 1))
    sq = jnp.sum(psq, axis=(0, 1))
    mean = s / m
    # TODO(synk): for pathological large-mean activations switch to a centered /
    #             Chan-style combine; raw E[y^2]-E[y]^2 in f32 is adequate here.
    var = jnp.maximum(sq / m - mean * mean, 0.0)
    scale = gamma.astype(jnp.float32) * jax.lax.rsqrt(var + EPS)
    shift = beta.astype(jnp.float32) - mean * scale
    return scale.reshape(1, -1), shift.reshape(1, -1)


# --------------------------------- wrapper ---------------------------------- #

def resnet_block_forward(x_nchw, params, *, max_tile_rows=4096):
    """Forward pass of the bottleneck block (identity_downsample=None, stride=1)."""
    w1, w2, w3 = params["w1"], params["w2"], params["w3"]
    cin, cmid = w1.shape
    cout = w3.shape[1]
    assert w2.shape == (3, 3, cmid, cmid)
    assert cin == cout, "identity add requires in_channels == 4*intermediate_channels"
    # TODO(synk): stride>1 / identity_downsample path not implemented.

    n, c, h, w = x_nchw.shape
    assert c == cin
    hw = h * w
    m = n * hw

    vmem_limit = _pick_vmem_limit()
    tm = _pick_tile_rows(m, cin, cmid, cout, vmem_limit, max_tile_rows)
    nt = m // tm
    cparams = pltpu.CompilerParams(dimension_semantics=("parallel",),
                                   vmem_limit_bytes=vmem_limit)

    # Layout plumbing (XLA side): NCHW -> NHWC -> [M, C]; no lane padding.
    x2d = jnp.transpose(x_nchw, (0, 2, 3, 1)).astype(jnp.float32).reshape(m, cin)

    w1b = w1.astype(jnp.bfloat16)
    w2b = w2.reshape(9, cmid, cmid).astype(jnp.bfloat16)  # [(kh,kw), Cin, Cout]
    w3b = w3.astype(jnp.bfloat16)

    # ---- stage 1: 1x1 conv + BN1 partial stats (grid over M tiles) ----
    y1, s1, q1 = pl.pallas_call(
        _conv1_kernel,
        grid=(nt,),
        in_specs=[pl.BlockSpec((tm, cin), lambda i: (i, 0)),
                  pl.BlockSpec((cin, cmid), lambda i: (0, 0))],
        out_specs=(pl.BlockSpec((tm, cmid), lambda i: (i, 0)),
                   pl.BlockSpec((1, 1, cmid), lambda i: (i, 0, 0)),
                   pl.BlockSpec((1, 1, cmid), lambda i: (i, 0, 0))),
        out_shape=(jax.ShapeDtypeStruct((m, cmid), jnp.bfloat16),
                   jax.ShapeDtypeStruct((nt, 1, cmid), jnp.float32),
                   jax.ShapeDtypeStruct((nt, 1, cmid), jnp.float32)),
        compiler_params=cparams,
        cost_estimate=pl.CostEstimate(
            flops=2 * m * cin * cmid, transcendentals=0,
            bytes_accessed=m * cin * 4 + m * cmid * 2 + cin * cmid * 2),
    )(x2d, w1b)
    scale1, shift1 = _bn_affine(s1, q1, params["g1"], params["b1"], m)

    # ---- stage 2: BN1+ReLU fused into 3x3 conv (grid over images) ----
    halo = _round_up(w + 1, 8)
    conv2_kernel = _make_conv3x3_kernel(h=h, w=w, cmid=cmid, halo=halo)
    y2, s2, q2 = pl.pallas_call(
        conv2_kernel,
        grid=(n,),
        in_specs=[pl.BlockSpec((1, hw, cmid), lambda b: (b, 0, 0)),
                  pl.BlockSpec((1, cmid), lambda b: (0, 0)),
                  pl.BlockSpec((1, cmid), lambda b: (0, 0)),
                  pl.BlockSpec((9, cmid, cmid), lambda b: (0, 0, 0))],
        out_specs=(pl.BlockSpec((1, hw, cmid), lambda b: (b, 0, 0)),
                   pl.BlockSpec((1, 1, cmid), lambda b: (b, 0, 0)),
                   pl.BlockSpec((1, 1, cmid), lambda b: (b, 0, 0))),
        out_shape=(jax.ShapeDtypeStruct((n, hw, cmid), jnp.bfloat16),
                   jax.ShapeDtypeStruct((n, 1, cmid), jnp.float32),
                   jax.ShapeDtypeStruct((n, 1, cmid), jnp.float32)),
        scratch_shapes=[pltpu.VMEM((hw + 2 * halo, cmid), jnp.bfloat16)],
        compiler_params=cparams,
        cost_estimate=pl.CostEstimate(
            flops=2 * m * 9 * cmid * cmid, transcendentals=0,
            bytes_accessed=2 * m * cmid * 2 + 9 * cmid * cmid * 2),
    )(y1.reshape(n, hw, cmid), scale1, shift1, w2b)
    scale2, shift2 = _bn_affine(s2, q2, params["g2"], params["b2"], m)

    # ---- stage 3: BN2+ReLU fused into 1x1 expansion conv (grid over M tiles) ----
    y3, s3, q3 = pl.pallas_call(
        _conv3_kernel,
        grid=(nt,),
        in_specs=[pl.BlockSpec((tm, cmid), lambda i: (i, 0)),
                  pl.BlockSpec((1, cmid), lambda i: (0, 0)),
                  pl.BlockSpec((1, cmid), lambda i: (0, 0)),
                  pl.BlockSpec((cmid, cout), lambda i: (0, 0))],
        out_specs=(pl.BlockSpec((tm, cout), lambda i: (i, 0)),
                   pl.BlockSpec((1, 1, cout), lambda i: (i, 0, 0)),
                   pl.BlockSpec((1, 1, cout), lambda i: (i, 0, 0))),
        out_shape=(jax.ShapeDtypeStruct((m, cout), jnp.bfloat16),
                   jax.ShapeDtypeStruct((nt, 1, cout), jnp.float32),
                   jax.ShapeDtypeStruct((nt, 1, cout), jnp.float32)),
        compiler_params=cparams,
        cost_estimate=pl.CostEstimate(
            flops=2 * m * cmid * cout, transcendentals=0,
            bytes_accessed=m * cmid * 2 + m * cout * 2 + cmid * cout * 2),
    )(y2.reshape(m, cmid), scale2, shift2, w3b)
    scale3, shift3 = _bn_affine(s3, q3, params["g3"], params["b3"], m)

    # ---- stage 4: BN3 + identity add + final ReLU (grid over M tiles) ----
    out2d = pl.pallas_call(
        _residual_kernel,
        grid=(nt,),
        in_specs=[pl.BlockSpec((tm, cout), lambda i: (i, 0)),
                  pl.BlockSpec((tm, cout), lambda i: (i, 0)),
                  pl.BlockSpec((1, cout), lambda i: (0, 0)),
                  pl.BlockSpec((1, cout), lambda i: (0, 0))],
        out_specs=pl.BlockSpec((tm, cout), lambda i: (i, 0)),
        out_shape=jax.ShapeDtypeStruct((m, cout), jnp.float32),
        compiler_params=cparams,
        cost_estimate=pl.CostEstimate(
            flops=3 * m * cout, transcendentals=0,
            bytes_accessed=m * cout * (2 + 4 + 4)),
    )(y3, x2d, scale3, shift3)

    out = out2d.reshape(n, h, w, cout)
    return jnp.transpose(out, (0, 3, 1, 2))  # NHWC -> NCHW


# ---------------------------- pure-JAX reference ---------------------------- #
# Mirrors the kernels' numeric policy: bf16 at the MXU boundary and for the
# inter-stage intermediates, f32 accumulation, BN stats from the f32 accumulator,
# normalization applied to the bf16-stored value, mean folded into the shift.

def _bn_fold(yf, gamma, beta):
    mean = jnp.mean(yf, axis=0, keepdims=True)
    var = jnp.maximum(jnp.mean(yf * yf, axis=0, keepdims=True) - mean * mean, 0.0)
    scale = gamma.astype(jnp.float32) * jax.lax.rsqrt(var + EPS)
    shift = beta.astype(jnp.float32) - mean * scale
    return scale, shift


def _im2col_3x3(x_nhwc):
    xp = jnp.pad(x_nhwc, ((0, 0), (1, 1), (1, 1), (0, 0)))
    nb, hp, wp, cc = xp.shape
    hh, ww = hp - 2, wp - 2
    taps = [xp[:, kh:kh + hh, kw:kw + ww, :] for kh in range(3) for kw in range(3)]
    return jnp.concatenate(taps, axis=-1).reshape(nb * hh * ww, 9 * cc)


def reference_forward(x_nchw, params):
    xT = jnp.transpose(x_nchw, (0, 2, 3, 1)).astype(jnp.float32)
    n, h, w, cin = xT.shape
    m = n * h * w
    x2d = xT.reshape(m, cin)
    cmid = params["w1"].shape[1]
    cout = params["w3"].shape[1]

    y1f = jnp.dot(x2d.astype(jnp.bfloat16), params["w1"].astype(jnp.bfloat16),
                  preferred_element_type=jnp.float32)
    s1, t1 = _bn_fold(y1f, params["g1"], params["b1"])
    h1 = jnp.maximum(y1f.astype(jnp.bfloat16).astype(jnp.float32) * s1 + t1, 0.0)

    cols = _im2col_3x3(h1.reshape(n, h, w, cmid).astype(jnp.bfloat16))
    y2f = jnp.dot(cols, params["w2"].reshape(9 * cmid, cmid).astype(jnp.bfloat16),
                  preferred_element_type=jnp.float32)
    s2, t2 = _bn_fold(y2f, params["g2"], params["b2"])
    h2 = jnp.maximum(y2f.astype(jnp.bfloat16).astype(jnp.float32) * s2 + t2, 0.0)

    y3f = jnp.dot(h2.astype(jnp.bfloat16), params["w3"].astype(jnp.bfloat16),
                  preferred_element_type=jnp.float32)
    s3, t3 = _bn_fold(y3f, params["g3"], params["b3"])
    out2d = jnp.maximum(
        y3f.astype(jnp.bfloat16).astype(jnp.float32) * s3 + t3 + x2d, 0.0)
    return jnp.transpose(out2d.reshape(n, h, w, cout), (0, 3, 1, 2))


# ----------------------------------- main ----------------------------------- #

if __name__ == "__main__":
    # Identity add (no downsample) requires in_channels == 4 * intermediate_channels.
    N, Cin, H, W = 2, 16, 16, 16
    Cmid = 4
    Cout = 4 * Cmid  # == Cin

    key = jax.random.PRNGKey(0)
    ks = jax.random.split(key, 10)

    x = jax.random.normal(ks[0], (N, Cin, H, W), jnp.float32)

    params = {
        # conv weights stored in matmul form: [K_in, C_out]
        "w1": 0.1 * jax.random.normal(ks[1], (Cin, Cmid), jnp.float32),
        "g1": 1.0 + 0.1 * jax.random.normal(ks[2], (Cmid,), jnp.float32),
        "b1": 0.1 * jax.random.normal(ks[3], (Cmid,), jnp.float32),
        # 3x3 conv weight: [kh, kw, C_in, C_out]
        "w2": 0.1 * jax.random.normal(ks[4], (3, 3, Cmid, Cmid), jnp.float32),
        "g2": 1.0 + 0.1 * jax.random.normal(ks[5], (Cmid,), jnp.float32),
        "b2": 0.1 * jax.random.normal(ks[6], (Cmid,), jnp.float32),
        "w3": 0.1 * jax.random.normal(ks[7], (Cmid, Cout), jnp.float32),
        "g3": 1.0 + 0.1 * jax.random.normal(ks[8], (Cout,), jnp.float32),
        "b3": 0.1 * jax.random.normal(ks[9], (Cout,), jnp.float32),
    }

    # Small tile cap so the toy shapes exercise the multi-tile grid + partial-stats path.
    fwd = jax.jit(functools.partial(resnet_block_forward, max_tile_rows=128))
    out = jax.block_until_ready(fwd(x, params))
    ref = jax.block_until_ready(reference_forward(x, params))

    np.testing.assert_allclose(np.asarray(out), np.asarray(ref), rtol=2e-3, atol=2e-3)
    assert out.shape == (N, Cout, H, W)
    assert np.all(np.asarray(out) >= 0.0)  # final ReLU

    print("KERNEL_OK")
</pallas_src>

<mosaic_0001>
module attributes {stable_mosaic.version = 11 : i64} {
  func.func @_conv1_kernel(%arg0: i32, %arg1: memref<128x16xf32, #tpu.memory_space<vmem>>, %arg2: memref<16x4xbf16, #tpu.memory_space<vmem>>, %arg3: memref<128x4xbf16, #tpu.memory_space<vmem>>, %arg4: memref<1x1x4xf32, #tpu.memory_space<vmem>>, %arg5: memref<1x1x4xf32, #tpu.memory_space<vmem>>) attributes {dimension_semantics = [#tpu.dimension_semantics<parallel>], iteration_bounds = array<i64: 4>, scalar_prefetch = 0 : i64, scratch_operands = 0 : i64, tpu.core_type = #tpu.core_type<tc>, window_params = [{transform_indices = @transform_0, window_bounds = array<i64: 128, 16>}, {pipeline_mode = #tpu.pipeline_mode<synchronous>, transform_indices = @transform_1, window_bounds = array<i64: 16, 4>}, {transform_indices = @transform_2, window_bounds = array<i64: 128, 4>}, {transform_indices = @transform_3, window_bounds = array<i64: 1, 1, 4>}, {transform_indices = @transform_4, window_bounds = array<i64: 1, 1, 4>}]} {
    %c0 = arith.constant 0 : index
    %c0_0 = arith.constant 0 : index
    %0 = vector.load %arg1[%c0, %c0_0] : memref<128x16xf32, #tpu.memory_space<vmem>>, vector<128x16xf32>
    %1 = arith.truncf %0 : vector<128x16xf32> to vector<128x16xbf16>
    %c0_1 = arith.constant 0 : index
    %c0_2 = arith.constant 0 : index
    %2 = vector.load %arg2[%c0_1, %c0_2] : memref<16x4xbf16, #tpu.memory_space<vmem>>, vector<16x4xbf16>
    %cst = arith.constant dense<0.000000e+00> : vector<128x4xf32>
    %3 = tpu.matmul %1, %2, %cst {dimension_numbers = #tpu.dot_dimension_numbers<[1], [0], [0], [1], [0, 0, 1, 1], [], []>} : vector<128x16xbf16>, vector<16x4xbf16>, vector<128x4xf32> -> vector<128x4xf32>
    %4 = arith.truncf %3 : vector<128x4xf32> to vector<128x4xbf16>
    %c0_3 = arith.constant 0 : index
    %c0_4 = arith.constant 0 : index
    %5 = vector.load %arg3[%c0_3, %c0_4] : memref<128x4xbf16, #tpu.memory_space<vmem>>, vector<128x4xbf16>
    tpu.vector_store %arg3[%c0_3, %c0_4], %4 {strides = array<i32>} : memref<128x4xbf16, #tpu.memory_space<vmem>>, vector<128x4xbf16>,
    %cst_5 = arith.constant dense<0.000000e+00> : vector<4xf32>
    %6 = vector.multi_reduction <add>, %3, %cst_5 [0] : vector<128x4xf32> to vector<4xf32>
    %7 = vector.shape_cast %6 : vector<4xf32> to vector<1x4xf32>
    %c0_6 = arith.constant 0 : index
    %c0_7 = arith.constant 0 : index
    %c0_8 = arith.constant 0 : index
    %8 = vector.load %arg4[%c0_6, %c0_7, %c0_8] : memref<1x1x4xf32, #tpu.memory_space<vmem>>, vector<1x1x4xf32>
    %9 = vector.shape_cast %8 : vector<1x1x4xf32> to vector<1x4xf32>
    %10 = vector.shape_cast %7 : vector<1x4xf32> to vector<1x1x4xf32>
    tpu.vector_store %arg4[%c0_6, %c0_7, %c0_8], %10 {strides = array<i32>} : memref<1x1x4xf32, #tpu.memory_space<vmem>>, vector<1x1x4xf32>,
    %11 = arith.mulf %3, %3 : vector<128x4xf32>
    %cst_9 = arith.constant dense<0.000000e+00> : vector<4xf32>
    %12 = vector.multi_reduction <add>, %11, %cst_9 [0] : vector<128x4xf32> to vector<4xf32>
    %13 = vector.shape_cast %12 : vector<4xf32> to vector<1x4xf32>
    %c0_10 = arith.constant 0 : index
    %c0_11 = arith.constant 0 : index
    %c0_12 = arith.constant 0 : index
    %14 = vector.load %arg5[%c0_10, %c0_11, %c0_12] : memref<1x1x4xf32, #tpu.memory_space<vmem>>, vector<1x1x4xf32>
    %15 = vector.shape_cast %14 : vector<1x1x4xf32> to vector<1x4xf32>
    %16 = vector.shape_cast %13 : vector<1x4xf32> to vector<1x1x4xf32>
    tpu.vector_store %arg5[%c0_10, %c0_11, %c0_12], %16 {strides = array<i32>} : memref<1x1x4xf32, #tpu.memory_space<vmem>>, vector<1x1x4xf32>,
    return
  }
  func.func @transform_0(%arg0: i32) -> (i32, i32) {
    %c0_i32 = arith.constant 0 : i32
    %c0_i32_0 = arith.constant 0 : i32
    return %arg0, %c0_i32 : i32, i32
  }
  func.func @transform_1(%arg0: i32) -> (i32, i32) {
    %c0_i32 = arith.constant 0 : i32
    %c0_i32_0 = arith.constant 0 : i32
    %c0_i32_1 = arith.constant 0 : i32
    return %c0_i32, %c0_i32_0 : i32, i32
  }
  func.func @transform_2(%arg0: i32) -> (i32, i32) {
    %c0_i32 = arith.constant 0 : i32
    %c0_i32_0 = arith.constant 0 : i32
    return %arg0, %c0_i32 : i32, i32
  }
  func.func @transform_3(%arg0: i32) -> (i32, i32, i32) {
    %c0_i32 = arith.constant 0 : i32
    %c0_i32_0 = arith.constant 0 : i32
    %c0_i32_1 = arith.constant 0 : i32
    return %arg0, %c0_i32, %c0_i32_0 : i32, i32, i32
  }
  func.func @transform_4(%arg0: i32) -> (i32, i32, i32) {
    %c0_i32 = arith.constant 0 : i32
    %c0_i32_0 = arith.constant 0 : i32
    %c0_i32_1 = arith.constant 0 : i32
    return %arg0, %c0_i32, %c0_i32_0 : i32, i32, i32
  }
}

module attributes {stable_mosaic.version = 11 : i64} {
  func.func @kernel(%arg0: i32, %arg1: memref<1x256x4xbf16, #tpu.memory_space<vmem>>, %arg2: memref<1x4xf32, #tpu.memory_space<vmem>>, %arg3: memref<1x4xf32, #tpu.memory_space<vmem>>, %arg4: memref<9x4x4xbf16, #tpu.memory_space<vmem>>, %arg5: memref<1x256x4xbf16, #tpu.memory_space<vmem>>, %arg6: memref<1x1x4xf32, #tpu.memory_space<vmem>>, %arg7: memref<1x1x4xf32, #tpu.memory_space<vmem>>, %arg8: memref<304x4xbf16, #tpu.memory_space<vmem>>) attributes {dimension_semantics = [#tpu.dimension_semantics<parallel>], iteration_bounds = array<i64: 2>, scalar_prefetch = 0 : i64, scratch_operands = 1 : i64, tpu.core_type = #tpu.core_type<tc>, window_params = [{transform_indices = @transform_0, window_bounds = array<i64: 1, 256, 4>}, {pipeline_mode = #tpu.pipeline_mode<synchronous>, transform_indices = @transform_1, window_bounds = array<i64: 1, 4>}, {pipeline_mode = #tpu.pipeline_mode<synchronous>, transform_indices = @transform_2, window_bounds = array<i64: 1, 4>}, {pipeline_mode = #tpu.pipeline_mode<synchronous>, transform_indices = @transform_3, window_bounds = array<i64: 9, 4, 4>}, {transform_indices = @transform_4, window_bounds = array<i64: 1, 256, 4>}, {transform_indices = @transform_5, window_bounds = array<i64: 1, 1, 4>}, {transform_indices = @transform_6, window_bounds = array<i64: 1, 1, 4>}]} {
    %c0 = arith.constant 0 : index
    %c0_0 = arith.constant 0 : index
    %c0_1 = arith.constant 0 : index
    %0 = vector.load %arg1[%c0, %c0_0, %c0_1] : memref<1x256x4xbf16, #tpu.memory_space<vmem>>, vector<1x256x4xbf16>
    %1 = vector.shape_cast %0 : vector<1x256x4xbf16> to vector<256x4xbf16>
    %2 = arith.extf %1 : vector<256x4xbf16> to vector<256x4xf32>
    %c0_2 = arith.constant 0 : index
    %c0_3 = arith.constant 0 : index
    %3 = vector.load %arg2[%c0_2, %c0_3] : memref<1x4xf32, #tpu.memory_space<vmem>>, vector<1x4xf32>
    %4 = vector.broadcast %3 : vector<1x4xf32> to vector<256x4xf32>
    %5 = arith.mulf %2, %4 : vector<256x4xf32>
    %c0_4 = arith.constant 0 : index
    %c0_5 = arith.constant 0 : index
    %6 = vector.load %arg3[%c0_4, %c0_5] : memref<1x4xf32, #tpu.memory_space<vmem>>, vector<1x4xf32>
    %7 = vector.broadcast %6 : vector<1x4xf32> to vector<256x4xf32>
    %8 = arith.addf %5, %7 : vector<256x4xf32>
    %cst = arith.constant 0.000000e+00 : f32
    %9 = vector.broadcast %cst : f32 to vector<256x4xf32>
    %10 = arith.maximumf %8, %9 : vector<256x4xf32>
    %cst_6 = arith.constant 0.000000e+00 : bf16
    %11 = vector.broadcast %cst_6 : bf16 to vector<24x4xbf16>
    %c0_7 = arith.constant 0 : index
    %c0_8 = arith.constant 0 : index
    %12 = vector.load %arg8[%c0_7, %c0_8] : memref<304x4xbf16, #tpu.memory_space<vmem>>, vector<24x4xbf16>
    tpu.vector_store %arg8[%c0_7, %c0_8], %11 {strides = array<i32>} : memref<304x4xbf16, #tpu.memory_space<vmem>>, vector<24x4xbf16>,
    %c280 = arith.constant 280 : index
    %c0_9 = arith.constant 0 : index
    %13 = vector.load %arg8[%c280, %c0_9] : memref<304x4xbf16, #tpu.memory_space<vmem>>, vector<24x4xbf16>
    tpu.vector_store %arg8[%c280, %c0_9], %11 {strides = array<i32>} : memref<304x4xbf16, #tpu.memory_space<vmem>>, vector<24x4xbf16>,
    %14 = arith.truncf %10 : vector<256x4xf32> to vector<256x4xbf16>
    %c24 = arith.constant 24 : index
    %c0_10 = arith.constant 0 : index
    %15 = vector.load %arg8[%c24, %c0_10] : memref<304x4xbf16, #tpu.memory_space<vmem>>, vector<256x4xbf16>
    tpu.vector_store %arg8[%c24, %c0_10], %14 {strides = array<i32>} : memref<304x4xbf16, #tpu.memory_space<vmem>>, vector<256x4xbf16>,
    %16 = tpu.iota {dimensions = array<i32: 0>} : vector<256x1xi32>
    %c16_i32 = arith.constant 16 : i32
    %c0_i32 = arith.constant 0 : i32
    %17 = arith.cmpi eq, %c16_i32, %c0_i32 : i32
    %c1_i32 = arith.constant 1 : i32
    %18 = arith.select %17, %c1_i32, %c16_i32 : i32
    %19 = vector.broadcast %18 : i32 to vector<256x1xi32>
    %20 = arith.remsi %16, %19 : vector<256x1xi32>
    %c0_i32_11 = arith.constant 0 : i32
    %21 = vector.broadcast %c0_i32_11 : i32 to vector<256x1xi32>
    %22 = arith.cmpi ne, %20, %21 : vector<256x1xi32>
    %c0_i32_12 = arith.constant 0 : i32
    %23 = vector.broadcast %c0_i32_12 : i32 to vector<256x1xi32>
    %24 = arith.cmpi slt, %20, %23 : vector<256x1xi32>
    %c0_i32_13 = arith.constant 0 : i32
    %25 = arith.cmpi slt, %18, %c0_i32_13 : i32
    %26 = vector.broadcast %25 : i1 to vector<256x1xi1>
    %27 = vector.broadcast %26 : vector<256x1xi1> to vector<256x1xi1>
    %28 = arith.xori %24, %27 : vector<256x1xi1>
    %29 = arith.andi %28, %22 : vector<256x1xi1>
    %30 = vector.broadcast %18 : i32 to vector<256x1xi32>
    %31 = arith.addi %20, %30 : vector<256x1xi32>
    %32 = arith.select %29, %31, %20 : vector<256x1xi1>, vector<256x1xi32>
    %c1_i32_14 = arith.constant 1 : i32
    %33 = vector.broadcast %c1_i32_14 : i32 to vector<256x1xi32>
    %34 = arith.cmpi sge, %32, %33 : vector<256x1xi32>
    %35 = arith.extui %34 : vector<256x1xi1> to vector<256x1xi32>
    %36 = arith.sitofp %35 : vector<256x1xi32> to vector<256x1xf32>
    %c14_i32 = arith.constant 14 : i32
    %37 = vector.broadcast %c14_i32 : i32 to vector<256x1xi32>
    %38 = arith.cmpi sle, %32, %37 : vector<256x1xi32>
    %39 = arith.extui %38 : vector<256x1xi1> to vector<256x1xi32>
    %40 = arith.sitofp %39 : vector<256x1xi32> to vector<256x1xf32>
    %c8 = arith.constant 8 : index
    %c0_15 = arith.constant 0 : index
    %41 = vector.load %arg8[%c8, %c0_15] : memref<304x4xbf16, #tpu.memory_space<vmem>>, vector<256x4xbf16>
    %c1 = arith.constant 1 : index
    %c0_16 = arith.constant 0 : index
    %c0_17 = arith.constant 0 : index
    %42 = vector.load %arg4[%c1, %c0_16, %c0_17] : memref<9x4x4xbf16, #tpu.memory_space<vmem>>, vector<1x4x4xbf16>
    %43 = vector.shape_cast %42 : vector<1x4x4xbf16> to vector<4x4xbf16>
    %cst_18 = arith.constant dense<0.000000e+00> : vector<256x4xf32>
    %44 = tpu.matmul %41, %43, %cst_18 {dimension_numbers = #tpu.dot_dimension_numbers<[1], [0], [0], [1], [0, 0, 1, 1], [], []>} : vector<256x4xbf16>, vector<4x4xbf16>, vector<256x4xf32> -> vector<256x4xf32>
    %c24_19 = arith.constant 24 : index
    %c0_20 = arith.constant 0 : index
    %45 = vector.load %arg8[%c24_19, %c0_20] : memref<304x4xbf16, #tpu.memory_space<vmem>>, vector<256x4xbf16>
    %c4 = arith.constant 4 : index
    %c0_21 = arith.constant 0 : index
    %c0_22 = arith.constant 0 : index
    %46 = vector.load %arg4[%c4, %c0_21, %c0_22] : memref<9x4x4xbf16, #tpu.memory_space<vmem>>, vector<1x4x4xbf16>
    %47 = vector.shape_cast %46 : vector<1x4x4xbf16> to vector<4x4xbf16>
    %cst_23 = arith.constant dense<0.000000e+00> : vector<256x4xf32>
    %48 = tpu.matmul %45, %47, %cst_23 {dimension_numbers = #tpu.dot_dimension_numbers<[1], [0], [0], [1], [0, 0, 1, 1], [], []>} : vector<256x4xbf16>, vector<4x4xbf16>, vector<256x4xf32> -> vector<256x4xf32>
    %49 = arith.addf %44, %48 : vector<256x4xf32>
    %c40 = arith.constant 40 : index
    %c0_24 = arith.constant 0 : index
    %50 = vector.load %arg8[%c40, %c0_24] : memref<304x4xbf16, #tpu.memory_space<vmem>>, vector<256x4xbf16>
    %c7 = arith.constant 7 : index
    %c0_25 = arith.constant 0 : index
    %c0_26 = arith.constant 0 : index
    %51 = vector.load %arg4[%c7, %c0_25, %c0_26] : memref<9x4x4xbf16, #tpu.memory_space<vmem>>, vector<1x4x4xbf16>
    %52 = vector.shape_cast %51 : vector<1x4x4xbf16> to vector<4x4xbf16>
    %cst_27 = arith.constant dense<0.000000e+00> : vector<256x4xf32>
    %53 = tpu.matmul %50, %52, %cst_27 {dimension_numbers = #tpu.dot_dimension_numbers<[1], [0], [0], [1], [0, 0, 1, 1], [], []>} : vector<256x4xbf16>, vector<4x4xbf16>, vector<256x4xf32> -> vector<256x4xf32>
    %54 = arith.addf %49, %53 : vector<256x4xf32>
    %c7_28 = arith.constant 7 : index
    %c0_29 = arith.constant 0 : index
    %55 = vector.load %arg8[%c7_28, %c0_29] : memref<304x4xbf16, #tpu.memory_space<vmem>>, vector<256x4xbf16>
    %c0_30 = arith.constant 0 : index
    %c0_31 = arith.constant 0 : index
    %c0_32 = arith.constant 0 : index
    %56 = vector.load %arg4[%c0_30, %c0_31, %c0_32] : memref<9x4x4xbf16, #tpu.memory_space<vmem>>, vector<1x4x4xbf16>
    %57 = vector.shape_cast %56 : vector<1x4x4xbf16> to vector<4x4xbf16>
    %cst_33 = arith.constant dense<0.000000e+00> : vector<256x4xf32>
    %58 = tpu.matmul %55, %57, %cst_33 {dimension_numbers = #tpu.dot_dimension_numbers<[1], [0], [0], [1], [0, 0, 1, 1], [], []>} : vector<256x4xbf16>, vector<4x4xbf16>, vector<256x4xf32> -> vector<256x4xf32>
    %c23 = arith.constant 23 : index
    %c0_34 = arith.constant 0 : index
    %59 = vector.load %arg8[%c23, %c0_34] : memref<304x4xbf16, #tpu.memory_space<vmem>>, vector<256x4xbf16>
    %c3 = arith.constant 3 : index
    %c0_35 = arith.constant 0 : index
    %c0_36 = arith.constant 0 : index
    %60 = vector.load %arg4[%c3, %c0_35, %c0_36] : memref<9x4x4xbf16, #tpu.memory_space<vmem>>, vector<1x4x4xbf16>
    %61 = vector.shape_cast %60 : vector<1x4x4xbf16> to vector<4x4xbf16>
    %cst_37 = arith.constant dense<0.000000e+00> : vector<256x4xf32>
    %62 = tpu.matmul %59, %61, %cst_37 {dimension_numbers = #tpu.dot_dimension_numbers<[1], [0], [0], [1], [0, 0, 1, 1], [], []>} : vector<256x4xbf16>, vector<4x4xbf16>, vector<256x4xf32> -> vector<256x4xf32>
    %63 = arith.addf %58, %62 : vector<256x4xf32>
    %c39 = arith.constant 39 : index
    %c0_38 = arith.constant 0 : index
    %64 = vector.load %arg8[%c39, %c0_38] : memref<304x4xbf16, #tpu.memory_space<vmem>>, vector<256x4xbf16>
    %c6 = arith.constant 6 : index
    %c0_39 = arith.constant 0 : index
    %c0_40 = arith.constant 0 : index
    %65 = vector.load %arg4[%c6, %c0_39, %c0_40] : memref<9x4x4xbf16, #tpu.memory_space<vmem>>, vector<1x4x4xbf16>
    %66 = vector.shape_cast %65 : vector<1x4x4xbf16> to vector<4x4xbf16>
    %cst_41 = arith.constant dense<0.000000e+00> : vector<256x4xf32>
    %67 = tpu.matmul %64, %66, %cst_41 {dimension_numbers = #tpu.dot_dimension_numbers<[1], [0], [0], [1], [0, 0, 1, 1], [], []>} : vector<256x4xbf16>, vector<4x4xbf16>, vector<256x4xf32> -> vector<256x4xf32>
    %68 = arith.addf %63, %67 : vector<256x4xf32>
    %69 = vector.broadcast %36 : vector<256x1xf32> to vector<256x4xf32>
    %70 = arith.mulf %69, %68 : vector<256x4xf32>
    %71 = arith.addf %54, %70 : vector<256x4xf32>
    %c9 = arith.constant 9 : index
    %c0_42 = arith.constant 0 : index
    %72 = vector.load %arg8[%c9, %c0_42] : memref<304x4xbf16, #tpu.memory_space<vmem>>, vector<256x4xbf16>
    %c2 = arith.constant 2 : index
    %c0_43 = arith.constant 0 : index
    %c0_44 = arith.constant 0 : index
    %73 = vector.load %arg4[%c2, %c0_43, %c0_44] : memref<9x4x4xbf16, #tpu.memory_space<vmem>>, vector<1x4x4xbf16>
    %74 = vector.shape_cast %73 : vector<1x4x4xbf16> to vector<4x4xbf16>
    %cst_45 = arith.constant dense<0.000000e+00> : vector<256x4xf32>
    %75 = tpu.matmul %72, %74, %cst_45 {dimension_numbers = #tpu.dot_dimension_numbers<[1], [0], [0], [1], [0, 0, 1, 1], [], []>} : vector<256x4xbf16>, vector<4x4xbf16>, vector<256x4xf32> -> vector<256x4xf32>
    %c25 = arith.constant 25 : index
    %c0_46 = arith.constant 0 : index
    %76 = vector.load %arg8[%c25, %c0_46] : memref<304x4xbf16, #tpu.memory_space<vmem>>, vector<256x4xbf16>
    %c5 = arith.constant 5 : index
    %c0_47 = arith.constant 0 : index
    %c0_48 = arith.constant 0 : index
    %77 = vector.load %arg4[%c5, %c0_47, %c0_48] : memref<9x4x4xbf16, #tpu.memory_space<vmem>>, vector<1x4x4xbf16>
    %78 = vector.shape_cast %77 : vector<1x4x4xbf16> to vector<4x4xbf16>
    %cst_49 = arith.constant dense<0.000000e+00> : vector<256x4xf32>
    %79 = tpu.matmul %76, %78, %cst_49 {dimension_numbers = #tpu.dot_dimension_numbers<[1], [0], [0], [1], [0, 0, 1, 1], [], []>} : vector<256x4xbf16>, vector<4x4xbf16>, vector<256x4xf32> -> vector<256x4xf32>
    %80 = arith.addf %75, %79 : vector<256x4xf32>
    %c41 = arith.constant 41 : index
    %c0_50 = arith.constant 0 : index
    %81 = vector.load %arg8[%c41, %c0_50] : memref<304x4xbf16, #tpu.memory_space<vmem>>, vector<256x4xbf16>
    %c8_51 = arith.constant 8 : index
    %c0_52 = arith.constant 0 : index
    %c0_53 = arith.constant 0 : index
    %82 = vector.load %arg4[%c8_51, %c0_52, %c0_53] : memref<9x4x4xbf16, #tpu.memory_space<vmem>>, vector<1x4x4xbf16>
    %83 = vector.shape_cast %82 : vector<1x4x4xbf16> to vector<4x4xbf16>
    %cst_54 = arith.constant dense<0.000000e+00> : vector<256x4xf32>
    %84 = tpu.matmul %81, %83, %cst_54 {dimension_numbers = #tpu.dot_dimension_numbers<[1], [0], [0], [1], [0, 0, 1, 1], [], []>} : vector<256x4xbf16>, vector<4x4xbf16>, vector<256x4xf32> -> vector<256x4xf32>
    %85 = arith.addf %80, %84 : vector<256x4xf32>
    %86 = vector.broadcast %40 : vector<256x1xf32> to vector<256x4xf32>
    %87 = arith.mulf %86, %85 : vector<256x4xf32>
    %88 = arith.addf %71, %87 : vector<256x4xf32>
    %89 = arith.truncf %88 : vector<256x4xf32> to vector<256x4xbf16>
    %c0_55 = arith.constant 0 : index
    %c0_56 = arith.constant 0 : index
    %c0_57 = arith.constant 0 : index
    %90 = vector.load %arg5[%c0_55, %c0_56, %c0_57] : memref<1x256x4xbf16, #tpu.memory_space<vmem>>, vector<1x256x4xbf16>
    %91 = vector.shape_cast %90 : vector<1x256x4xbf16> to vector<256x4xbf16>
    %92 = vector.shape_cast %89 : vector<256x4xbf16> to vector<1x256x4xbf16>
    tpu.vector_store %arg5[%c0_55, %c0_56, %c0_57], %92 {strides = array<i32>} : memref<1x256x4xbf16, #tpu.memory_space<vmem>>, vector<1x256x4xbf16>,
    %cst_58 = arith.constant dense<0.000000e+00> : vector<4xf32>
    %93 = vector.multi_reduction <add>, %88, %cst_58 [0] : vector<256x4xf32> to vector<4xf32>
    %94 = vector.shape_cast %93 : vector<4xf32> to vector<1x4xf32>
    %c0_59 = arith.constant 0 : index
    %c0_60 = arith.constant 0 : index
    %c0_61 = arith.constant 0 : index
    %95 = vector.load %arg6[%c0_59, %c0_60, %c0_61] : memref<1x1x4xf32, #tpu.memory_space<vmem>>, vector<1x1x4xf32>
    %96 = vector.shape_cast %95 : vector<1x1x4xf32> to vector<1x4xf32>
    %97 = vector.shape_cast %94 : vector<1x4xf32> to vector<1x1x4xf32>
    tpu.vector_store %arg6[%c0_59, %c0_60, %c0_61], %97 {strides = array<i32>} : memref<1x1x4xf32, #tpu.memory_space<vmem>>, vector<1x1x4xf32>,
    %98 = arith.mulf %88, %88 : vector<256x4xf32>
    %cst_62 = arith.constant dense<0.000000e+00> : vector<4xf32>
    %99 = vector.multi_reduction <add>, %98, %cst_62 [0] : vector<256x4xf32> to vector<4xf32>
    %100 = vector.shape_cast %99 : vector<4xf32> to vector<1x4xf32>
    %c0_63 = arith.constant 0 : index
    %c0_64 = arith.constant 0 : index
    %c0_65 = arith.constant 0 : index
    %101 = vector.load %arg7[%c0_63, %c0_64, %c0_65] : memref<1x1x4xf32, #tpu.memory_space<vmem>>, vector<1x1x4xf32>
    %102 = vector.shape_cast %101 : vector<1x1x4xf32> to vector<1x4xf32>
    %103 = vector.shape_cast %100 : vector<1x4xf32> to vector<1x1x4xf32>
    tpu.vector_store %arg7[%c0_63, %c0_64, %c0_65], %103 {strides = array<i32>} : memref<1x1x4xf32, #tpu.memory_space<vmem>>, vector<1x1x4xf32>,
    return
  }
  func.func @transform_0(%arg0: i32) -> (i32, i32, i32) {
    %c0_i32 = arith.constant 0 : i32
    %c0_i32_0 = arith.constant 0 : i32
    %c0_i32_1 = arith.constant 0 : i32
    return %arg0, %c0_i32, %c0_i32_0 : i32, i32, i32
  }
  func.func @transform_1(%arg0: i32) -> (i32, i32) {
    %c0_i32 = arith.constant 0 : i32
    %c0_i32_0 = arith.constant 0 : i32
    %c0_i32_1 = arith.constant 0 : i32
    return %c0_i32, %c0_i32_0 : i32, i32
  }
  func.func @transform_2(%arg0: i32) -> (i32, i32) {
    %c0_i32 = arith.constant 0 : i32
    %c0_i32_0 = arith.constant 0 : i32
    %c0_i32_1 = arith.constant 0 : i32
    return %c0_i32, %c0_i32_0 : i32, i32
  }
  func.func @transform_3(%arg0: i32) -> (i32, i32, i32) {
    %c0_i32 = arith.constant 0 : i32
    %c0_i32_0 = arith.constant 0 : i32
    %c0_i32_1 = arith.constant 0 : i32
    %c0_i32_2 = arith.constant 0 : i32
    return %c0_i32, %c0_i32_0, %c0_i32_1 : i32, i32, i32
  }
  func.func @transform_4(%arg0: i32) -> (i32, i32, i32) {
    %c0_i32 = arith.constant 0 : i32
    %c0_i32_0 = arith.constant 0 : i32
    %c0_i32_1 = arith.constant 0 : i32
    return %arg0, %c0_i32, %c0_i32_0 : i32, i32, i32
  }
  func.func @transform_5(%arg0: i32) -> (i32, i32, i32) {
    %c0_i32 = arith.constant 0 : i32
    %c0_i32_0 = arith.constant 0 : i32
    %c0_i32_1 = arith.constant 0 : i32
    return %arg0, %c0_i32, %c0_i32_0 : i32, i32, i32
  }
  func.func @transform_6(%arg0: i32) -> (i32, i32, i32) {
    %c0_i32 = arith.constant 0 : i32
    %c0_i32_0 = arith.constant 0 : i32
    %c0_i32_1 = arith.constant 0 : i32
    return %arg0, %c0_i32, %c0_i32_0 : i32, i32, i32
  }
}

module attributes {stable_mosaic.version = 11 : i64} {
  func.func @_conv3_kernel(%arg0: i32, %arg1: memref<128x4xbf16, #tpu.memory_space<vmem>>, %arg2: memref<1x4xf32, #tpu.memory_space<vmem>>, %arg3: memref<1x4xf32, #tpu.memory_space<vmem>>, %arg4: memref<4x16xbf16, #tpu.memory_space<vmem>>, %arg5: memref<128x16xbf16, #tpu.memory_space<vmem>>, %arg6: memref<1x1x16xf32, #tpu.memory_space<vmem>>, %arg7: memref<1x1x16xf32, #tpu.memory_space<vmem>>) attributes {dimension_semantics = [#tpu.dimension_semantics<parallel>], iteration_bounds = array<i64: 4>, scalar_prefetch = 0 : i64, scratch_operands = 0 : i64, tpu.core_type = #tpu.core_type<tc>, window_params = [{transform_indices = @transform_0, window_bounds = array<i64: 128, 4>}, {pipeline_mode = #tpu.pipeline_mode<synchronous>, transform_indices = @transform_1, window_bounds = array<i64: 1, 4>}, {pipeline_mode = #tpu.pipeline_mode<synchronous>, transform_indices = @transform_2, window_bounds = array<i64: 1, 4>}, {pipeline_mode = #tpu.pipeline_mode<synchronous>, transform_indices = @transform_3, window_bounds = array<i64: 4, 16>}, {transform_indices = @transform_4, window_bounds = array<i64: 128, 16>}, {transform_indices = @transform_5, window_bounds = array<i64: 1, 1, 16>}, {transform_indices = @transform_6, window_bounds = array<i64: 1, 1, 16>}]} {
    %c0 = arith.constant 0 : index
    %c0_0 = arith.constant 0 : index
    %0 = vector.load %arg1[%c0, %c0_0] : memref<128x4xbf16, #tpu.memory_space<vmem>>, vector<128x4xbf16>
    %1 = arith.extf %0 : vector<128x4xbf16> to vector<128x4xf32>
    %c0_1 = arith.constant 0 : index
    %c0_2 = arith.constant 0 : index
    %2 = vector.load %arg2[%c0_1, %c0_2] : memref<1x4xf32, #tpu.memory_space<vmem>>, vector<1x4xf32>
    %3 = vector.broadcast %2 : vector<1x4xf32> to vector<128x4xf32>
    %4 = arith.mulf %1, %3 : vector<128x4xf32>
    %c0_3 = arith.constant 0 : index
    %c0_4 = arith.constant 0 : index
    %5 = vector.load %arg3[%c0_3, %c0_4] : memref<1x4xf32, #tpu.memory_space<vmem>>, vector<1x4xf32>
    %6 = vector.broadcast %5 : vector<1x4xf32> to vector<128x4xf32>
    %7 = arith.addf %4, %6 : vector<128x4xf32>
    %cst = arith.constant 0.000000e+00 : f32
    %8 = vector.broadcast %cst : f32 to vector<128x4xf32>
    %9 = arith.maximumf %7, %8 : vector<128x4xf32>
    %10 = arith.truncf %9 : vector<128x4xf32> to vector<128x4xbf16>
    %c0_5 = arith.constant 0 : index
    %c0_6 = arith.constant 0 : index
    %11 = vector.load %arg4[%c0_5, %c0_6] : memref<4x16xbf16, #tpu.memory_space<vmem>>, vector<4x16xbf16>
    %cst_7 = arith.constant dense<0.000000e+00> : vector<128x16xf32>
    %12 = tpu.matmul %10, %11, %cst_7 {dimension_numbers = #tpu.dot_dimension_numbers<[1], [0], [0], [1], [0, 0, 1, 1], [], []>} : vector<128x4xbf16>, vector<4x16xbf16>, vector<128x16xf32> -> vector<128x16xf32>
    %13 = arith.truncf %12 : vector<128x16xf32> to vector<128x16xbf16>
    %c0_8 = arith.constant 0 : index
    %c0_9 = arith.constant 0 : index
    %14 = vector.load %arg5[%c0_8, %c0_9] : memref<128x16xbf16, #tpu.memory_space<vmem>>, vector<128x16xbf16>
    tpu.vector_store %arg5[%c0_8, %c0_9], %13 {strides = array<i32>} : memref<128x16xbf16, #tpu.memory_space<vmem>>, vector<128x16xbf16>,
    %cst_10 = arith.constant dense<0.000000e+00> : vector<16xf32>
    %15 = vector.multi_reduction <add>, %12, %cst_10 [0] : vector<128x16xf32> to vector<16xf32>
    %16 = vector.shape_cast %15 : vector<16xf32> to vector<1x16xf32>
    %c0_11 = arith.constant 0 : index
    %c0_12 = arith.constant 0 : index
    %c0_13 = arith.constant 0 : index
    %17 = vector.load %arg6[%c0_11, %c0_12, %c0_13] : memref<1x1x16xf32, #tpu.memory_space<vmem>>, vector<1x1x16xf32>
    %18 = vector.shape_cast %17 : vector<1x1x16xf32> to vector<1x16xf32>
    %19 = vector.shape_cast %16 : vector<1x16xf32> to vector<1x1x16xf32>
    tpu.vector_store %arg6[%c0_11, %c0_12, %c0_13], %19 {strides = array<i32>} : memref<1x1x16xf32, #tpu.memory_space<vmem>>, vector<1x1x16xf32>,
    %20 = arith.mulf %12, %12 : vector<128x16xf32>
    %cst_14 = arith.constant dense<0.000000e+00> : vector<16xf32>
    %21 = vector.multi_reduction <add>, %20, %cst_14 [0] : vector<128x16xf32> to vector<16xf32>
    %22 = vector.shape_cast %21 : vector<16xf32> to vector<1x16xf32>
    %c0_15 = arith.constant 0 : index
    %c0_16 = arith.constant 0 : index
    %c0_17 = arith.constant 0 : index
    %23 = vector.load %arg7[%c0_15, %c0_16, %c0_17] : memref<1x1x16xf32, #tpu.memory_space<vmem>>, vector<1x1x16xf32>
    %24 = vector.shape_cast %23 : vector<1x1x16xf32> to vector<1x16xf32>
    %25 = vector.shape_cast %22 : vector<1x16xf32> to vector<1x1x16xf32>
    tpu.vector_store %arg7[%c0_15, %c0_16, %c0_17], %25 {strides = array<i32>} : memref<1x1x16xf32, #tpu.memory_space<vmem>>, vector<1x1x16xf32>,
    return
  }
  func.func @transform_0(%arg0: i32) -> (i32, i32) {
    %c0_i32 = arith.constant 0 : i32
    %c0_i32_0 = arith.constant 0 : i32
    return %arg0, %c0_i32 : i32, i32
  }
  func.func @transform_1(%arg0: i32) -> (i32, i32) {
    %c0_i32 = arith.constant 0 : i32
    %c0_i32_0 = arith.constant 0 : i32
    %c0_i32_1 = arith.constant 0 : i32
    return %c0_i32, %c0_i32_0 : i32, i32
  }
  func.func @transform_2(%arg0: i32) -> (i32, i32) {
    %c0_i32 = arith.constant 0 : i32
    %c0_i32_0 = arith.constant 0 : i32
    %c0_i32_1 = arith.constant 0 : i32
    return %c0_i32, %c0_i32_0 : i32, i32
  }
  func.func @transform_3(%arg0: i32) -> (i32, i32) {
    %c0_i32 = arith.constant 0 : i32
    %c0_i32_0 = arith.constant 0 : i32
    %c0_i32_1 = arith.constant 0 : i32
    return %c0_i32, %c0_i32_0 : i32, i32
  }
  func.func @transform_4(%arg0: i32) -> (i32, i32) {
    %c0_i32 = arith.constant 0 : i32
    %c0_i32_0 = arith.constant 0 : i32
    return %arg0, %c0_i32 : i32, i32
  }
  func.func @transform_5(%arg0: i32) -> (i32, i32, i32) {
    %c0_i32 = arith.constant 0 : i32
    %c0_i32_0 = arith.constant 0 : i32
    %c0_i32_1 = arith.constant 0 : i32
    return %arg0, %c0_i32, %c0_i32_0 : i32, i32, i32
  }
  func.func @transform_6(%arg0: i32) -> (i32, i32, i32) {
    %c0_i32 = arith.constant 0 : i32
    %c0_i32_0 = arith.constant 0 : i32
    %c0_i32_1 = arith.constant 0 : i32
    return %arg0, %c0_i32, %c0_i32_0 : i32, i32, i32
  }
}

module attributes {stable_mosaic.version = 11 : i64} {
  func.func @_residual_kernel(%arg0: i32, %arg1: memref<128x16xbf16, #tpu.memory_space<vmem>>, %arg2: memref<128x16xf32, #tpu.memory_space<vmem>>, %arg3: memref<1x16xf32, #tpu.memory_space<vmem>>, %arg4: memref<1x16xf32, #tpu.memory_space<vmem>>, %arg5: memref<128x16xf32, #tpu.memory_space<vmem>>) attributes {dimension_semantics = [#tpu.dimension_semantics<parallel>], iteration_bounds = array<i64: 4>, scalar_prefetch = 0 : i64, scratch_operands = 0 : i64, tpu.core_type = #tpu.core_type<tc>, window_params = [{transform_indices = @transform_0, window_bounds = array<i64: 128, 16>}, {transform_indices = @transform_1, window_bounds = array<i64: 128, 16>}, {pipeline_mode = #tpu.pipeline_mode<synchronous>, transform_indices = @transform_2, window_bounds = array<i64: 1, 16>}, {pipeline_mode = #tpu.pipeline_mode<synchronous>, transform_indices = @transform_3, window_bounds = array<i64: 1, 16>}, {transform_indices = @transform_4, window_bounds = array<i64: 128, 16>}]} {
    %c0 = arith.constant 0 : index
    %c0_0 = arith.constant 0 : index
    %0 = vector.load %arg1[%c0, %c0_0] : memref<128x16xbf16, #tpu.memory_space<vmem>>, vector<128x16xbf16>
    %1 = arith.extf %0 : vector<128x16xbf16> to vector<128x16xf32>
    %c0_1 = arith.constant 0 : index
    %c0_2 = arith.constant 0 : index
    %2 = vector.load %arg3[%c0_1, %c0_2] : memref<1x16xf32, #tpu.memory_space<vmem>>, vector<1x16xf32>
    %3 = vector.broadcast %2 : vector<1x16xf32> to vector<128x16xf32>
    %4 = arith.mulf %1, %3 : vector<128x16xf32>
    %c0_3 = arith.constant 0 : index
    %c0_4 = arith.constant 0 : index
    %5 = vector.load %arg4[%c0_3, %c0_4] : memref<1x16xf32, #tpu.memory_space<vmem>>, vector<1x16xf32>
    %6 = vector.broadcast %5 : vector<1x16xf32> to vector<128x16xf32>
    %7 = arith.addf %4, %6 : vector<128x16xf32>
    %c0_5 = arith.constant 0 : index
    %c0_6 = arith.constant 0 : index
    %8 = vector.load %arg2[%c0_5, %c0_6] : memref<128x16xf32, #tpu.memory_space<vmem>>, vector<128x16xf32>
    %9 = arith.addf %7, %8 : vector<128x16xf32>
    %cst = arith.constant 0.000000e+00 : f32
    %10 = vector.broadcast %cst : f32 to vector<128x16xf32>
    %11 = arith.maximumf %9, %10 : vector<128x16xf32>
    %c0_7 = arith.constant 0 : index
    %c0_8 = arith.constant 0 : index
    %12 = vector.load %arg5[%c0_7, %c0_8] : memref<128x16xf32, #tpu.memory_space<vmem>>, vector<128x16xf32>
    tpu.vector_store %arg5[%c0_7, %c0_8], %11 {strides = array<i32>} : memref<128x16xf32, #tpu.memory_space<vmem>>, vector<128x16xf32>,
    return
  }
  func.func @transform_0(%arg0: i32) -> (i32, i32) {
    %c0_i32 = arith.constant 0 : i32
    %c0_i32_0 = arith.constant 0 : i32
    return %arg0, %c0_i32 : i32, i32
  }
  func.func @transform_1(%arg0: i32) -> (i32, i32) {
    %c0_i32 = arith.constant 0 : i32
    %c0_i32_0 = arith.constant 0 : i32
    return %arg0, %c0_i32 : i32, i32
  }
  func.func @transform_2(%arg0: i32) -> (i32, i32) {
    %c0_i32 = arith.constant 0 : i32
    %c0_i32_0 = arith.constant 0 : i32
    %c0_i32_1 = arith.constant 0 : i32
    return %c0_i32, %c0_i32_0 : i32, i32
  }
  func.func @transform_3(%arg0: i32) -> (i32, i32) {
    %c0_i32 = arith.constant 0 : i32
    %c0_i32_0 = arith.constant 0 : i32
    %c0_i32_1 = arith.constant 0 : i32
    return %c0_i32, %c0_i32_0 : i32, i32
  }
  func.func @transform_4(%arg0: i32) -> (i32, i32) {
    %c0_i32 = arith.constant 0 : i32
    %c0_i32_0 = arith.constant 0 : i32
    return %arg0, %c0_i32 : i32, i32
  }
}

</mosaic_0001>

<llo_original>
// kernel: resnet_block_forward.4
$region0: #{resnet_block_forward.4}
  #allocation0 [shape = 'u32[]', space=smem, size = 0x4, offset = 0x4, fixed_abs, tag = 'smem constant byte address 0x4 - core index']
  #allocation1 [shape = 'u32[144,128]{1,0:T(1,128)}', space=vmem, size = 0x12000, scoped, tag = 'internal scratch']
  %s0 = inlined_call_operand.vmem [shape: f32[512,16], index: 0, kind: input, shape index: {}]
  %s1 = inlined_call_operand.vmem [shape: bf16[16,4], index: 1, kind: input, shape index: {}]
  %s2 = inlined_call_operand.vmem [shape: bf16[512,4], index: 2, kind: output, shape index: {0}]
  %s3 = inlined_call_operand.vmem [shape: f32[4,1,4], index: 3, kind: output, shape index: {1}]
  %s4 = inlined_call_operand.vmem [shape: f32[4,1,4], index: 4, kind: output, shape index: {2}]
  %5 = xla_tuple %s2, %s3, %s4
  %s6 = sld [smem:[#allocation0]]
  $region57: #{resnet_block_forward.4} parent=0
    _
  %s8 = ssub.s32 1, %s6
  %s9 = scalar_select 0, %s8, %s6
  loop: start=0, step=1, limit=6
  $region2: #{resnet_block_forward.4} parent=0 // loop_pre_header
    _
  $region3: #{resnet_block_forward.4} parent=0 // loop_header
    %s11 = sphi 0, %s15
    %p12 = scmp.ge.s32.totalorder %s11, 6
    %s21 = sphi 0, %s23
    %s24 = sphi 0, %s21
    %s25 = sphi 0, %s24
    %s41 = sphi 0, %s25
    %s45 = sphi 0, %s45
    %s47 = sphi 0, %s45
    %s48 = sphi 0, %s47
    %s62 = sphi 0, %s48
    %s68 = sphi 0, %s70
    %s71 = sphi 0, %s68
    %s72 = sphi 0, %s71
    %s88 = sphi 0, %s72
    %s94 = sphi 0, %s96
    %s97 = sphi 0, %s94
    %s98 = sphi 0, %s97
    %s114 = sphi 0, %s98
    %s120 = sphi 0, %s122
    %s123 = sphi 0, %s120
    %s124 = sphi 0, %s123
    %s140 = sphi 0, %s124
  $region4: #{resnet_block_forward.4} parent=0 // loop_header_branch
    %14 = sbr.rel (%p12) target = $region8
  $region5: #{resnet_block_forward.4} parent=0 // loop_body
    %s16 = ssub.s32 %s11, 1
    %s17 = ssub.s32 %s11, 2
    %s18 = sadd.s32 %s11, 1
    %s19 = ssub.s32 %s11, %s18
    %p20 = scmp.eq.s32.totalorder %s19, 0
    %s22 = sadd.s32 %s21, 1
    %s23 = scalar_select %p20, %s21, %s22
    %p26 = pneg %p20
    %p27 = scmp.eq.s32.totalorder %s11, 3
    %p28 = por %p26, %p27
    %p29 = scmp.ne.s32.totalorder %s21, %s24
    %p30 = scmp.eq.s32.totalorder %s11, 0
    %p31 = por %p29, %p30
    %p32 = scmp.ne.s32.totalorder %s21, %s24
    %p33 = scmp.eq.s32.totalorder %s16, 3
    %p34 = por %p32, %p33
    %p35 = scmp.ne.s32.totalorder %s24, %s25
    %p36 = scmp.eq.s32.totalorder %s16, 0
    %p37 = por %p35, %p36
    %p38 = scmp.ne.s32.totalorder %s24, %s25
    %p39 = scmp.eq.s32.totalorder %s17, 3
    %p40 = por %p38, %p39
    %p42 = scmp.ne.s32.totalorder %s25, %s41
    %p43 = scmp.eq.s32.totalorder %s17, 0
    %p44 = por %p42, %p43
    %s46 = sadd.s32 %s45, 1
    %p49 = scmp.eq.s32.totalorder %s11, 3
    %p50 = scmp.ne.s32.totalorder %s45, %s47
    %p51 = scmp.eq.s32.totalorder %s11, 0
    %p52 = por %p50, %p51
    %p53 = scmp.ne.s32.totalorder %s45, %s47
    %p54 = scmp.eq.s32.totalorder %s16, 3
    %p55 = por %p53, %p54
    %p56 = scmp.ne.s32.totalorder %s47, %s48
    %p57 = scmp.eq.s32.totalorder %s16, 0
    %p58 = por %p56, %p57
    %p59 = scmp.ne.s32.totalorder %s47, %s48
    %p60 = scmp.eq.s32.totalorder %s17, 3
    %p61 = por %p59, %p60
    %p63 = scmp.ne.s32.totalorder %s48, %s62
    %p64 = scmp.eq.s32.totalorder %s17, 0
    %p65 = por %p63, %p64
    %s66 = ssub.s32 %s11, %s18
    %p67 = scmp.eq.s32.totalorder %s66, 0
    %s69 = sadd.s32 %s68, 1
    %s70 = scalar_select %p67, %s68, %s69
    %p73 = pneg %p67
    %p74 = scmp.eq.s32.totalorder %s11, 3
    %p75 = por %p73, %p74
    %p76 = scmp.ne.s32.totalorder %s68, %s71
    %p77 = scmp.eq.s32.totalorder %s11, 0
    %p78 = por %p76, %p77
    %p79 = scmp.ne.s32.totalorder %s68, %s71
    %p80 = scmp.eq.s32.totalorder %s16, 3
    %p81 = por %p79, %p80
    %p82 = scmp.ne.s32.totalorder %s71, %s72
    %p83 = scmp.eq.s32.totalorder %s16, 0
    %p84 = por %p82, %p83
    %p85 = scmp.ne.s32.totalorder %s71, %s72
    %p86 = scmp.eq.s32.totalorder %s17, 3
    %p87 = por %p85, %p86
    %p89 = scmp.ne.s32.totalorder %s72, %s88
    %p90 = scmp.eq.s32.totalorder %s17, 0
    %p91 = por %p89, %p90
    %s92 = ssub.s32 %s11, %s18
    %p93 = scmp.eq.s32.totalorder %s92, 0
    %s95 = sadd.s32 %s94, 1
    %s96 = scalar_select %p93, %s94, %s95
    %p99 = pneg %p93
    %p100 = scmp.eq.s32.totalorder %s11, 3
    %p101 = por %p99, %p100
    %p102 = scmp.ne.s32.totalorder %s94, %s97
    %p103 = scmp.eq.s32.totalorder %s11, 0
    %p104 = por %p102, %p103
    %p105 = scmp.ne.s32.totalorder %s94, %s97
    %p106 = scmp.eq.s32.totalorder %s16, 3
    %p107 = por %p105, %p106
    %p108 = scmp.ne.s32.totalorder %s97, %s98
    %p109 = scmp.eq.s32.totalorder %s16, 0
    %p110 = por %p108, %p109
    %p111 = scmp.ne.s32.totalorder %s97, %s98
    %p112 = scmp.eq.s32.totalorder %s17, 3
    %p113 = por %p111, %p112
    %p115 = scmp.ne.s32.totalorder %s98, %s114
    %p116 = scmp.eq.s32.totalorder %s17, 0
    %p117 = por %p115, %p116
    %s118 = ssub.s32 %s11, %s18
    %p119 = scmp.eq.s32.totalorder %s118, 0
    %s121 = sadd.s32 %s120, 1
    %s122 = scalar_select %p119, %s120, %s121
    %p125 = pneg %p119
    %p126 = scmp.eq.s32.totalorder %s11, 3
    %p127 = por %p125, %p126
    %p128 = scmp.ne.s32.totalorder %s120, %s123
    %p129 = scmp.eq.s32.totalorder %s11, 0
    %p130 = por %p128, %p129
    %p131 = scmp.ne.s32.totalorder %s120, %s123
    %p132 = scmp.eq.s32.totalorder %s16, 3
    %p133 = por %p131, %p132
    %p134 = scmp.ne.s32.totalorder %s123, %s124
    %p135 = scmp.eq.s32.totalorder %s16, 0
    %p136 = por %p134, %p135
    %p137 = scmp.ne.s32.totalorder %s123, %s124
    %p138 = scmp.eq.s32.totalorder %s17, 3
    %p139 = por %p137, %p138
    %p141 = scmp.ne.s32.totalorder %s124, %s140
    %p142 = scmp.eq.s32.totalorder %s17, 0
    %p143 = por %p141, %p142
    %p144 = scmp.le.s32.totalorder 1, %s11
    %p145 = scmp.lt.s32.totalorder %s11, 5
    %p146 = pnand %p144, %p145
    %p147 = pneg %p146
    // Predicated region
    $region9: #{resnet_block_forward.4} parent=5 // pred_check
      _
    $region10: #{resnet_block_forward.4} parent=5 // pred_check_branch
      %149 = sbr.rel (%p146) target = $region12
    $region11: #{resnet_block_forward.4} parent=5 // pred_region
      %s150 = ssub.s32 %s11, 1
      // Predicated region
      $region13: #{resnet_block_forward.4} parent=11 // pred_check
        %p151 = pneg %p58
      $region14: #{resnet_block_forward.4} parent=11 // pred_check_branch
        %153 = sbr.rel (%p151) target = $region16
      $region15: #{resnet_block_forward.4} parent=11 // pred_region
        _
      $region16: #{resnet_block_forward.4} parent=11 // pred_fallthru
        _
    $region12: #{resnet_block_forward.4} parent=5 // pred_fallthru
      _
    %p154 = scmp.lt.s32.totalorder %s11, 4
    // Predicated region
    $region17: #{resnet_block_forward.4} parent=5 // pred_check
      %p155 = pneg %p154
    $region18: #{resnet_block_forward.4} parent=5 // pred_check_branch
      %157 = sbr.rel (%p155) target = $region20
    $region19: #{resnet_block_forward.4} parent=5 // pred_region
      // Predicated region
      $region21: #{resnet_block_forward.4} parent=19 // pred_check
        %p158 = pneg %p31
      $region22: #{resnet_block_forward.4} parent=19 // pred_check_branch
        %160 = sbr.rel (%p158) target = $region24
      $region23: #{resnet_block_forward.4} parent=19 // pred_region
        %s161 = smul.u32 16, %s11
        %p162 = scmp.lt.s32.totalorder %s161, 63
        %s163 = scalar_select %p162, %s161, 63
        %s164 = smul.addr %s163, 8
        %s165 = scalar_lea.vmem %s0, %s164
        %s166 = smul.u32 16, %s11
      $region24: #{resnet_block_forward.4} parent=19 // pred_fallthru
        _
    $region20: #{resnet_block_forward.4} parent=5 // pred_fallthru
      _
    %p167 = scmp.le.s32.totalorder 1, %s11
    %p168 = scmp.lt.s32.totalorder %s11, 5
    %p169 = pnand %p167, %p168
    %p170 = pneg %p169
    // Predicated region
    $region25: #{resnet_block_forward.4} parent=5 // pred_check
      _
    $region26: #{resnet_block_forward.4} parent=5 // pred_check_branch
      %172 = sbr.rel (%p169) target = $region28
    $region27: #{resnet_block_forward.4} parent=5 // pred_region
      %s173 = ssub.s32 %s11, 1
      %s174 = smul.u32 16, %s16
      %p175 = scmp.lt.s32.totalorder %s174, 63
      %s176 = scalar_select %p175, %s174, 63
      %s177 = smul.addr %s176, 8
      %s178 = scalar_lea.vmem %s0, %s177
      %p179 = pneg %p37
      %p180 = pneg %p34
      %p181 = pneg %p58
      %p182 = pneg %p55
      %p183 = pneg %p84
      %p184 = pneg %p81
      %s185 = smul.u32 16, %s16
      %p186 = scmp.lt.s32.totalorder %s185, 63
      %s187 = scalar_select %p186, %s185, 63
      %s188 = smul.addr %s187, 4
      %s189 = scalar_lea.vmem %s2, %s188
      %p190 = pneg %p110
      %p191 = pneg %p107
      %p192 = scmp.lt.s32.totalorder %s16, 3
      %s193 = scalar_select %p192, %s16, 3
      %s194 = scalar_lea.vmem %s3, %s193
      %p195 = pneg %p136
      %p196 = pneg %p133
      %p197 = scmp.lt.s32.totalorder %s16, 3
      %s198 = scalar_select %p197, %s16, 3
      %s199 = scalar_lea.vmem %s4, %s198
      %s200 = smul.u32 16, %s16
      %p201 = scmp.lt.s32.totalorder %s200, 63
      %s202 = scalar_select %p201, %s200, 63
      %s203 = smul.addr %s202, 8
      %s204 = scalar_lea.vmem %s0, %s203
      %s205 = smul.u32 16, %s16
      %s206 = smul.u32 16, %s16
      %p207 = scmp.lt.s32.totalorder %s206, 63
      %s208 = scalar_select %p207, %s206, 63
      %s209 = smul.addr %s208, 4
      %s210 = scalar_lea.vmem %s2, %s209
      %s211 = smul.u32 16, %s16
      %p212 = scmp.lt.s32.totalorder %s16, 3
      %s213 = scalar_select %p212, %s16, 3
      %s214 = scalar_lea.vmem %s3, %s213
      %p215 = scmp.lt.s32.totalorder %s16, 3
      %s216 = scalar_select %p215, %s16, 3
      %s217 = scalar_lea.vmem %s4, %s216
      %v219 = vld [vmem:[%s204] sm:$0xff]
      %v220 = vld [vmem:[%s204 + $0x8] sm:$0xff]
      %v221 = vld [vmem:[%s204 + $0x10] sm:$0xff]
      %v222 = vld [vmem:[%s204 + $0x18] sm:$0xff]
      %v223 = vld [vmem:[%s204 + $0x20] sm:$0xff]
      %v224 = vld [vmem:[%s204 + $0x28] sm:$0xff]
      %v225 = vld [vmem:[%s204 + $0x30] sm:$0xff]
      %v226 = vld [vmem:[%s204 + $0x38] sm:$0xff]
      %v227 = vld [vmem:[%s204 + $0x40] sm:$0xff]
      %v228 = vld [vmem:[%s204 + $0x48] sm:$0xff]
      %v229 = vld [vmem:[%s204 + $0x50] sm:$0xff]
      %v230 = vld [vmem:[%s204 + $0x58] sm:$0xff]
      %v231 = vld [vmem:[%s204 + $0x60] sm:$0xff]
      %v232 = vld [vmem:[%s204 + $0x68] sm:$0xff]
      %v233 = vld [vmem:[%s204 + $0x70] sm:$0xff]
      %v234 = vld [vmem:[%s204 + $0x78] sm:$0xff]
      %v235 = vpack.c.bf16 %v220, %v219
      %v236 = vpack.c.bf16 %v222, %v221
      %v237 = vpack.c.bf16 %v224, %v223
      %v238 = vpack.c.bf16 %v226, %v225
      %v239 = vpack.c.bf16 %v228, %v227
      %v240 = vpack.c.bf16 %v230, %v229
      %v241 = vpack.c.bf16 %v232, %v231
      %v242 = vpack.c.bf16 %v234, %v233
      %v243 = vld [vmem:[%s1] sm:$0xf]
      %v244 = vld [vmem:[%s1 + $0x4] sm:$0xf]
      %v247 = vunpack.c.l.b16 %v243
      %v248 = vunpack.c.l.b16 %v244
      %v249 = vpack.c.b16 %v248, %v247
      %vm251 = vcmask 130048
      %v253 = vsel %vm251, %v235, 0
      %v256 = vsel %vm251, %v236, 0
      %v259 = vsel %vm251, %v237, 0
      %v262 = vsel %vm251, %v238, 0
      %v265 = vsel %vm251, %v239, 0
      %v268 = vsel %vm251, %v240, 0
      %v271 = vsel %vm251, %v241, 0
      %v274 = vsel %vm251, %v242, 0
      %276 = vmatprep.subr.bf16.mxu0 0
      %277 = vmatpush1.bf16.msra.mxu0 %v249
      %278 = vmatprep.subr.bf16.mxu0 0
      %279 = vmatpush1.bf16.msra.mxu0 0
      %280 = vmatprep.subr.bf16.mxu0 0
      %281 = vmatpush1.bf16.msra.mxu0 0
      %282 = vmatprep.subr.bf16.mxu0 0
      %283 = vmatpush1.bf16.msra.mxu0 0
      %284 = vmatprep.subr.bf16.mxu0 0
      %285 = vmatpush1.bf16.msra.mxu0 0
      %286 = vmatprep.subr.bf16.mxu0 0
      %287 = vmatpush1.bf16.msra.mxu0 0
      %288 = vmatprep.subr.bf16.mxu0 0
      %289 = vmatpush1.bf16.msra.mxu0 0
      %290 = vmatprep.subr.bf16.mxu0 0
      %291 = vmatpush1.bf16.msra.mxu0 0
      %292 = vmatprep.subr.bf16.mxu0 0
      %293 = vmatpush1.bf16.msra.mxu0 0
      %294 = vmatprep.subr.bf16.mxu0 0
      %295 = vmatpush1.bf16.msra.mxu0 0
      %296 = vmatprep.subr.bf16.mxu0 0
      %297 = vmatpush1.bf16.msra.mxu0 0
      %298 = vmatprep.subr.bf16.mxu0 0
      %299 = vmatpush1.bf16.msra.mxu0 0
      %300 = vmatprep.subr.bf16.mxu0 0
      %301 = vmatpush1.bf16.msra.mxu0 0
      %302 = vmatprep.subr.bf16.mxu0 0
      %303 = vmatpush1.bf16.msra.mxu0 0
      %304 = vmatprep.subr.bf16.mxu0 0
      %305 = vmatpush1.bf16.msra.mxu0 0
      %306 = vmatprep.subr.bf16.mxu0 0
      %307 = vmatpush1.bf16.msra.mxu0 0
      %308 = vmatprep.mubr.bf16.mxu0 0
      %309 = vmatmul.mubr.bf16.gmra.mrb[0].mxu0 %v253
      %v310 = vpop.f32.mrb[0].mxu0
      %v311 = vadd.f32 0.0, %v310
      %v312 = vpop.f32.mrb[0].mxu0
      %v313 = vpop.f32.mrb[0].mxu0
      %v314 = vadd.f32 0.0, %v313
      %v315 = vpop.f32.mrb[0].mxu0
      %316 = vmatprep.mubr.bf16.mxu0 0
      %317 = vmatmul.mubr.bf16.gmra.mrb[0].mxu0 %v256
      %v318 = vpop.f32.mrb[0].mxu0
      %v319 = vadd.f32 0.0, %v318
      %v320 = vpop.f32.mrb[0].mxu0
      %v321 = vpop.f32.mrb[0].mxu0
      %v322 = vadd.f32 0.0, %v321
      %v323 = vpop.f32.mrb[0].mxu0
      %324 = vmatprep.mubr.bf16.mxu0 0
      %325 = vmatmul.mubr.bf16.gmra.mrb[0].mxu0 %v259
      %v326 = vpop.f32.mrb[0].mxu0
      %v327 = vadd.f32 0.0, %v326
      %v328 = vpop.f32.mrb[0].mxu0
      %v329 = vpop.f32.mrb[0].mxu0
      %v330 = vadd.f32 0.0, %v329
      %v331 = vpop.f32.mrb[0].mxu0
      %332 = vmatprep.mubr.bf16.mxu0 0
      %333 = vmatmul.mubr.bf16.gmra.mrb[0].mxu0 %v262
      %v334 = vpop.f32.mrb[0].mxu0
      %v335 = vadd.f32 0.0, %v334
      %v336 = vpop.f32.mrb[0].mxu0
      %v337 = vpop.f32.mrb[0].mxu0
      %v338 = vadd.f32 0.0, %v337
      %v339 = vpop.f32.mrb[0].mxu0
      %340 = vmatprep.mubr.bf16.mxu0 0
      %341 = vmatmul.mubr.bf16.gmra.mrb[0].mxu0 %v265
      %v342 = vpop.f32.mrb[0].mxu0
      %v343 = vadd.f32 0.0, %v342
      %v344 = vpop.f32.mrb[0].mxu0
      %v345 = vpop.f32.mrb[0].mxu0
      %v346 = vadd.f32 0.0, %v345
      %v347 = vpop.f32.mrb[0].mxu0
      %348 = vmatprep.mubr.bf16.mxu0 0
      %349 = vmatmul.mubr.bf16.gmra.mrb[0].mxu0 %v268
      %v350 = vpop.f32.mrb[0].mxu0
      %v351 = vadd.f32 0.0, %v350
      %v352 = vpop.f32.mrb[0].mxu0
      %v353 = vpop.f32.mrb[0].mxu0
      %v354 = vadd.f32 0.0, %v353
      %v355 = vpop.f32.mrb[0].mxu0
      %356 = vmatprep.mubr.bf16.mxu0 0
      %357 = vmatmul.mubr.bf16.gmra.mrb[0].mxu0 %v271
      %v358 = vpop.f32.mrb[0].mxu0
      %v359 = vadd.f32 0.0, %v358
      %v360 = vpop.f32.mrb[0].mxu0
      %v361 = vpop.f32.mrb[0].mxu0
      %v362 = vadd.f32 0.0, %v361
      %v363 = vpop.f32.mrb[0].mxu0
      %364 = vmatprep.mubr.bf16.mxu0 0
      %365 = vmatmul.mubr.bf16.gmra.mrb[0].mxu0 %v274
      %v366 = vpop.f32.mrb[0].mxu0
      %v367 = vadd.f32 0.0, %v366
      %v368 = vpop.f32.mrb[0].mxu0
      %v369 = vpop.f32.mrb[0].mxu0
      %v370 = vadd.f32 0.0, %v369
      %v371 = vpop.f32.mrb[0].mxu0
      %372 = vdwg.mxu0
      %v373 = vpack.c.bf16 %v314, %v311
      %v374 = vpack.c.bf16 %v322, %v319
      %v375 = vpack.c.bf16 %v330, %v327
      %v376 = vpack.c.bf16 %v338, %v335
      %v377 = vpack.c.bf16 %v346, %v343
      %v378 = vpack.c.bf16 %v354, %v351
      %v379 = vpack.c.bf16 %v362, %v359
      %v380 = vpack.c.bf16 %v370, %v367
      %v389 = vunpack.c.l.b16 %v373
      %v390 = vunpack.c.h.b16 %v373
      %v391 = vunpack.c.l.b16 %v374
      %v392 = vunpack.c.h.b16 %v374
      %v393 = vunpack.c.l.b16 %v375
      %v394 = vunpack.c.h.b16 %v375
      %v395 = vunpack.c.l.b16 %v376
      %v396 = vunpack.c.h.b16 %v376
      %v397 = vunpack.c.l.b16 %v377
      %v398 = vunpack.c.h.b16 %v377
      %v399 = vunpack.c.l.b16 %v378
      %v400 = vunpack.c.h.b16 %v378
      %v401 = vunpack.c.l.b16 %v379
      %v402 = vunpack.c.h.b16 %v379
      %v403 = vunpack.c.l.b16 %v380
      %v404 = vunpack.c.h.b16 %v380
      %v405 = vpack.c.b16 %v389, %v389
      %v406 = vpack.c.b16 %v390, %v390
      %v407 = vpack.c.b16 %v391, %v391
      %v408 = vpack.c.b16 %v392, %v392
      %v409 = vpack.c.b16 %v393, %v393
      %v410 = vpack.c.b16 %v394, %v394
      %v411 = vpack.c.b16 %v395, %v395
      %v412 = vpack.c.b16 %v396, %v396
      %v413 = vpack.c.b16 %v397, %v397
      %v414 = vpack.c.b16 %v398, %v398
      %v415 = vpack.c.b16 %v399, %v399
      %v416 = vpack.c.b16 %v400, %v400
      %v417 = vpack.c.b16 %v401, %v401
      %v418 = vpack.c.b16 %v402, %v402
      %v419 = vpack.c.b16 %v403, %v403
      %v420 = vpack.c.b16 %v404, %v404
      %vm437 = vcmask 27648
      %438 = vst.msk [vmem:[%s210] sm:$0xf] %vm437, %v405
      %439 = vst.msk [vmem:[%s210 + $0x4] sm:$0xf] %vm437, %v406
      %440 = vst.msk [vmem:[%s210 + $0x8] sm:$0xf] %vm437, %v407
      %441 = vst.msk [vmem:[%s210 + $0xc] sm:$0xf] %vm437, %v408
      %442 = vst.msk [vmem:[%s210 + $0x10] sm:$0xf] %vm437, %v409
      %443 = vst.msk [vmem:[%s210 + $0x14] sm:$0xf] %vm437, %v410
      %444 = vst.msk [vmem:[%s210 + $0x18] sm:$0xf] %vm437, %v411
      %445 = vst.msk [vmem:[%s210 + $0x1c] sm:$0xf] %vm437, %v412
      %446 = vst.msk [vmem:[%s210 + $0x20] sm:$0xf] %vm437, %v413
      %447 = vst.msk [vmem:[%s210 + $0x24] sm:$0xf] %vm437, %v414
      %448 = vst.msk [vmem:[%s210 + $0x28] sm:$0xf] %vm437, %v415
      %449 = vst.msk [vmem:[%s210 + $0x2c] sm:$0xf] %vm437, %v416
      %450 = vst.msk [vmem:[%s210 + $0x30] sm:$0xf] %vm437, %v417
      %451 = vst.msk [vmem:[%s210 + $0x34] sm:$0xf] %vm437, %v418
      %452 = vst.msk [vmem:[%s210 + $0x38] sm:$0xf] %vm437, %v419
      %453 = vst.msk [vmem:[%s210 + $0x3c] sm:$0xf] %vm437, %v420
      %vm454 = vcmask 31744
      %v455 = vsel %vm454, %v311, 0.0
      %v456 = vsel %vm454, %v314, 0.0
      %v457 = vadd.f32 %v455, %v456
      %v458 = vsel %vm454, %v319, 0.0
      %v459 = vadd.f32 %v457, %v458
      %v460 = vsel %vm454, %v322, 0.0
      %v461 = vadd.f32 %v459, %v460
      %v462 = vsel %vm454, %v327, 0.0
      %v463 = vadd.f32 %v461, %v462
      %v464 = vsel %vm454, %v330, 0.0
      %v465 = vadd.f32 %v463, %v464
      %v466 = vsel %vm454, %v335, 0.0
      %v467 = vadd.f32 %v465, %v466
      %v468 = vsel %vm454, %v338, 0.0
      %v469 = vadd.f32 %v467, %v468
      %v470 = vsel %vm454, %v343, 0.0
      %v471 = vadd.f32 %v469, %v470
      %v472 = vsel %vm454, %v346, 0.0
      %v473 = vadd.f32 %v471, %v472
      %v474 = vsel %vm454, %v351, 0.0
      %v475 = vadd.f32 %v473, %v474
      %v476 = vsel %vm454, %v354, 0.0
      %v477 = vadd.f32 %v475, %v476
      %v478 = vsel %vm454, %v359, 0.0
      %v479 = vadd.f32 %v477, %v478
      %v480 = vsel %vm454, %v362, 0.0
      %v481 = vadd.f32 %v479, %v480
      %v482 = vsel %vm454, %v367, 0.0
      %v483 = vadd.f32 %v481, %v482
      %v484 = vsel %vm454, %v370, 0.0
      %v485 = vadd.f32 %v483, %v484
      %v486 = vrot.slane %v485, 4
      %v487 = vadd.f32 %v485, %v486
      %v488 = vrot.slane %v487, 2
      %v489 = vadd.f32 %v487, %v488
      %v490 = vrot.slane %v489, 1
      %v491 = vadd.f32 %v489, %v490
      %vm492 = vcmask 24576
      %493 = vst.msk [vmem:[%s214] sm:$0x1] %vm492, %v491
      %v494 = vmul.f32 %v311, %v311
      %v495 = vmul.f32 %v314, %v314
      %v496 = vmul.f32 %v319, %v319
      %v497 = vmul.f32 %v322, %v322
      %v498 = vmul.f32 %v327, %v327
      %v499 = vmul.f32 %v330, %v330
      %v500 = vmul.f32 %v335, %v335
      %v501 = vmul.f32 %v338, %v338
      %v502 = vmul.f32 %v343, %v343
      %v503 = vmul.f32 %v346, %v346
      %v504 = vmul.f32 %v351, %v351
      %v505 = vmul.f32 %v354, %v354
      %v506 = vmul.f32 %v359, %v359
      %v507 = vmul.f32 %v362, %v362
      %v508 = vmul.f32 %v367, %v367
      %v509 = vmul.f32 %v370, %v370
      %v510 = vsel %vm454, %v494, 0.0
      %v511 = vsel %vm454, %v495, 0.0
      %v512 = vadd.f32 %v510, %v511
      %v513 = vsel %vm454, %v496, 0.0
      %v514 = vadd.f32 %v512, %v513
      %v515 = vsel %vm454, %v497, 0.0
      %v516 = vadd.f32 %v514, %v515
      %v517 = vsel %vm454, %v498, 0.0
      %v518 = vadd.f32 %v516, %v517
      %v519 = vsel %vm454, %v499, 0.0
      %v520 = vadd.f32 %v518, %v519
      %v521 = vsel %vm454, %v500, 0.0
      %v522 = vadd.f32 %v520, %v521
      %v523 = vsel %vm454, %v501, 0.0
      %v524 = vadd.f32 %v522, %v523
      %v525 = vsel %vm454, %v502, 0.0
      %v526 = vadd.f32 %v524, %v525
      %v527 = vsel %vm454, %v503, 0.0
      %v528 = vadd.f32 %v526, %v527
      %v529 = vsel %vm454, %v504, 0.0
      %v530 = vadd.f32 %v528, %v529
      %v531 = vsel %vm454, %v505, 0.0
      %v532 = vadd.f32 %v530, %v531
      %v533 = vsel %vm454, %v506, 0.0
      %v534 = vadd.f32 %v532, %v533
      %v535 = vsel %vm454, %v507, 0.0
      %v536 = vadd.f32 %v534, %v535
      %v537 = vsel %vm454, %v508, 0.0
      %v538 = vadd.f32 %v536, %v537
      %v539 = vsel %vm454, %v509, 0.0
      %v540 = vadd.f32 %v538, %v539
      %v541 = vrot.slane %v540, 4
      %v542 = vadd.f32 %v540, %v541
      %v543 = vrot.slane %v542, 2
      %v544 = vadd.f32 %v542, %v543
      %v545 = vrot.slane %v544, 1
      %v546 = vadd.f32 %v544, %v545
      %547 = vst.msk [vmem:[%s217] sm:$0x1] %vm492, %v546
      %s548 = smul.u32 16, %s16
      %p549 = scmp.lt.s32.totalorder %s548, 63
      %s550 = scalar_select %p549, %s548, 63
      %s551 = smul.addr %s550, 4
      %s552 = scalar_lea.vmem %s2, %s551
      %p553 = scmp.lt.s32.totalorder %s16, 3
      %s554 = scalar_select %p553, %s16, 3
      %s555 = scalar_lea.vmem %s3, %s554
      %p556 = scmp.lt.s32.totalorder %s16, 3
      %s557 = scalar_select %p556, %s16, 3
      %s558 = scalar_lea.vmem %s4, %s557
      // Predicated region
      $region29: #{resnet_block_forward.4} parent=27 // pred_check
        %p559 = pneg %p81
      $region30: #{resnet_block_forward.4} parent=27 // pred_check_branch
        %561 = sbr.rel (%p559) target = $region32
      $region31: #{resnet_block_forward.4} parent=27 // pred_region
        %s562 = smul.u32 16, %s16
      $region32: #{resnet_block_forward.4} parent=27 // pred_fallthru
        _
      // Predicated region
      $region33: #{resnet_block_forward.4} parent=27 // pred_check
        %p563 = pneg %p107
      $region34: #{resnet_block_forward.4} parent=27 // pred_check_branch
        %565 = sbr.rel (%p563) target = $region36
      $region35: #{resnet_block_forward.4} parent=27 // pred_region
        _
      $region36: #{resnet_block_forward.4} parent=27 // pred_fallthru
        _
      // Predicated region
      $region37: #{resnet_block_forward.4} parent=27 // pred_check
        %p566 = pneg %p133
      $region38: #{resnet_block_forward.4} parent=27 // pred_check_branch
        %568 = sbr.rel (%p566) target = $region40
      $region39: #{resnet_block_forward.4} parent=27 // pred_region
        _
      $region40: #{resnet_block_forward.4} parent=27 // pred_fallthru
        _
    $region28: #{resnet_block_forward.4} parent=5 // pred_fallthru
      _
    %p569 = scmp.le.s32.totalorder 2, %s11
    // Predicated region
    $region41: #{resnet_block_forward.4} parent=5 // pred_check
      %p570 = pneg %p569
    $region42: #{resnet_block_forward.4} parent=5 // pred_check_branch
      %572 = sbr.rel (%p570) target = $region44
    $region43: #{resnet_block_forward.4} parent=5 // pred_region
      %s573 = ssub.s32 %s11, 2
      // Predicated region
      $region45: #{resnet_block_forward.4} parent=43 // pred_check
        %p574 = pneg %p87
      $region46: #{resnet_block_forward.4} parent=43 // pred_check_branch
        %576 = sbr.rel (%p574) target = $region48
      $region47: #{resnet_block_forward.4} parent=43 // pred_region
        %s577 = smul.u32 16, %s17
        %p578 = scmp.lt.s32.totalorder %s577, 63
        %s579 = scalar_select %p578, %s577, 63
        %s580 = smul.addr %s579, 4
        %s581 = scalar_lea.vmem %s2, %s580
      $region48: #{resnet_block_forward.4} parent=43 // pred_fallthru
        _
      // Predicated region
      $region49: #{resnet_block_forward.4} parent=43 // pred_check
        %p582 = pneg %p113
      $region50: #{resnet_block_forward.4} parent=43 // pred_check_branch
        %584 = sbr.rel (%p582) target = $region52
      $region51: #{resnet_block_forward.4} parent=43 // pred_region
        %p585 = scmp.lt.s32.totalorder %s17, 3
        %s586 = scalar_select %p585, %s17, 3
        %s587 = scalar_lea.vmem %s3, %s586
      $region52: #{resnet_block_forward.4} parent=43 // pred_fallthru
        _
      // Predicated region
      $region53: #{resnet_block_forward.4} parent=43 // pred_check
        %p588 = pneg %p139
      $region54: #{resnet_block_forward.4} parent=43 // pred_check_branch
        %590 = sbr.rel (%p588) target = $region56
      $region55: #{resnet_block_forward.4} parent=43 // pred_region
        %p591 = scmp.lt.s32.totalorder %s17, 3
        %s592 = scalar_select %p591, %s17, 3
        %s593 = scalar_lea.vmem %s4, %s592
      $region56: #{resnet_block_forward.4} parent=43 // pred_fallthru
        _
    $region44: #{resnet_block_forward.4} parent=5 // pred_fallthru
      _
  $region6: #{resnet_block_forward.4} parent=0 // loop_footer
    %s15 = sadd.s32 1, %s11
  $region7: #{resnet_block_forward.4} parent=0 // loop_footer_branch
    %10 = sbr.rel target = $region3
  $region8: #{resnet_block_forward.4} parent=0 // loop_exit
    _

// kernel: resnet_block_forward.6
$region0: #{resnet_block_forward.6}
  #allocation0 [shape = 'u32[]', space=smem, size = 0x4, offset = 0x4, fixed_abs, tag = 'smem constant byte address 0x4 - core index']
  #allocation1 [shape = 'u32[144,128]{1,0:T(1,128)}', space=vmem, size = 0x12000, scoped, tag = 'internal scratch']
  %s0 = inlined_call_operand.vmem [shape: bf16[512,4], index: 0, kind: input, shape index: {}]
  %s1 = inlined_call_operand.vmem [shape: f32[1,4], index: 1, kind: input, shape index: {}]
  %s2 = inlined_call_operand.vmem [shape: f32[1,4], index: 2, kind: input, shape index: {}]
  %s3 = inlined_call_operand.vmem [shape: bf16[4,16], index: 3, kind: input, shape index: {}]
  %s4 = inlined_call_operand.vmem [shape: bf16[512,16], index: 4, kind: output, shape index: {0}]
  %s5 = inlined_call_operand.vmem [shape: f32[4,1,16], index: 5, kind: output, shape index: {1}]
  %s6 = inlined_call_operand.vmem [shape: f32[4,1,16], index: 6, kind: output, shape index: {2}]
  %7 = xla_tuple %s4, %s5, %s6
  %s8 = sld [smem:[#allocation0]]
  $region65: #{resnet_block_forward.6} parent=0
    _
  %s10 = ssub.s32 1, %s8
  %s11 = scalar_select 0, %s10, %s8
  loop: start=0, step=1, limit=6
  $region2: #{resnet_block_forward.6} parent=0 // loop_pre_header
    _
  $region3: #{resnet_block_forward.6} parent=0 // loop_header
    %s13 = sphi 0, %s17
    %p14 = scmp.ge.s32.totalorder %s13, 6
    %s23 = sphi 0, %s25
    %s26 = sphi 0, %s23
    %s27 = sphi 0, %s26
    %s43 = sphi 0, %s27
    %s47 = sphi 0, %s47
    %s49 = sphi 0, %s47
    %s50 = sphi 0, %s49
    %s64 = sphi 0, %s50
    %s68 = sphi 0, %s68
    %s70 = sphi 0, %s68
    %s71 = sphi 0, %s70
    %s85 = sphi 0, %s71
    %s89 = sphi 0, %s89
    %s91 = sphi 0, %s89
    %s92 = sphi 0, %s91
    %s106 = sphi 0, %s92
    %s112 = sphi 0, %s114
    %s115 = sphi 0, %s112
    %s116 = sphi 0, %s115
    %s132 = sphi 0, %s116
    %s138 = sphi 0, %s140
    %s141 = sphi 0, %s138
    %s142 = sphi 0, %s141
    %s158 = sphi 0, %s142
    %s164 = sphi 0, %s166
    %s167 = sphi 0, %s164
    %s168 = sphi 0, %s167
    %s184 = sphi 0, %s168
  $region4: #{resnet_block_forward.6} parent=0 // loop_header_branch
    %16 = sbr.rel (%p14) target = $region8
  $region5: #{resnet_block_forward.6} parent=0 // loop_body
    %s18 = ssub.s32 %s13, 1
    %s19 = ssub.s32 %s13, 2
    %s20 = sadd.s32 %s13, 1
    %s21 = ssub.s32 %s13, %s20
    %p22 = scmp.eq.s32.totalorder %s21, 0
    %s24 = sadd.s32 %s23, 1
    %s25 = scalar_select %p22, %s23, %s24
    %p28 = pneg %p22
    %p29 = scmp.eq.s32.totalorder %s13, 3
    %p30 = por %p28, %p29
    %p31 = scmp.ne.s32.totalorder %s23, %s26
    %p32 = scmp.eq.s32.totalorder %s13, 0
    %p33 = por %p31, %p32
    %p34 = scmp.ne.s32.totalorder %s23, %s26
    %p35 = scmp.eq.s32.totalorder %s18, 3
    %p36 = por %p34, %p35
    %p37 = scmp.ne.s32.totalorder %s26, %s27
    %p38 = scmp.eq.s32.totalorder %s18, 0
    %p39 = por %p37, %p38
    %p40 = scmp.ne.s32.totalorder %s26, %s27
    %p41 = scmp.eq.s32.totalorder %s19, 3
    %p42 = por %p40, %p41
    %p44 = scmp.ne.s32.totalorder %s27, %s43
    %p45 = scmp.eq.s32.totalorder %s19, 0
    %p46 = por %p44, %p45
    %s48 = sadd.s32 %s47, 1
    %p51 = scmp.eq.s32.totalorder %s13, 3
    %p52 = scmp.ne.s32.totalorder %s47, %s49
    %p53 = scmp.eq.s32.totalorder %s13, 0
    %p54 = por %p52, %p53
    %p55 = scmp.ne.s32.totalorder %s47, %s49
    %p56 = scmp.eq.s32.totalorder %s18, 3
    %p57 = por %p55, %p56
    %p58 = scmp.ne.s32.totalorder %s49, %s50
    %p59 = scmp.eq.s32.totalorder %s18, 0
    %p60 = por %p58, %p59
    %p61 = scmp.ne.s32.totalorder %s49, %s50
    %p62 = scmp.eq.s32.totalorder %s19, 3
    %p63 = por %p61, %p62
    %p65 = scmp.ne.s32.totalorder %s50, %s64
    %p66 = scmp.eq.s32.totalorder %s19, 0
    %p67 = por %p65, %p66
    %s69 = sadd.s32 %s68, 1
    %p72 = scmp.eq.s32.totalorder %s13, 3
    %p73 = scmp.ne.s32.totalorder %s68, %s70
    %p74 = scmp.eq.s32.totalorder %s13, 0
    %p75 = por %p73, %p74
    %p76 = scmp.ne.s32.totalorder %s68, %s70
    %p77 = scmp.eq.s32.totalorder %s18, 3
    %p78 = por %p76, %p77
    %p79 = scmp.ne.s32.totalorder %s70, %s71
    %p80 = scmp.eq.s32.totalorder %s18, 0
    %p81 = por %p79, %p80
    %p82 = scmp.ne.s32.totalorder %s70, %s71
    %p83 = scmp.eq.s32.totalorder %s19, 3
    %p84 = por %p82, %p83
    %p86 = scmp.ne.s32.totalorder %s71, %s85
    %p87 = scmp.eq.s32.totalorder %s19, 0
    %p88 = por %p86, %p87
    %s90 = sadd.s32 %s89, 1
    %p93 = scmp.eq.s32.totalorder %s13, 3
    %p94 = scmp.ne.s32.totalorder %s89, %s91
    %p95 = scmp.eq.s32.totalorder %s13, 0
    %p96 = por %p94, %p95
    %p97 = scmp.ne.s32.totalorder %s89, %s91
    %p98 = scmp.eq.s32.totalorder %s18, 3
    %p99 = por %p97, %p98
    %p100 = scmp.ne.s32.totalorder %s91, %s92
    %p101 = scmp.eq.s32.totalorder %s18, 0
    %p102 = por %p100, %p101
    %p103 = scmp.ne.s32.totalorder %s91, %s92
    %p104 = scmp.eq.s32.totalorder %s19, 3
    %p105 = por %p103, %p104
    %p107 = scmp.ne.s32.totalorder %s92, %s106
    %p108 = scmp.eq.s32.totalorder %s19, 0
    %p109 = por %p107, %p108
    %s110 = ssub.s32 %s13, %s20
    %p111 = scmp.eq.s32.totalorder %s110, 0
    %s113 = sadd.s32 %s112, 1
    %s114 = scalar_select %p111, %s112, %s113
    %p117 = pneg %p111
    %p118 = scmp.eq.s32.totalorder %s13, 3
    %p119 = por %p117, %p118
    %p120 = scmp.ne.s32.totalorder %s112, %s115
    %p121 = scmp.eq.s32.totalorder %s13, 0
    %p122 = por %p120, %p121
    %p123 = scmp.ne.s32.totalorder %s112, %s115
    %p124 = scmp.eq.s32.totalorder %s18, 3
    %p125 = por %p123, %p124
    %p126 = scmp.ne.s32.totalorder %s115, %s116
    %p127 = scmp.eq.s32.totalorder %s18, 0
    %p128 = por %p126, %p127
    %p129 = scmp.ne.s32.totalorder %s115, %s116
    %p130 = scmp.eq.s32.totalorder %s19, 3
    %p131 = por %p129, %p130
    %p133 = scmp.ne.s32.totalorder %s116, %s132
    %p134 = scmp.eq.s32.totalorder %s19, 0
    %p135 = por %p133, %p134
    %s136 = ssub.s32 %s13, %s20
    %p137 = scmp.eq.s32.totalorder %s136, 0
    %s139 = sadd.s32 %s138, 1
    %s140 = scalar_select %p137, %s138, %s139
    %p143 = pneg %p137
    %p144 = scmp.eq.s32.totalorder %s13, 3
    %p145 = por %p143, %p144
    %p146 = scmp.ne.s32.totalorder %s138, %s141
    %p147 = scmp.eq.s32.totalorder %s13, 0
    %p148 = por %p146, %p147
    %p149 = scmp.ne.s32.totalorder %s138, %s141
    %p150 = scmp.eq.s32.totalorder %s18, 3
    %p151 = por %p149, %p150
    %p152 = scmp.ne.s32.totalorder %s141, %s142
    %p153 = scmp.eq.s32.totalorder %s18, 0
    %p154 = por %p152, %p153
    %p155 = scmp.ne.s32.totalorder %s141, %s142
    %p156 = scmp.eq.s32.totalorder %s19, 3
    %p157 = por %p155, %p156
    %p159 = scmp.ne.s32.totalorder %s142, %s158
    %p160 = scmp.eq.s32.totalorder %s19, 0
    %p161 = por %p159, %p160
    %s162 = ssub.s32 %s13, %s20
    %p163 = scmp.eq.s32.totalorder %s162, 0
    %s165 = sadd.s32 %s164, 1
    %s166 = scalar_select %p163, %s164, %s165
    %p169 = pneg %p163
    %p170 = scmp.eq.s32.totalorder %s13, 3
    %p171 = por %p169, %p170
    %p172 = scmp.ne.s32.totalorder %s164, %s167
    %p173 = scmp.eq.s32.totalorder %s13, 0
    %p174 = por %p172, %p173
    %p175 = scmp.ne.s32.totalorder %s164, %s167
    %p176 = scmp.eq.s32.totalorder %s18, 3
    %p177 = por %p175, %p176
    %p178 = scmp.ne.s32.totalorder %s167, %s168
    %p179 = scmp.eq.s32.totalorder %s18, 0
    %p180 = por %p178, %p179
    %p181 = scmp.ne.s32.totalorder %s167, %s168
    %p182 = scmp.eq.s32.totalorder %s19, 3
    %p183 = por %p181, %p182
    %p185 = scmp.ne.s32.totalorder %s168, %s184
    %p186 = scmp.eq.s32.totalorder %s19, 0
    %p187 = por %p185, %p186
    %p188 = scmp.le.s32.totalorder 1, %s13
    %p189 = scmp.lt.s32.totalorder %s13, 5
    %p190 = pnand %p188, %p189
    %p191 = pneg %p190
    // Predicated region
    $region9: #{resnet_block_forward.6} parent=5 // pred_check
      _
    $region10: #{resnet_block_forward.6} parent=5 // pred_check_branch
      %193 = sbr.rel (%p190) target = $region12
    $region11: #{resnet_block_forward.6} parent=5 // pred_region
      %s194 = ssub.s32 %s13, 1
      // Predicated region
      $region13: #{resnet_block_forward.6} parent=11 // pred_check
        %p195 = pneg %p60
      $region14: #{resnet_block_forward.6} parent=11 // pred_check_branch
        %197 = sbr.rel (%p195) target = $region16
      $region15: #{resnet_block_forward.6} parent=11 // pred_region
        _
      $region16: #{resnet_block_forward.6} parent=11 // pred_fallthru
        _
      // Predicated region
      $region17: #{resnet_block_forward.6} parent=11 // pred_check
        %p198 = pneg %p81
      $region18: #{resnet_block_forward.6} parent=11 // pred_check_branch
        %200 = sbr.rel (%p198) target = $region20
      $region19: #{resnet_block_forward.6} parent=11 // pred_region
        _
      $region20: #{resnet_block_forward.6} parent=11 // pred_fallthru
        _
      // Predicated region
      $region21: #{resnet_block_forward.6} parent=11 // pred_check
        %p201 = pneg %p102
      $region22: #{resnet_block_forward.6} parent=11 // pred_check_branch
        %203 = sbr.rel (%p201) target = $region24
      $region23: #{resnet_block_forward.6} parent=11 // pred_region
        _
      $region24: #{resnet_block_forward.6} parent=11 // pred_fallthru
        _
    $region12: #{resnet_block_forward.6} parent=5 // pred_fallthru
      _
    %p204 = scmp.lt.s32.totalorder %s13, 4
    // Predicated region
    $region25: #{resnet_block_forward.6} parent=5 // pred_check
      %p205 = pneg %p204
    $region26: #{resnet_block_forward.6} parent=5 // pred_check_branch
      %207 = sbr.rel (%p205) target = $region28
    $region27: #{resnet_block_forward.6} parent=5 // pred_region
      // Predicated region
      $region29: #{resnet_block_forward.6} parent=27 // pred_check
        %p208 = pneg %p33
      $region30: #{resnet_block_forward.6} parent=27 // pred_check_branch
        %210 = sbr.rel (%p208) target = $region32
      $region31: #{resnet_block_forward.6} parent=27 // pred_region
        %s211 = smul.u32 16, %s13
        %p212 = scmp.lt.s32.totalorder %s211, 63
        %s213 = scalar_select %p212, %s211, 63
        %s214 = smul.addr %s213, 4
        %s215 = scalar_lea.vmem %s0, %s214
        %s216 = smul.u32 16, %s13
      $region32: #{resnet_block_forward.6} parent=27 // pred_fallthru
        _
    $region28: #{resnet_block_forward.6} parent=5 // pred_fallthru
      _
    %p217 = scmp.le.s32.totalorder 1, %s13
    %p218 = scmp.lt.s32.totalorder %s13, 5
    %p219 = pnand %p217, %p218
    %p220 = pneg %p219
    // Predicated region
    $region33: #{resnet_block_forward.6} parent=5 // pred_check
      _
    $region34: #{resnet_block_forward.6} parent=5 // pred_check_branch
      %222 = sbr.rel (%p219) target = $region36
    $region35: #{resnet_block_forward.6} parent=5 // pred_region
      %s223 = ssub.s32 %s13, 1
      %s224 = smul.u32 16, %s18
      %p225 = scmp.lt.s32.totalorder %s224, 63
      %s226 = scalar_select %p225, %s224, 63
      %s227 = smul.addr %s226, 4
      %s228 = scalar_lea.vmem %s0, %s227
      %p229 = pneg %p39
      %p230 = pneg %p36
      %p231 = pneg %p60
      %p232 = pneg %p57
      %p233 = pneg %p81
      %p234 = pneg %p78
      %p235 = pneg %p102
      %p236 = pneg %p99
      %p237 = pneg %p128
      %p238 = pneg %p125
      %s239 = smul.u32 16, %s18
      %p240 = scmp.lt.s32.totalorder %s239, 63
      %s241 = scalar_select %p240, %s239, 63
      %s242 = smul.addr %s241, 4
      %s243 = scalar_lea.vmem %s4, %s242
      %p244 = pneg %p154
      %p245 = pneg %p151
      %p246 = scmp.lt.s32.totalorder %s18, 3
      %s247 = scalar_select %p246, %s18, 3
      %s248 = scalar_lea.vmem %s5, %s247
      %p249 = pneg %p180
      %p250 = pneg %p177
      %p251 = scmp.lt.s32.totalorder %s18, 3
      %s252 = scalar_select %p251, %s18, 3
      %s253 = scalar_lea.vmem %s6, %s252
      %s254 = smul.u32 16, %s18
      %p255 = scmp.lt.s32.totalorder %s254, 63
      %s256 = scalar_select %p255, %s254, 63
      %s257 = smul.addr %s256, 4
      %s258 = scalar_lea.vmem %s0, %s257
      %s259 = smul.u32 16, %s18
      %s260 = smul.u32 16, %s18
      %p261 = scmp.lt.s32.totalorder %s260, 63
      %s262 = scalar_select %p261, %s260, 63
      %s263 = smul.addr %s262, 4
      %s264 = scalar_lea.vmem %s4, %s263
      %s265 = smul.u32 16, %s18
      %p266 = scmp.lt.s32.totalorder %s18, 3
      %s267 = scalar_select %p266, %s18, 3
      %s268 = scalar_lea.vmem %s5, %s267
      %p269 = scmp.lt.s32.totalorder %s18, 3
      %s270 = scalar_select %p269, %s18, 3
      %s271 = scalar_lea.vmem %s6, %s270
      %v273 = vld [vmem:[%s258] sm:$0xf]
      %v274 = vld [vmem:[%s258 + $0x4] sm:$0xf]
      %v275 = vld [vmem:[%s258 + $0x8] sm:$0xf]
      %v276 = vld [vmem:[%s258 + $0xc] sm:$0xf]
      %v277 = vld [vmem:[%s258 + $0x10] sm:$0xf]
      %v278 = vld [vmem:[%s258 + $0x14] sm:$0xf]
      %v279 = vld [vmem:[%s258 + $0x18] sm:$0xf]
      %v280 = vld [vmem:[%s258 + $0x1c] sm:$0xf]
      %v281 = vld [vmem:[%s258 + $0x20] sm:$0xf]
      %v282 = vld [vmem:[%s258 + $0x24] sm:$0xf]
      %v283 = vld [vmem:[%s258 + $0x28] sm:$0xf]
      %v284 = vld [vmem:[%s258 + $0x2c] sm:$0xf]
      %v285 = vld [vmem:[%s258 + $0x30] sm:$0xf]
      %v286 = vld [vmem:[%s258 + $0x34] sm:$0xf]
      %v287 = vld [vmem:[%s258 + $0x38] sm:$0xf]
      %v288 = vld [vmem:[%s258 + $0x3c] sm:$0xf]
      %v289 = vunpack.c.l.bf16 %v273
      %v290 = vunpack.c.l.bf16 %v274
      %v291 = vunpack.c.l.bf16 %v275
      %v292 = vunpack.c.l.bf16 %v276
      %v293 = vunpack.c.l.bf16 %v277
      %v294 = vunpack.c.l.bf16 %v278
      %v295 = vunpack.c.l.bf16 %v279
      %v296 = vunpack.c.l.bf16 %v280
      %v297 = vunpack.c.l.bf16 %v281
      %v298 = vunpack.c.l.bf16 %v282
      %v299 = vunpack.c.l.bf16 %v283
      %v300 = vunpack.c.l.bf16 %v284
      %v301 = vunpack.c.l.bf16 %v285
      %v302 = vunpack.c.l.bf16 %v286
      %v303 = vunpack.c.l.bf16 %v287
      %v304 = vunpack.c.l.bf16 %v288
      %v305 = vld [vmem:[%s1] sm:$0x1]
      %v307 = vlaneseq
      %v308 = vshrl.u32 %v307, 7
      %v309 = vsub.s32 0, %v308
      %v310 = vrot.slane %v305, %v309
      %v312 = vmul.f32 %v289, %v310
      %v313 = vmul.f32 %v290, %v310
      %v314 = vmul.f32 %v291, %v310
      %v315 = vmul.f32 %v292, %v310
      %v316 = vmul.f32 %v293, %v310
      %v317 = vmul.f32 %v294, %v310
      %v318 = vmul.f32 %v295, %v310
      %v319 = vmul.f32 %v296, %v310
      %v320 = vmul.f32 %v297, %v310
      %v321 = vmul.f32 %v298, %v310
      %v322 = vmul.f32 %v299, %v310
      %v323 = vmul.f32 %v300, %v310
      %v324 = vmul.f32 %v301, %v310
      %v325 = vmul.f32 %v302, %v310
      %v326 = vmul.f32 %v303, %v310
      %v327 = vmul.f32 %v304, %v310
      %v328 = vld [vmem:[%s2] sm:$0x1]
      %v330 = vlaneseq
      %v331 = vshrl.u32 %v330, 7
      %v332 = vsub.s32 0, %v331
      %v333 = vrot.slane %v328, %v332
      %v335 = vadd.f32 %v312, %v333
      %v336 = vadd.f32 %v313, %v333
      %v337 = vadd.f32 %v314, %v333
      %v338 = vadd.f32 %v315, %v333
      %v339 = vadd.f32 %v316, %v333
      %v340 = vadd.f32 %v317, %v333
      %v341 = vadd.f32 %v318, %v333
      %v342 = vadd.f32 %v319, %v333
      %v343 = vadd.f32 %v320, %v333
      %v344 = vadd.f32 %v321, %v333
      %v345 = vadd.f32 %v322, %v333
      %v346 = vadd.f32 %v323, %v333
      %v347 = vadd.f32 %v324, %v333
      %v348 = vadd.f32 %v325, %v333
      %v349 = vadd.f32 %v326, %v333
      %v350 = vadd.f32 %v327, %v333
      %v351 = vmax.f32 %v335, 0.0
      %v352 = vmax.f32 %v336, 0.0
      %v353 = vmax.f32 %v337, 0.0
      %v354 = vmax.f32 %v338, 0.0
      %v355 = vmax.f32 %v339, 0.0
      %v356 = vmax.f32 %v340, 0.0
      %v357 = vmax.f32 %v341, 0.0
      %v358 = vmax.f32 %v342, 0.0
      %v359 = vmax.f32 %v343, 0.0
      %v360 = vmax.f32 %v344, 0.0
      %v361 = vmax.f32 %v345, 0.0
      %v362 = vmax.f32 %v346, 0.0
      %v363 = vmax.f32 %v347, 0.0
      %v364 = vmax.f32 %v348, 0.0
      %v365 = vmax.f32 %v349, 0.0
      %v366 = vmax.f32 %v350, 0.0
      %v367 = vpack.c.bf16 %v352, %v351
      %v368 = vpack.c.bf16 %v354, %v353
      %v369 = vpack.c.bf16 %v356, %v355
      %v370 = vpack.c.bf16 %v358, %v357
      %v371 = vpack.c.bf16 %v360, %v359
      %v372 = vpack.c.bf16 %v362, %v361
      %v373 = vpack.c.bf16 %v364, %v363
      %v374 = vpack.c.bf16 %v366, %v365
      %v375 = vld [vmem:[%s3] sm:$0x3]
      %vm376 = vcmask 31744
      %v378 = vsel %vm376, %v367, 0
      %v381 = vsel %vm376, %v368, 0
      %v384 = vsel %vm376, %v369, 0
      %v387 = vsel %vm376, %v370, 0
      %v390 = vsel %vm376, %v371, 0
      %v393 = vsel %vm376, %v372, 0
      %v396 = vsel %vm376, %v373, 0
      %v399 = vsel %vm376, %v374, 0
      %vm401 = vcmask 1041408
      %v403 = vsel %vm401, %v375, 0
      %405 = vmatprep.subr.bf16.mxu0 0
      %406 = vmatpush1.bf16.msra.mxu0 %v403
      %407 = vmatprep.subr.bf16.mxu0 0
      %408 = vmatpush1.bf16.msra.mxu0 0
      %409 = vmatprep.subr.bf16.mxu0 0
      %410 = vmatpush1.bf16.msra.mxu0 0
      %411 = vmatprep.subr.bf16.mxu0 0
      %412 = vmatpush1.bf16.msra.mxu0 0
      %413 = vmatprep.subr.bf16.mxu0 0
      %414 = vmatpush1.bf16.msra.mxu0 0
      %415 = vmatprep.subr.bf16.mxu0 0
      %416 = vmatpush1.bf16.msra.mxu0 0
      %417 = vmatprep.subr.bf16.mxu0 0
      %418 = vmatpush1.bf16.msra.mxu0 0
      %419 = vmatprep.subr.bf16.mxu0 0
      %420 = vmatpush1.bf16.msra.mxu0 0
      %421 = vmatprep.subr.bf16.mxu0 0
      %422 = vmatpush1.bf16.msra.mxu0 0
      %423 = vmatprep.subr.bf16.mxu0 0
      %424 = vmatpush1.bf16.msra.mxu0 0
      %425 = vmatprep.subr.bf16.mxu0 0
      %426 = vmatpush1.bf16.msra.mxu0 0
      %427 = vmatprep.subr.bf16.mxu0 0
      %428 = vmatpush1.bf16.msra.mxu0 0
      %429 = vmatprep.subr.bf16.mxu0 0
      %430 = vmatpush1.bf16.msra.mxu0 0
      %431 = vmatprep.subr.bf16.mxu0 0
      %432 = vmatpush1.bf16.msra.mxu0 0
      %433 = vmatprep.subr.bf16.mxu0 0
      %434 = vmatpush1.bf16.msra.mxu0 0
      %435 = vmatprep.subr.bf16.mxu0 0
      %436 = vmatpush1.bf16.msra.mxu0 0
      %437 = vmatprep.mubr.bf16.mxu0 0
      %438 = vmatmul.mubr.bf16.gmra.mrb[0].mxu0 %v378
      %v439 = vpop.f32.mrb[0].mxu0
      %v440 = vadd.f32 0.0, %v439
      %v441 = vpop.f32.mrb[0].mxu0
      %v442 = vpop.f32.mrb[0].mxu0
      %v443 = vadd.f32 0.0, %v442
      %v444 = vpop.f32.mrb[0].mxu0
      %445 = vmatprep.mubr.bf16.mxu0 0
      %446 = vmatmul.mubr.bf16.gmra.mrb[0].mxu0 %v381
      %v447 = vpop.f32.mrb[0].mxu0
      %v448 = vadd.f32 0.0, %v447
      %v449 = vpop.f32.mrb[0].mxu0
      %v450 = vpop.f32.mrb[0].mxu0
      %v451 = vadd.f32 0.0, %v450
      %v452 = vpop.f32.mrb[0].mxu0
      %453 = vmatprep.mubr.bf16.mxu0 0
      %454 = vmatmul.mubr.bf16.gmra.mrb[0].mxu0 %v384
      %v455 = vpop.f32.mrb[0].mxu0
      %v456 = vadd.f32 0.0, %v455
      %v457 = vpop.f32.mrb[0].mxu0
      %v458 = vpop.f32.mrb[0].mxu0
      %v459 = vadd.f32 0.0, %v458
      %v460 = vpop.f32.mrb[0].mxu0
      %461 = vmatprep.mubr.bf16.mxu0 0
      %462 = vmatmul.mubr.bf16.gmra.mrb[0].mxu0 %v387
      %v463 = vpop.f32.mrb[0].mxu0
      %v464 = vadd.f32 0.0, %v463
      %v465 = vpop.f32.mrb[0].mxu0
      %v466 = vpop.f32.mrb[0].mxu0
      %v467 = vadd.f32 0.0, %v466
      %v468 = vpop.f32.mrb[0].mxu0
      %469 = vmatprep.mubr.bf16.mxu0 0
      %470 = vmatmul.mubr.bf16.gmra.mrb[0].mxu0 %v390
      %v471 = vpop.f32.mrb[0].mxu0
      %v472 = vadd.f32 0.0, %v471
      %v473 = vpop.f32.mrb[0].mxu0
      %v474 = vpop.f32.mrb[0].mxu0
      %v475 = vadd.f32 0.0, %v474
      %v476 = vpop.f32.mrb[0].mxu0
      %477 = vmatprep.mubr.bf16.mxu0 0
      %478 = vmatmul.mubr.bf16.gmra.mrb[0].mxu0 %v393
      %v479 = vpop.f32.mrb[0].mxu0
      %v480 = vadd.f32 0.0, %v479
      %v481 = vpop.f32.mrb[0].mxu0
      %v482 = vpop.f32.mrb[0].mxu0
      %v483 = vadd.f32 0.0, %v482
      %v484 = vpop.f32.mrb[0].mxu0
      %485 = vmatprep.mubr.bf16.mxu0 0
      %486 = vmatmul.mubr.bf16.gmra.mrb[0].mxu0 %v396
      %v487 = vpop.f32.mrb[0].mxu0
      %v488 = vadd.f32 0.0, %v487
      %v489 = vpop.f32.mrb[0].mxu0
      %v490 = vpop.f32.mrb[0].mxu0
      %v491 = vadd.f32 0.0, %v490
      %v492 = vpop.f32.mrb[0].mxu0
      %493 = vmatprep.mubr.bf16.mxu0 0
      %494 = vmatmul.mubr.bf16.gmra.mrb[0].mxu0 %v399
      %v495 = vpop.f32.mrb[0].mxu0
      %v496 = vadd.f32 0.0, %v495
      %v497 = vpop.f32.mrb[0].mxu0
      %v498 = vpop.f32.mrb[0].mxu0
      %v499 = vadd.f32 0.0, %v498
      %v500 = vpop.f32.mrb[0].mxu0
      %501 = vdwg.mxu0
      %v502 = vpack.c.bf16 %v443, %v440
      %v503 = vpack.c.bf16 %v451, %v448
      %v504 = vpack.c.bf16 %v459, %v456
      %v505 = vpack.c.bf16 %v467, %v464
      %v506 = vpack.c.bf16 %v475, %v472
      %v507 = vpack.c.bf16 %v483, %v480
      %v508 = vpack.c.bf16 %v491, %v488
      %v509 = vpack.c.bf16 %v499, %v496
      %v518 = vunpack.c.l.b16 %v502
      %v519 = vunpack.c.h.b16 %v502
      %v520 = vunpack.c.l.b16 %v503
      %v521 = vunpack.c.h.b16 %v503
      %v522 = vunpack.c.l.b16 %v504
      %v523 = vunpack.c.h.b16 %v504
      %v524 = vunpack.c.l.b16 %v505
      %v525 = vunpack.c.h.b16 %v505
      %v526 = vunpack.c.l.b16 %v506
      %v527 = vunpack.c.h.b16 %v506
      %v528 = vunpack.c.l.b16 %v507
      %v529 = vunpack.c.h.b16 %v507
      %v530 = vunpack.c.l.b16 %v508
      %v531 = vunpack.c.h.b16 %v508
      %v532 = vunpack.c.l.b16 %v509
      %v533 = vunpack.c.h.b16 %v509
      %v534 = vpack.c.b16 %v518, %v518
      %v535 = vpack.c.b16 %v519, %v519
      %v536 = vpack.c.b16 %v520, %v520
      %v537 = vpack.c.b16 %v521, %v521
      %v538 = vpack.c.b16 %v522, %v522
      %v539 = vpack.c.b16 %v523, %v523
      %v540 = vpack.c.b16 %v524, %v524
      %v541 = vpack.c.b16 %v525, %v525
      %v542 = vpack.c.b16 %v526, %v526
      %v543 = vpack.c.b16 %v527, %v527
      %v544 = vpack.c.b16 %v528, %v528
      %v545 = vpack.c.b16 %v529, %v529
      %v546 = vpack.c.b16 %v530, %v530
      %v547 = vpack.c.b16 %v531, %v531
      %v548 = vpack.c.b16 %v532, %v532
      %v549 = vpack.c.b16 %v533, %v533
      %vm566 = vcmask 125952
      %567 = vst.msk [vmem:[%s264] sm:$0xf] %vm566, %v534
      %568 = vst.msk [vmem:[%s264 + $0x4] sm:$0xf] %vm566, %v535
      %569 = vst.msk [vmem:[%s264 + $0x8] sm:$0xf] %vm566, %v536
      %570 = vst.msk [vmem:[%s264 + $0xc] sm:$0xf] %vm566, %v537
      %571 = vst.msk [vmem:[%s264 + $0x10] sm:$0xf] %vm566, %v538
      %572 = vst.msk [vmem:[%s264 + $0x14] sm:$0xf] %vm566, %v539
      %573 = vst.msk [vmem:[%s264 + $0x18] sm:$0xf] %vm566, %v540
      %574 = vst.msk [vmem:[%s264 + $0x1c] sm:$0xf] %vm566, %v541
      %575 = vst.msk [vmem:[%s264 + $0x20] sm:$0xf] %vm566, %v542
      %576 = vst.msk [vmem:[%s264 + $0x24] sm:$0xf] %vm566, %v543
      %577 = vst.msk [vmem:[%s264 + $0x28] sm:$0xf] %vm566, %v544
      %578 = vst.msk [vmem:[%s264 + $0x2c] sm:$0xf] %vm566, %v545
      %579 = vst.msk [vmem:[%s264 + $0x30] sm:$0xf] %vm566, %v546
      %580 = vst.msk [vmem:[%s264 + $0x34] sm:$0xf] %vm566, %v547
      %581 = vst.msk [vmem:[%s264 + $0x38] sm:$0xf] %vm566, %v548
      %582 = vst.msk [vmem:[%s264 + $0x3c] sm:$0xf] %vm566, %v549
      %vm583 = vcmask 130048
      %v584 = vsel %vm583, %v440, 0.0
      %v585 = vsel %vm583, %v443, 0.0
      %v586 = vadd.f32 %v584, %v585
      %v587 = vsel %vm583, %v448, 0.0
      %v588 = vadd.f32 %v586, %v587
      %v589 = vsel %vm583, %v451, 0.0
      %v590 = vadd.f32 %v588, %v589
      %v591 = vsel %vm583, %v456, 0.0
      %v592 = vadd.f32 %v590, %v591
      %v593 = vsel %vm583, %v459, 0.0
      %v594 = vadd.f32 %v592, %v593
      %v595 = vsel %vm583, %v464, 0.0
      %v596 = vadd.f32 %v594, %v595
      %v597 = vsel %vm583, %v467, 0.0
      %v598 = vadd.f32 %v596, %v597
      %v599 = vsel %vm583, %v472, 0.0
      %v600 = vadd.f32 %v598, %v599
      %v601 = vsel %vm583, %v475, 0.0
      %v602 = vadd.f32 %v600, %v601
      %v603 = vsel %vm583, %v480, 0.0
      %v604 = vadd.f32 %v602, %v603
      %v605 = vsel %vm583, %v483, 0.0
      %v606 = vadd.f32 %v604, %v605
      %v607 = vsel %vm583, %v488, 0.0
      %v608 = vadd.f32 %v606, %v607
      %v609 = vsel %vm583, %v491, 0.0
      %v610 = vadd.f32 %v608, %v609
      %v611 = vsel %vm583, %v496, 0.0
      %v612 = vadd.f32 %v610, %v611
      %v613 = vsel %vm583, %v499, 0.0
      %v614 = vadd.f32 %v612, %v613
      %v615 = vrot.slane %v614, 4
      %v616 = vadd.f32 %v614, %v615
      %v617 = vrot.slane %v616, 2
      %v618 = vadd.f32 %v616, %v617
      %v619 = vrot.slane %v618, 1
      %v620 = vadd.f32 %v618, %v619
      %vm621 = vcmask 122880
      %622 = vst.msk [vmem:[%s268] sm:$0x1] %vm621, %v620
      %v623 = vmul.f32 %v440, %v440
      %v624 = vmul.f32 %v443, %v443
      %v625 = vmul.f32 %v448, %v448
      %v626 = vmul.f32 %v451, %v451
      %v627 = vmul.f32 %v456, %v456
      %v628 = vmul.f32 %v459, %v459
      %v629 = vmul.f32 %v464, %v464
      %v630 = vmul.f32 %v467, %v467
      %v631 = vmul.f32 %v472, %v472
      %v632 = vmul.f32 %v475, %v475
      %v633 = vmul.f32 %v480, %v480
      %v634 = vmul.f32 %v483, %v483
      %v635 = vmul.f32 %v488, %v488
      %v636 = vmul.f32 %v491, %v491
      %v637 = vmul.f32 %v496, %v496
      %v638 = vmul.f32 %v499, %v499
      %v639 = vsel %vm583, %v623, 0.0
      %v640 = vsel %vm583, %v624, 0.0
      %v641 = vadd.f32 %v639, %v640
      %v642 = vsel %vm583, %v625, 0.0
      %v643 = vadd.f32 %v641, %v642
      %v644 = vsel %vm583, %v626, 0.0
      %v645 = vadd.f32 %v643, %v644
      %v646 = vsel %vm583, %v627, 0.0
      %v647 = vadd.f32 %v645, %v646
      %v648 = vsel %vm583, %v628, 0.0
      %v649 = vadd.f32 %v647, %v648
      %v650 = vsel %vm583, %v629, 0.0
      %v651 = vadd.f32 %v649, %v650
      %v652 = vsel %vm583, %v630, 0.0
      %v653 = vadd.f32 %v651, %v652
      %v654 = vsel %vm583, %v631, 0.0
      %v655 = vadd.f32 %v653, %v654
      %v656 = vsel %vm583, %v632, 0.0
      %v657 = vadd.f32 %v655, %v656
      %v658 = vsel %vm583, %v633, 0.0
      %v659 = vadd.f32 %v657, %v658
      %v660 = vsel %vm583, %v634, 0.0
      %v661 = vadd.f32 %v659, %v660
      %v662 = vsel %vm583, %v635, 0.0
      %v663 = vadd.f32 %v661, %v662
      %v664 = vsel %vm583, %v636, 0.0
      %v665 = vadd.f32 %v663, %v664
      %v666 = vsel %vm583, %v637, 0.0
      %v667 = vadd.f32 %v665, %v666
      %v668 = vsel %vm583, %v638, 0.0
      %v669 = vadd.f32 %v667, %v668
      %v670 = vrot.slane %v669, 4
      %v671 = vadd.f32 %v669, %v670
      %v672 = vrot.slane %v671, 2
      %v673 = vadd.f32 %v671, %v672
      %v674 = vrot.slane %v673, 1
      %v675 = vadd.f32 %v673, %v674
      %676 = vst.msk [vmem:[%s271] sm:$0x1] %vm621, %v675
      %s677 = smul.u32 16, %s18
      %p678 = scmp.lt.s32.totalorder %s677, 63
      %s679 = scalar_select %p678, %s677, 63
      %s680 = smul.addr %s679, 4
      %s681 = scalar_lea.vmem %s4, %s680
      %p682 = scmp.lt.s32.totalorder %s18, 3
      %s683 = scalar_select %p682, %s18, 3
      %s684 = scalar_lea.vmem %s5, %s683
      %p685 = scmp.lt.s32.totalorder %s18, 3
      %s686 = scalar_select %p685, %s18, 3
      %s687 = scalar_lea.vmem %s6, %s686
      // Predicated region
      $region37: #{resnet_block_forward.6} parent=35 // pred_check
        %p688 = pneg %p125
      $region38: #{resnet_block_forward.6} parent=35 // pred_check_branch
        %690 = sbr.rel (%p688) target = $region40
      $region39: #{resnet_block_forward.6} parent=35 // pred_region
        %s691 = smul.u32 16, %s18
      $region40: #{resnet_block_forward.6} parent=35 // pred_fallthru
        _
      // Predicated region
      $region41: #{resnet_block_forward.6} parent=35 // pred_check
        %p692 = pneg %p151
      $region42: #{resnet_block_forward.6} parent=35 // pred_check_branch
        %694 = sbr.rel (%p692) target = $region44
      $region43: #{resnet_block_forward.6} parent=35 // pred_region
        _
      $region44: #{resnet_block_forward.6} parent=35 // pred_fallthru
        _
      // Predicated region
      $region45: #{resnet_block_forward.6} parent=35 // pred_check
        %p695 = pneg %p177
      $region46: #{resnet_block_forward.6} parent=35 // pred_check_branch
        %697 = sbr.rel (%p695) target = $region48
      $region47: #{resnet_block_forward.6} parent=35 // pred_region
        _
      $region48: #{resnet_block_forward.6} parent=35 // pred_fallthru
        _
    $region36: #{resnet_block_forward.6} parent=5 // pred_fallthru
      _
    %p698 = scmp.le.s32.totalorder 2, %s13
    // Predicated region
    $region49: #{resnet_block_forward.6} parent=5 // pred_check
      %p699 = pneg %p698
    $region50: #{resnet_block_forward.6} parent=5 // pred_check_branch
      %701 = sbr.rel (%p699) target = $region52
    $region51: #{resnet_block_forward.6} parent=5 // pred_region
      %s702 = ssub.s32 %s13, 2
      // Predicated region
      $region53: #{resnet_block_forward.6} parent=51 // pred_check
        %p703 = pneg %p131
      $region54: #{resnet_block_forward.6} parent=51 // pred_check_branch
        %705 = sbr.rel (%p703) target = $region56
      $region55: #{resnet_block_forward.6} parent=51 // pred_region
        %s706 = smul.u32 16, %s19
        %p707 = scmp.lt.s32.totalorder %s706, 63
        %s708 = scalar_select %p707, %s706, 63
        %s709 = smul.addr %s708, 4
        %s710 = scalar_lea.vmem %s4, %s709
      $region56: #{resnet_block_forward.6} parent=51 // pred_fallthru
        _
      // Predicated region
      $region57: #{resnet_block_forward.6} parent=51 // pred_check
        %p711 = pneg %p157
      $region58: #{resnet_block_forward.6} parent=51 // pred_check_branch
        %713 = sbr.rel (%p711) target = $region60
      $region59: #{resnet_block_forward.6} parent=51 // pred_region
        %p714 = scmp.lt.s32.totalorder %s19, 3
        %s715 = scalar_select %p714, %s19, 3
        %s716 = scalar_lea.vmem %s5, %s715
      $region60: #{resnet_block_forward.6} parent=51 // pred_fallthru
        _
      // Predicated region
      $region61: #{resnet_block_forward.6} parent=51 // pred_check
        %p717 = pneg %p183
      $region62: #{resnet_block_forward.6} parent=51 // pred_check_branch
        %719 = sbr.rel (%p717) target = $region64
      $region63: #{resnet_block_forward.6} parent=51 // pred_region
        %p720 = scmp.lt.s32.totalorder %s19, 3
        %s721 = scalar_select %p720, %s19, 3
        %s722 = scalar_lea.vmem %s6, %s721
      $region64: #{resnet_block_forward.6} parent=51 // pred_fallthru
        _
    $region52: #{resnet_block_forward.6} parent=5 // pred_fallthru
      _
  $region6: #{resnet_block_forward.6} parent=0 // loop_footer
    %s17 = sadd.s32 1, %s13
  $region7: #{resnet_block_forward.6} parent=0 // loop_footer_branch
    %12 = sbr.rel target = $region3
  $region8: #{resnet_block_forward.6} parent=0 // loop_exit
    _

// kernel: resnet_block_forward.7
$region0: #{resnet_block_forward.7}
  #allocation0 [shape = 'u32[]', space=smem, size = 0x4, offset = 0x4, fixed_abs, tag = 'smem constant byte address 0x4 - core index']
  #allocation1 [shape = 'u32[144,128]{1,0:T(1,128)}', space=vmem, size = 0x12000, scoped, tag = 'internal scratch']
  %s0 = inlined_call_operand.vmem [shape: bf16[512,16], index: 0, kind: input, shape index: {}]
  %s1 = inlined_call_operand.vmem [shape: f32[512,16], index: 1, kind: input, shape index: {}]
  %s2 = inlined_call_operand.vmem [shape: f32[1,16], index: 2, kind: input, shape index: {}]
  %s3 = inlined_call_operand.vmem [shape: f32[1,16], index: 3, kind: input, shape index: {}]
  %s4 = inlined_call_operand.vmem [shape: f32[512,16], index: 4, kind: output, shape index: {}]
  %s5 = sld [smem:[#allocation0]]
  $region49: #{resnet_block_forward.7} parent=0
    _
  %s7 = ssub.s32 1, %s5
  %s8 = scalar_select 0, %s7, %s5
  loop: start=0, step=1, limit=6
  $region2: #{resnet_block_forward.7} parent=0 // loop_pre_header
    _
  $region3: #{resnet_block_forward.7} parent=0 // loop_header
    %s10 = sphi 0, %s14
    %p11 = scmp.ge.s32.totalorder %s10, 6
    %s20 = sphi 0, %s22
    %s23 = sphi 0, %s20
    %s24 = sphi 0, %s23
    %s40 = sphi 0, %s24
    %s46 = sphi 0, %s48
    %s49 = sphi 0, %s46
    %s50 = sphi 0, %s49
    %s66 = sphi 0, %s50
    %s70 = sphi 0, %s70
    %s72 = sphi 0, %s70
    %s73 = sphi 0, %s72
    %s87 = sphi 0, %s73
    %s91 = sphi 0, %s91
    %s93 = sphi 0, %s91
    %s94 = sphi 0, %s93
    %s108 = sphi 0, %s94
    %s114 = sphi 0, %s116
    %s117 = sphi 0, %s114
    %s118 = sphi 0, %s117
    %s134 = sphi 0, %s118
  $region4: #{resnet_block_forward.7} parent=0 // loop_header_branch
    %13 = sbr.rel (%p11) target = $region8
  $region5: #{resnet_block_forward.7} parent=0 // loop_body
    %s15 = ssub.s32 %s10, 1
    %s16 = ssub.s32 %s10, 2
    %s17 = sadd.s32 %s10, 1
    %s18 = ssub.s32 %s10, %s17
    %p19 = scmp.eq.s32.totalorder %s18, 0
    %s21 = sadd.s32 %s20, 1
    %s22 = scalar_select %p19, %s20, %s21
    %p25 = pneg %p19
    %p26 = scmp.eq.s32.totalorder %s10, 3
    %p27 = por %p25, %p26
    %p28 = scmp.ne.s32.totalorder %s20, %s23
    %p29 = scmp.eq.s32.totalorder %s10, 0
    %p30 = por %p28, %p29
    %p31 = scmp.ne.s32.totalorder %s20, %s23
    %p32 = scmp.eq.s32.totalorder %s15, 3
    %p33 = por %p31, %p32
    %p34 = scmp.ne.s32.totalorder %s23, %s24
    %p35 = scmp.eq.s32.totalorder %s15, 0
    %p36 = por %p34, %p35
    %p37 = scmp.ne.s32.totalorder %s23, %s24
    %p38 = scmp.eq.s32.totalorder %s16, 3
    %p39 = por %p37, %p38
    %p41 = scmp.ne.s32.totalorder %s24, %s40
    %p42 = scmp.eq.s32.totalorder %s16, 0
    %p43 = por %p41, %p42
    %s44 = ssub.s32 %s10, %s17
    %p45 = scmp.eq.s32.totalorder %s44, 0
    %s47 = sadd.s32 %s46, 1
    %s48 = scalar_select %p45, %s46, %s47
    %p51 = pneg %p45
    %p52 = scmp.eq.s32.totalorder %s10, 3
    %p53 = por %p51, %p52
    %p54 = scmp.ne.s32.totalorder %s46, %s49
    %p55 = scmp.eq.s32.totalorder %s10, 0
    %p56 = por %p54, %p55
    %p57 = scmp.ne.s32.totalorder %s46, %s49
    %p58 = scmp.eq.s32.totalorder %s15, 3
    %p59 = por %p57, %p58
    %p60 = scmp.ne.s32.totalorder %s49, %s50
    %p61 = scmp.eq.s32.totalorder %s15, 0
    %p62 = por %p60, %p61
    %p63 = scmp.ne.s32.totalorder %s49, %s50
    %p64 = scmp.eq.s32.totalorder %s16, 3
    %p65 = por %p63, %p64
    %p67 = scmp.ne.s32.totalorder %s50, %s66
    %p68 = scmp.eq.s32.totalorder %s16, 0
    %p69 = por %p67, %p68
    %s71 = sadd.s32 %s70, 1
    %p74 = scmp.eq.s32.totalorder %s10, 3
    %p75 = scmp.ne.s32.totalorder %s70, %s72
    %p76 = scmp.eq.s32.totalorder %s10, 0
    %p77 = por %p75, %p76
    %p78 = scmp.ne.s32.totalorder %s70, %s72
    %p79 = scmp.eq.s32.totalorder %s15, 3
    %p80 = por %p78, %p79
    %p81 = scmp.ne.s32.totalorder %s72, %s73
    %p82 = scmp.eq.s32.totalorder %s15, 0
    %p83 = por %p81, %p82
    %p84 = scmp.ne.s32.totalorder %s72, %s73
    %p85 = scmp.eq.s32.totalorder %s16, 3
    %p86 = por %p84, %p85
    %p88 = scmp.ne.s32.totalorder %s73, %s87
    %p89 = scmp.eq.s32.totalorder %s16, 0
    %p90 = por %p88, %p89
    %s92 = sadd.s32 %s91, 1
    %p95 = scmp.eq.s32.totalorder %s10, 3
    %p96 = scmp.ne.s32.totalorder %s91, %s93
    %p97 = scmp.eq.s32.totalorder %s10, 0
    %p98 = por %p96, %p97
    %p99 = scmp.ne.s32.totalorder %s91, %s93
    %p100 = scmp.eq.s32.totalorder %s15, 3
    %p101 = por %p99, %p100
    %p102 = scmp.ne.s32.totalorder %s93, %s94
    %p103 = scmp.eq.s32.totalorder %s15, 0
    %p104 = por %p102, %p103
    %p105 = scmp.ne.s32.totalorder %s93, %s94
    %p106 = scmp.eq.s32.totalorder %s16, 3
    %p107 = por %p105, %p106
    %p109 = scmp.ne.s32.totalorder %s94, %s108
    %p110 = scmp.eq.s32.totalorder %s16, 0
    %p111 = por %p109, %p110
    %s112 = ssub.s32 %s10, %s17
    %p113 = scmp.eq.s32.totalorder %s112, 0
    %s115 = sadd.s32 %s114, 1
    %s116 = scalar_select %p113, %s114, %s115
    %p119 = pneg %p113
    %p120 = scmp.eq.s32.totalorder %s10, 3
    %p121 = por %p119, %p120
    %p122 = scmp.ne.s32.totalorder %s114, %s117
    %p123 = scmp.eq.s32.totalorder %s10, 0
    %p124 = por %p122, %p123
    %p125 = scmp.ne.s32.totalorder %s114, %s117
    %p126 = scmp.eq.s32.totalorder %s15, 3
    %p127 = por %p125, %p126
    %p128 = scmp.ne.s32.totalorder %s117, %s118
    %p129 = scmp.eq.s32.totalorder %s15, 0
    %p130 = por %p128, %p129
    %p131 = scmp.ne.s32.totalorder %s117, %s118
    %p132 = scmp.eq.s32.totalorder %s16, 3
    %p133 = por %p131, %p132
    %p135 = scmp.ne.s32.totalorder %s118, %s134
    %p136 = scmp.eq.s32.totalorder %s16, 0
    %p137 = por %p135, %p136
    %p138 = scmp.le.s32.totalorder 1, %s10
    %p139 = scmp.lt.s32.totalorder %s10, 5
    %p140 = pnand %p138, %p139
    %p141 = pneg %p140
    // Predicated region
    $region9: #{resnet_block_forward.7} parent=5 // pred_check
      _
    $region10: #{resnet_block_forward.7} parent=5 // pred_check_branch
      %143 = sbr.rel (%p140) target = $region12
    $region11: #{resnet_block_forward.7} parent=5 // pred_region
      %s144 = ssub.s32 %s10, 1
      // Predicated region
      $region13: #{resnet_block_forward.7} parent=11 // pred_check
        %p145 = pneg %p83
      $region14: #{resnet_block_forward.7} parent=11 // pred_check_branch
        %147 = sbr.rel (%p145) target = $region16
      $region15: #{resnet_block_forward.7} parent=11 // pred_region
        _
      $region16: #{resnet_block_forward.7} parent=11 // pred_fallthru
        _
      // Predicated region
      $region17: #{resnet_block_forward.7} parent=11 // pred_check
        %p148 = pneg %p104
      $region18: #{resnet_block_forward.7} parent=11 // pred_check_branch
        %150 = sbr.rel (%p148) target = $region20
      $region19: #{resnet_block_forward.7} parent=11 // pred_region
        _
      $region20: #{resnet_block_forward.7} parent=11 // pred_fallthru
        _
    $region12: #{resnet_block_forward.7} parent=5 // pred_fallthru
      _
    %p151 = scmp.lt.s32.totalorder %s10, 4
    // Predicated region
    $region21: #{resnet_block_forward.7} parent=5 // pred_check
      %p152 = pneg %p151
    $region22: #{resnet_block_forward.7} parent=5 // pred_check_branch
      %154 = sbr.rel (%p152) target = $region24
    $region23: #{resnet_block_forward.7} parent=5 // pred_region
      // Predicated region
      $region25: #{resnet_block_forward.7} parent=23 // pred_check
        %p155 = pneg %p30
      $region26: #{resnet_block_forward.7} parent=23 // pred_check_branch
        %157 = sbr.rel (%p155) target = $region28
      $region27: #{resnet_block_forward.7} parent=23 // pred_region
        %s158 = smul.u32 16, %s10
        %p159 = scmp.lt.s32.totalorder %s158, 63
        %s160 = scalar_select %p159, %s158, 63
        %s161 = smul.addr %s160, 4
        %s162 = scalar_lea.vmem %s0, %s161
        %s163 = smul.u32 16, %s10
      $region28: #{resnet_block_forward.7} parent=23 // pred_fallthru
        _
      // Predicated region
      $region29: #{resnet_block_forward.7} parent=23 // pred_check
        %p164 = pneg %p56
      $region30: #{resnet_block_forward.7} parent=23 // pred_check_branch
        %166 = sbr.rel (%p164) target = $region32
      $region31: #{resnet_block_forward.7} parent=23 // pred_region
        %s167 = smul.u32 16, %s10
        %p168 = scmp.lt.s32.totalorder %s167, 63
        %s169 = scalar_select %p168, %s167, 63
        %s170 = smul.addr %s169, 8
        %s171 = scalar_lea.vmem %s1, %s170
        %s172 = smul.u32 16, %s10
      $region32: #{resnet_block_forward.7} parent=23 // pred_fallthru
        _
    $region24: #{resnet_block_forward.7} parent=5 // pred_fallthru
      _
    %p173 = scmp.le.s32.totalorder 1, %s10
    %p174 = scmp.lt.s32.totalorder %s10, 5
    %p175 = pnand %p173, %p174
    %p176 = pneg %p175
    // Predicated region
    $region33: #{resnet_block_forward.7} parent=5 // pred_check
      _
    $region34: #{resnet_block_forward.7} parent=5 // pred_check_branch
      %178 = sbr.rel (%p175) target = $region36
    $region35: #{resnet_block_forward.7} parent=5 // pred_region
      %s179 = ssub.s32 %s10, 1
      %s180 = smul.u32 16, %s15
      %p181 = scmp.lt.s32.totalorder %s180, 63
      %s182 = scalar_select %p181, %s180, 63
      %s183 = smul.addr %s182, 4
      %s184 = scalar_lea.vmem %s0, %s183
      %p185 = pneg %p36
      %p186 = pneg %p33
      %s187 = smul.u32 16, %s15
      %p188 = scmp.lt.s32.totalorder %s187, 63
      %s189 = scalar_select %p188, %s187, 63
      %s190 = smul.addr %s189, 8
      %s191 = scalar_lea.vmem %s1, %s190
      %p192 = pneg %p62
      %p193 = pneg %p59
      %p194 = pneg %p83
      %p195 = pneg %p80
      %p196 = pneg %p104
      %p197 = pneg %p101
      %p198 = pneg %p130
      %p199 = pneg %p127
      %s200 = smul.u32 16, %s15
      %p201 = scmp.lt.s32.totalorder %s200, 63
      %s202 = scalar_select %p201, %s200, 63
      %s203 = smul.addr %s202, 8
      %s204 = scalar_lea.vmem %s4, %s203
      %s205 = smul.u32 16, %s15
      %p206 = scmp.lt.s32.totalorder %s205, 63
      %s207 = scalar_select %p206, %s205, 63
      %s208 = smul.addr %s207, 4
      %s209 = scalar_lea.vmem %s0, %s208
      %s210 = smul.u32 16, %s15
      %s211 = smul.u32 16, %s15
      %p212 = scmp.lt.s32.totalorder %s211, 63
      %s213 = scalar_select %p212, %s211, 63
      %s214 = smul.addr %s213, 8
      %s215 = scalar_lea.vmem %s1, %s214
      %s216 = smul.u32 16, %s15
      %s217 = smul.u32 16, %s15
      %p218 = scmp.lt.s32.totalorder %s217, 63
      %s219 = scalar_select %p218, %s217, 63
      %s220 = smul.addr %s219, 8
      %s221 = scalar_lea.vmem %s4, %s220
      %s222 = smul.u32 16, %s15
      %v223 = vld [vmem:[%s209] sm:$0xf]
      %v224 = vld [vmem:[%s209 + $0x4] sm:$0xf]
      %v225 = vld [vmem:[%s209 + $0x8] sm:$0xf]
      %v226 = vld [vmem:[%s209 + $0xc] sm:$0xf]
      %v227 = vld [vmem:[%s209 + $0x10] sm:$0xf]
      %v228 = vld [vmem:[%s209 + $0x14] sm:$0xf]
      %v229 = vld [vmem:[%s209 + $0x18] sm:$0xf]
      %v230 = vld [vmem:[%s209 + $0x1c] sm:$0xf]
      %v231 = vld [vmem:[%s209 + $0x20] sm:$0xf]
      %v232 = vld [vmem:[%s209 + $0x24] sm:$0xf]
      %v233 = vld [vmem:[%s209 + $0x28] sm:$0xf]
      %v234 = vld [vmem:[%s209 + $0x2c] sm:$0xf]
      %v235 = vld [vmem:[%s209 + $0x30] sm:$0xf]
      %v236 = vld [vmem:[%s209 + $0x34] sm:$0xf]
      %v237 = vld [vmem:[%s209 + $0x38] sm:$0xf]
      %v238 = vld [vmem:[%s209 + $0x3c] sm:$0xf]
      %v239 = vunpack.c.l.bf16 %v223
      %v240 = vunpack.c.l.bf16 %v224
      %v241 = vunpack.c.l.bf16 %v225
      %v242 = vunpack.c.l.bf16 %v226
      %v243 = vunpack.c.l.bf16 %v227
      %v244 = vunpack.c.l.bf16 %v228
      %v245 = vunpack.c.l.bf16 %v229
      %v246 = vunpack.c.l.bf16 %v230
      %v247 = vunpack.c.l.bf16 %v231
      %v248 = vunpack.c.l.bf16 %v232
      %v249 = vunpack.c.l.bf16 %v233
      %v250 = vunpack.c.l.bf16 %v234
      %v251 = vunpack.c.l.bf16 %v235
      %v252 = vunpack.c.l.bf16 %v236
      %v253 = vunpack.c.l.bf16 %v237
      %v254 = vunpack.c.l.bf16 %v238
      %v255 = vld [vmem:[%s2] sm:$0x1]
      %v257 = vlaneseq
      %v258 = vshrl.u32 %v257, 7
      %v259 = vsub.s32 0, %v258
      %v260 = vrot.slane %v255, %v259
      %v262 = vmul.f32 %v239, %v260
      %v263 = vmul.f32 %v240, %v260
      %v264 = vmul.f32 %v241, %v260
      %v265 = vmul.f32 %v242, %v260
      %v266 = vmul.f32 %v243, %v260
      %v267 = vmul.f32 %v244, %v260
      %v268 = vmul.f32 %v245, %v260
      %v269 = vmul.f32 %v246, %v260
      %v270 = vmul.f32 %v247, %v260
      %v271 = vmul.f32 %v248, %v260
      %v272 = vmul.f32 %v249, %v260
      %v273 = vmul.f32 %v250, %v260
      %v274 = vmul.f32 %v251, %v260
      %v275 = vmul.f32 %v252, %v260
      %v276 = vmul.f32 %v253, %v260
      %v277 = vmul.f32 %v254, %v260
      %v278 = vld [vmem:[%s3] sm:$0x1]
      %v280 = vlaneseq
      %v281 = vshrl.u32 %v280, 7
      %v282 = vsub.s32 0, %v281
      %v283 = vrot.slane %v278, %v282
      %v285 = vadd.f32 %v262, %v283
      %v286 = vadd.f32 %v263, %v283
      %v287 = vadd.f32 %v264, %v283
      %v288 = vadd.f32 %v265, %v283
      %v289 = vadd.f32 %v266, %v283
      %v290 = vadd.f32 %v267, %v283
      %v291 = vadd.f32 %v268, %v283
      %v292 = vadd.f32 %v269, %v283
      %v293 = vadd.f32 %v270, %v283
      %v294 = vadd.f32 %v271, %v283
      %v295 = vadd.f32 %v272, %v283
      %v296 = vadd.f32 %v273, %v283
      %v297 = vadd.f32 %v274, %v283
      %v298 = vadd.f32 %v275, %v283
      %v299 = vadd.f32 %v276, %v283
      %v300 = vadd.f32 %v277, %v283
      %v301 = vld [vmem:[%s215] sm:$0xff]
      %v302 = vld [vmem:[%s215 + $0x8] sm:$0xff]
      %v303 = vld [vmem:[%s215 + $0x10] sm:$0xff]
      %v304 = vld [vmem:[%s215 + $0x18] sm:$0xff]
      %v305 = vld [vmem:[%s215 + $0x20] sm:$0xff]
      %v306 = vld [vmem:[%s215 + $0x28] sm:$0xff]
      %v307 = vld [vmem:[%s215 + $0x30] sm:$0xff]
      %v308 = vld [vmem:[%s215 + $0x38] sm:$0xff]
      %v309 = vld [vmem:[%s215 + $0x40] sm:$0xff]
      %v310 = vld [vmem:[%s215 + $0x48] sm:$0xff]
      %v311 = vld [vmem:[%s215 + $0x50] sm:$0xff]
      %v312 = vld [vmem:[%s215 + $0x58] sm:$0xff]
      %v313 = vld [vmem:[%s215 + $0x60] sm:$0xff]
      %v314 = vld [vmem:[%s215 + $0x68] sm:$0xff]
      %v315 = vld [vmem:[%s215 + $0x70] sm:$0xff]
      %v316 = vld [vmem:[%s215 + $0x78] sm:$0xff]
      %v317 = vadd.f32 %v285, %v301
      %v318 = vadd.f32 %v286, %v302
      %v319 = vadd.f32 %v287, %v303
      %v320 = vadd.f32 %v288, %v304
      %v321 = vadd.f32 %v289, %v305
      %v322 = vadd.f32 %v290, %v306
      %v323 = vadd.f32 %v291, %v307
      %v324 = vadd.f32 %v292, %v308
      %v325 = vadd.f32 %v293, %v309
      %v326 = vadd.f32 %v294, %v310
      %v327 = vadd.f32 %v295, %v311
      %v328 = vadd.f32 %v296, %v312
      %v329 = vadd.f32 %v297, %v313
      %v330 = vadd.f32 %v298, %v314
      %v331 = vadd.f32 %v299, %v315
      %v332 = vadd.f32 %v300, %v316
      %v333 = vmax.f32 %v317, 0.0
      %v334 = vmax.f32 %v318, 0.0
      %v335 = vmax.f32 %v319, 0.0
      %v336 = vmax.f32 %v320, 0.0
      %v337 = vmax.f32 %v321, 0.0
      %v338 = vmax.f32 %v322, 0.0
      %v339 = vmax.f32 %v323, 0.0
      %v340 = vmax.f32 %v324, 0.0
      %v341 = vmax.f32 %v325, 0.0
      %v342 = vmax.f32 %v326, 0.0
      %v343 = vmax.f32 %v327, 0.0
      %v344 = vmax.f32 %v328, 0.0
      %v345 = vmax.f32 %v329, 0.0
      %v346 = vmax.f32 %v330, 0.0
      %v347 = vmax.f32 %v331, 0.0
      %v348 = vmax.f32 %v332, 0.0
      %vm349 = vcmask 130048
      %350 = vst.msk [vmem:[%s221] sm:$0xff] %vm349, %v333
      %351 = vst.msk [vmem:[%s221 + $0x8] sm:$0xff] %vm349, %v334
      %352 = vst.msk [vmem:[%s221 + $0x10] sm:$0xff] %vm349, %v335
      %353 = vst.msk [vmem:[%s221 + $0x18] sm:$0xff] %vm349, %v336
      %354 = vst.msk [vmem:[%s221 + $0x20] sm:$0xff] %vm349, %v337
      %355 = vst.msk [vmem:[%s221 + $0x28] sm:$0xff] %vm349, %v338
      %356 = vst.msk [vmem:[%s221 + $0x30] sm:$0xff] %vm349, %v339
      %357 = vst.msk [vmem:[%s221 + $0x38] sm:$0xff] %vm349, %v340
      %358 = vst.msk [vmem:[%s221 + $0x40] sm:$0xff] %vm349, %v341
      %359 = vst.msk [vmem:[%s221 + $0x48] sm:$0xff] %vm349, %v342
      %360 = vst.msk [vmem:[%s221 + $0x50] sm:$0xff] %vm349, %v343
      %361 = vst.msk [vmem:[%s221 + $0x58] sm:$0xff] %vm349, %v344
      %362 = vst.msk [vmem:[%s221 + $0x60] sm:$0xff] %vm349, %v345
      %363 = vst.msk [vmem:[%s221 + $0x68] sm:$0xff] %vm349, %v346
      %364 = vst.msk [vmem:[%s221 + $0x70] sm:$0xff] %vm349, %v347
      %365 = vst.msk [vmem:[%s221 + $0x78] sm:$0xff] %vm349, %v348
      %s366 = smul.u32 16, %s15
      %p367 = scmp.lt.s32.totalorder %s366, 63
      %s368 = scalar_select %p367, %s366, 63
      %s369 = smul.addr %s368, 8
      %s370 = scalar_lea.vmem %s4, %s369
      // Predicated region
      $region37: #{resnet_block_forward.7} parent=35 // pred_check
        %p371 = pneg %p127
      $region38: #{resnet_block_forward.7} parent=35 // pred_check_branch
        %373 = sbr.rel (%p371) target = $region40
      $region39: #{resnet_block_forward.7} parent=35 // pred_region
        %s374 = smul.u32 16, %s15
      $region40: #{resnet_block_forward.7} parent=35 // pred_fallthru
        _
    $region36: #{resnet_block_forward.7} parent=5 // pred_fallthru
      _
    %p375 = scmp.le.s32.totalorder 2, %s10
    // Predicated region
    $region41: #{resnet_block_forward.7} parent=5 // pred_check
      %p376 = pneg %p375
    $region42: #{resnet_block_forward.7} parent=5 // pred_check_branch
      %378 = sbr.rel (%p376) target = $region44
    $region43: #{resnet_block_forward.7} parent=5 // pred_region
      %s379 = ssub.s32 %s10, 2
      // Predicated region
      $region45: #{resnet_block_forward.7} parent=43 // pred_check
        %p380 = pneg %p133
      $region46: #{resnet_block_forward.7} parent=43 // pred_check_branch
        %382 = sbr.rel (%p380) target = $region48
      $region47: #{resnet_block_forward.7} parent=43 // pred_region
        %s383 = smul.u32 16, %s16
        %p384 = scmp.lt.s32.totalorder %s383, 63
        %s385 = scalar_select %p384, %s383, 63
        %s386 = smul.addr %s385, 8
        %s387 = scalar_lea.vmem %s4, %s386
      $region48: #{resnet_block_forward.7} parent=43 // pred_fallthru
        _
    $region44: #{resnet_block_forward.7} parent=5 // pred_fallthru
      _
  $region6: #{resnet_block_forward.7} parent=0 // loop_footer
    %s14 = sadd.s32 1, %s10
  $region7: #{resnet_block_forward.7} parent=0 // loop_footer_branch
    %9 = sbr.rel target = $region3
  $region8: #{resnet_block_forward.7} parent=0 // loop_exit
    _

// kernel: resnet_block_forward.5
$region0: #{resnet_block_forward.5}
  #allocation0 [shape = 'u32[]', space=smem, size = 0x4, offset = 0x4, fixed_abs, tag = 'smem constant byte address 0x4 - core index']
  #allocation1 [shape = 'u32[144,128]{1,0:T(1,128)}', space=vmem, size = 0x12000, scoped, tag = 'internal scratch']
  #allocation2 [shape = 'bf16[304,4]{1,0:T(16,128)(2,1)}', space=vmem, size = 0x13000, scoped, tag = 'scratch operand']
  %s0 = inlined_call_operand.vmem [shape: bf16[2,256,4], index: 0, kind: input, shape index: {}]
  %s1 = inlined_call_operand.vmem [shape: f32[1,4], index: 1, kind: input, shape index: {}]
  %s2 = inlined_call_operand.vmem [shape: f32[1,4], index: 2, kind: input, shape index: {}]
  %s3 = inlined_call_operand.vmem [shape: bf16[9,4,4], index: 3, kind: input, shape index: {}]
  %s4 = inlined_call_operand.vmem [shape: bf16[2,256,4], index: 4, kind: output, shape index: {0}]
  %s5 = inlined_call_operand.vmem [shape: f32[2,1,4], index: 5, kind: output, shape index: {1}]
  %s6 = inlined_call_operand.vmem [shape: f32[2,1,4], index: 6, kind: output, shape index: {2}]
  %7 = xla_tuple %s4, %s5, %s6
  %s8 = sld [smem:[#allocation0]]
  $region65: #{resnet_block_forward.5} parent=0
    _
  %s10 = ssub.s32 1, %s8
  %s11 = scalar_select 0, %s10, %s8
  loop: start=0, step=1, limit=4
  $region2: #{resnet_block_forward.5} parent=0 // loop_pre_header
    _
  $region3: #{resnet_block_forward.5} parent=0 // loop_header
    %s13 = sphi 0, %s17
    %p14 = scmp.ge.s32.totalorder %s13, 4
    %s23 = sphi 0, %s25
    %s26 = sphi 0, %s23
    %s27 = sphi 0, %s26
    %s43 = sphi 0, %s27
    %s47 = sphi 0, %s47
    %s49 = sphi 0, %s47
    %s50 = sphi 0, %s49
    %s64 = sphi 0, %s50
    %s68 = sphi 0, %s68
    %s70 = sphi 0, %s68
    %s71 = sphi 0, %s70
    %s85 = sphi 0, %s71
    %s89 = sphi 0, %s89
    %s91 = sphi 0, %s89
    %s92 = sphi 0, %s91
    %s106 = sphi 0, %s92
    %s112 = sphi 0, %s114
    %s115 = sphi 0, %s112
    %s116 = sphi 0, %s115
    %s132 = sphi 0, %s116
    %s138 = sphi 0, %s140
    %s141 = sphi 0, %s138
    %s142 = sphi 0, %s141
    %s158 = sphi 0, %s142
    %s164 = sphi 0, %s166
    %s167 = sphi 0, %s164
    %s168 = sphi 0, %s167
    %s184 = sphi 0, %s168
  $region4: #{resnet_block_forward.5} parent=0 // loop_header_branch
    %16 = sbr.rel (%p14) target = $region8
  $region5: #{resnet_block_forward.5} parent=0 // loop_body
    %s18 = ssub.s32 %s13, 1
    %s19 = ssub.s32 %s13, 2
    %s20 = sadd.s32 %s13, 1
    %s21 = ssub.s32 %s13, %s20
    %p22 = scmp.eq.s32.totalorder %s21, 0
    %s24 = sadd.s32 %s23, 1
    %s25 = scalar_select %p22, %s23, %s24
    %p28 = pneg %p22
    %p29 = scmp.eq.s32.totalorder %s13, 1
    %p30 = por %p28, %p29
    %p31 = scmp.ne.s32.totalorder %s23, %s26
    %p32 = scmp.eq.s32.totalorder %s13, 0
    %p33 = por %p31, %p32
    %p34 = scmp.ne.s32.totalorder %s23, %s26
    %p35 = scmp.eq.s32.totalorder %s18, 1
    %p36 = por %p34, %p35
    %p37 = scmp.ne.s32.totalorder %s26, %s27
    %p38 = scmp.eq.s32.totalorder %s18, 0
    %p39 = por %p37, %p38
    %p40 = scmp.ne.s32.totalorder %s26, %s27
    %p41 = scmp.eq.s32.totalorder %s19, 1
    %p42 = por %p40, %p41
    %p44 = scmp.ne.s32.totalorder %s27, %s43
    %p45 = scmp.eq.s32.totalorder %s19, 0
    %p46 = por %p44, %p45
    %s48 = sadd.s32 %s47, 1
    %p51 = scmp.eq.s32.totalorder %s13, 1
    %p52 = scmp.ne.s32.totalorder %s47, %s49
    %p53 = scmp.eq.s32.totalorder %s13, 0
    %p54 = por %p52, %p53
    %p55 = scmp.ne.s32.totalorder %s47, %s49
    %p56 = scmp.eq.s32.totalorder %s18, 1
    %p57 = por %p55, %p56
    %p58 = scmp.ne.s32.totalorder %s49, %s50
    %p59 = scmp.eq.s32.totalorder %s18, 0
    %p60 = por %p58, %p59
    %p61 = scmp.ne.s32.totalorder %s49, %s50
    %p62 = scmp.eq.s32.totalorder %s19, 1
    %p63 = por %p61, %p62
    %p65 = scmp.ne.s32.totalorder %s50, %s64
    %p66 = scmp.eq.s32.totalorder %s19, 0
    %p67 = por %p65, %p66
    %s69 = sadd.s32 %s68, 1
    %p72 = scmp.eq.s32.totalorder %s13, 1
    %p73 = scmp.ne.s32.totalorder %s68, %s70
    %p74 = scmp.eq.s32.totalorder %s13, 0
    %p75 = por %p73, %p74
    %p76 = scmp.ne.s32.totalorder %s68, %s70
    %p77 = scmp.eq.s32.totalorder %s18, 1
    %p78 = por %p76, %p77
    %p79 = scmp.ne.s32.totalorder %s70, %s71
    %p80 = scmp.eq.s32.totalorder %s18, 0
    %p81 = por %p79, %p80
    %p82 = scmp.ne.s32.totalorder %s70, %s71
    %p83 = scmp.eq.s32.totalorder %s19, 1
    %p84 = por %p82, %p83
    %p86 = scmp.ne.s32.totalorder %s71, %s85
    %p87 = scmp.eq.s32.totalorder %s19, 0
    %p88 = por %p86, %p87
    %s90 = sadd.s32 %s89, 1
    %p93 = scmp.eq.s32.totalorder %s13, 1
    %p94 = scmp.ne.s32.totalorder %s89, %s91
    %p95 = scmp.eq.s32.totalorder %s13, 0
    %p96 = por %p94, %p95
    %p97 = scmp.ne.s32.totalorder %s89, %s91
    %p98 = scmp.eq.s32.totalorder %s18, 1
    %p99 = por %p97, %p98
    %p100 = scmp.ne.s32.totalorder %s91, %s92
    %p101 = scmp.eq.s32.totalorder %s18, 0
    %p102 = por %p100, %p101
    %p103 = scmp.ne.s32.totalorder %s91, %s92
    %p104 = scmp.eq.s32.totalorder %s19, 1
    %p105 = por %p103, %p104
    %p107 = scmp.ne.s32.totalorder %s92, %s106
    %p108 = scmp.eq.s32.totalorder %s19, 0
    %p109 = por %p107, %p108
    %s110 = ssub.s32 %s13, %s20
    %p111 = scmp.eq.s32.totalorder %s110, 0
    %s113 = sadd.s32 %s112, 1
    %s114 = scalar_select %p111, %s112, %s113
    %p117 = pneg %p111
    %p118 = scmp.eq.s32.totalorder %s13, 1
    %p119 = por %p117, %p118
    %p120 = scmp.ne.s32.totalorder %s112, %s115
    %p121 = scmp.eq.s32.totalorder %s13, 0
    %p122 = por %p120, %p121
    %p123 = scmp.ne.s32.totalorder %s112, %s115
    %p124 = scmp.eq.s32.totalorder %s18, 1
    %p125 = por %p123, %p124
    %p126 = scmp.ne.s32.totalorder %s115, %s116
    %p127 = scmp.eq.s32.totalorder %s18, 0
    %p128 = por %p126, %p127
    %p129 = scmp.ne.s32.totalorder %s115, %s116
    %p130 = scmp.eq.s32.totalorder %s19, 1
    %p131 = por %p129, %p130
    %p133 = scmp.ne.s32.totalorder %s116, %s132
    %p134 = scmp.eq.s32.totalorder %s19, 0
    %p135 = por %p133, %p134
    %s136 = ssub.s32 %s13, %s20
    %p137 = scmp.eq.s32.totalorder %s136, 0
    %s139 = sadd.s32 %s138, 1
    %s140 = scalar_select %p137, %s138, %s139
    %p143 = pneg %p137
    %p144 = scmp.eq.s32.totalorder %s13, 1
    %p145 = por %p143, %p144
    %p146 = scmp.ne.s32.totalorder %s138, %s141
    %p147 = scmp.eq.s32.totalorder %s13, 0
    %p148 = por %p146, %p147
    %p149 = scmp.ne.s32.totalorder %s138, %s141
    %p150 = scmp.eq.s32.totalorder %s18, 1
    %p151 = por %p149, %p150
    %p152 = scmp.ne.s32.totalorder %s141, %s142
    %p153 = scmp.eq.s32.totalorder %s18, 0
    %p154 = por %p152, %p153
    %p155 = scmp.ne.s32.totalorder %s141, %s142
    %p156 = scmp.eq.s32.totalorder %s19, 1
    %p157 = por %p155, %p156
    %p159 = scmp.ne.s32.totalorder %s142, %s158
    %p160 = scmp.eq.s32.totalorder %s19, 0
    %p161 = por %p159, %p160
    %s162 = ssub.s32 %s13, %s20
    %p163 = scmp.eq.s32.totalorder %s162, 0
    %s165 = sadd.s32 %s164, 1
    %s166 = scalar_select %p163, %s164, %s165
    %p169 = pneg %p163
    %p170 = scmp.eq.s32.totalorder %s13, 1
    %p171 = por %p169, %p170
    %p172 = scmp.ne.s32.totalorder %s164, %s167
    %p173 = scmp.eq.s32.totalorder %s13, 0
    %p174 = por %p172, %p173
    %p175 = scmp.ne.s32.totalorder %s164, %s167
    %p176 = scmp.eq.s32.totalorder %s18, 1
    %p177 = por %p175, %p176
    %p178 = scmp.ne.s32.totalorder %s167, %s168
    %p179 = scmp.eq.s32.totalorder %s18, 0
    %p180 = por %p178, %p179
    %p181 = scmp.ne.s32.totalorder %s167, %s168
    %p182 = scmp.eq.s32.totalorder %s19, 1
    %p183 = por %p181, %p182
    %p185 = scmp.ne.s32.totalorder %s168, %s184
    %p186 = scmp.eq.s32.totalorder %s19, 0
    %p187 = por %p185, %p186
    %p188 = scmp.le.s32.totalorder 1, %s13
    %p189 = scmp.lt.s32.totalorder %s13, 3
    %p190 = pnand %p188, %p189
    %p191 = pneg %p190
    // Predicated region
    $region9: #{resnet_block_forward.5} parent=5 // pred_check
      _
    $region10: #{resnet_block_forward.5} parent=5 // pred_check_branch
      %193 = sbr.rel (%p190) target = $region12
    $region11: #{resnet_block_forward.5} parent=5 // pred_region
      %s194 = ssub.s32 %s13, 1
      // Predicated region
      $region13: #{resnet_block_forward.5} parent=11 // pred_check
        %p195 = pneg %p60
      $region14: #{resnet_block_forward.5} parent=11 // pred_check_branch
        %197 = sbr.rel (%p195) target = $region16
      $region15: #{resnet_block_forward.5} parent=11 // pred_region
        _
      $region16: #{resnet_block_forward.5} parent=11 // pred_fallthru
        _
      // Predicated region
      $region17: #{resnet_block_forward.5} parent=11 // pred_check
        %p198 = pneg %p81
      $region18: #{resnet_block_forward.5} parent=11 // pred_check_branch
        %200 = sbr.rel (%p198) target = $region20
      $region19: #{resnet_block_forward.5} parent=11 // pred_region
        _
      $region20: #{resnet_block_forward.5} parent=11 // pred_fallthru
        _
      // Predicated region
      $region21: #{resnet_block_forward.5} parent=11 // pred_check
        %p201 = pneg %p102
      $region22: #{resnet_block_forward.5} parent=11 // pred_check_branch
        %203 = sbr.rel (%p201) target = $region24
      $region23: #{resnet_block_forward.5} parent=11 // pred_region
        _
      $region24: #{resnet_block_forward.5} parent=11 // pred_fallthru
        _
    $region12: #{resnet_block_forward.5} parent=5 // pred_fallthru
      _
    %p204 = scmp.lt.s32.totalorder %s13, 2
    // Predicated region
    $region25: #{resnet_block_forward.5} parent=5 // pred_check
      %p205 = pneg %p204
    $region26: #{resnet_block_forward.5} parent=5 // pred_check_branch
      %207 = sbr.rel (%p205) target = $region28
    $region27: #{resnet_block_forward.5} parent=5 // pred_region
      // Predicated region
      $region29: #{resnet_block_forward.5} parent=27 // pred_check
        %p208 = pneg %p33
      $region30: #{resnet_block_forward.5} parent=27 // pred_check_branch
        %210 = sbr.rel (%p208) target = $region32
      $region31: #{resnet_block_forward.5} parent=27 // pred_region
        %p211 = scmp.lt.s32.totalorder %s13, 1
        %s212 = scalar_select %p211, %s13, 1
        %s213 = smul.addr %s212, 32
        %s214 = smul.addr %s213, 4
        %s215 = scalar_lea.vmem %s0, %s214
      $region32: #{resnet_block_forward.5} parent=27 // pred_fallthru
        _
    $region28: #{resnet_block_forward.5} parent=5 // pred_fallthru
      _
    %p216 = scmp.le.s32.totalorder 1, %s13
    %p217 = scmp.lt.s32.totalorder %s13, 3
    %p218 = pnand %p216, %p217
    %p219 = pneg %p218
    // Predicated region
    $region33: #{resnet_block_forward.5} parent=5 // pred_check
      _
    $region34: #{resnet_block_forward.5} parent=5 // pred_check_branch
      %221 = sbr.rel (%p218) target = $region36
    $region35: #{resnet_block_forward.5} parent=5 // pred_region
      %s222 = ssub.s32 %s13, 1
      %p223 = scmp.lt.s32.totalorder %s18, 1
      %s224 = scalar_select %p223, %s18, 1
      %s225 = smul.addr %s224, 32
      %s226 = smul.addr %s225, 4
      %s227 = scalar_lea.vmem %s0, %s226
      %p228 = pneg %p39
      %p229 = pneg %p36
      %p230 = pneg %p60
      %p231 = pneg %p57
      %p232 = pneg %p81
      %p233 = pneg %p78
      %p234 = pneg %p102
      %p235 = pneg %p99
      %p236 = pneg %p128
      %p237 = pneg %p125
      %p238 = scmp.lt.s32.totalorder %s18, 1
      %s239 = scalar_select %p238, %s18, 1
      %s240 = smul.addr %s239, 32
      %s241 = smul.addr %s240, 4
      %s242 = scalar_lea.vmem %s4, %s241
      %p243 = pneg %p154
      %p244 = pneg %p151
      %p245 = scmp.lt.s32.totalorder %s18, 1
      %s246 = scalar_select %p245, %s18, 1
      %s247 = scalar_lea.vmem %s5, %s246
      %p248 = pneg %p180
      %p249 = pneg %p177
      %p250 = scmp.lt.s32.totalorder %s18, 1
      %s251 = scalar_select %p250, %s18, 1
      %s252 = scalar_lea.vmem %s6, %s251
      %p253 = scmp.lt.s32.totalorder %s18, 1
      %s254 = scalar_select %p253, %s18, 1
      %s255 = smul.addr %s254, 32
      %s256 = smul.addr %s255, 4
      %s257 = scalar_lea.vmem %s0, %s256
      %p258 = scmp.lt.s32.totalorder %s18, 1
      %s259 = scalar_select %p258, %s18, 1
      %s260 = smul.addr %s259, 32
      %s261 = smul.addr %s260, 4
      %s262 = scalar_lea.vmem %s4, %s261
      %p263 = scmp.lt.s32.totalorder %s18, 1
      %s264 = scalar_select %p263, %s18, 1
      %s265 = scalar_lea.vmem %s5, %s264
      %p266 = scmp.lt.s32.totalorder %s18, 1
      %s267 = scalar_select %p266, %s18, 1
      %s268 = scalar_lea.vmem %s6, %s267
      %v270 = vld [vmem:[%s257] sm:$0xf]
      %v271 = vld [vmem:[%s257 + $0x4] sm:$0xf]
      %v272 = vld [vmem:[%s257 + $0x8] sm:$0xf]
      %v273 = vld [vmem:[%s257 + $0xc] sm:$0xf]
      %v274 = vld [vmem:[%s257 + $0x10] sm:$0xf]
      %v275 = vld [vmem:[%s257 + $0x14] sm:$0xf]
      %v276 = vld [vmem:[%s257 + $0x18] sm:$0xf]
      %v277 = vld [vmem:[%s257 + $0x1c] sm:$0xf]
      %v278 = vld [vmem:[%s257 + $0x20] sm:$0xf]
      %v279 = vld [vmem:[%s257 + $0x24] sm:$0xf]
      %v280 = vld [vmem:[%s257 + $0x28] sm:$0xf]
      %v281 = vld [vmem:[%s257 + $0x2c] sm:$0xf]
      %v282 = vld [vmem:[%s257 + $0x30] sm:$0xf]
      %v283 = vld [vmem:[%s257 + $0x34] sm:$0xf]
      %v284 = vld [vmem:[%s257 + $0x38] sm:$0xf]
      %v285 = vld [vmem:[%s257 + $0x3c] sm:$0xf]
      %v286 = vld [vmem:[%s257 + $0x40] sm:$0xf]
      %v287 = vld [vmem:[%s257 + $0x44] sm:$0xf]
      %v288 = vld [vmem:[%s257 + $0x48] sm:$0xf]
      %v289 = vld [vmem:[%s257 + $0x4c] sm:$0xf]
      %v290 = vld [vmem:[%s257 + $0x50] sm:$0xf]
      %v291 = vld [vmem:[%s257 + $0x54] sm:$0xf]
      %v292 = vld [vmem:[%s257 + $0x58] sm:$0xf]
      %v293 = vld [vmem:[%s257 + $0x5c] sm:$0xf]
      %v294 = vld [vmem:[%s257 + $0x60] sm:$0xf]
      %v295 = vld [vmem:[%s257 + $0x64] sm:$0xf]
      %v296 = vld [vmem:[%s257 + $0x68] sm:$0xf]
      %v297 = vld [vmem:[%s257 + $0x6c] sm:$0xf]
      %v298 = vld [vmem:[%s257 + $0x70] sm:$0xf]
      %v299 = vld [vmem:[%s257 + $0x74] sm:$0xf]
      %v300 = vld [vmem:[%s257 + $0x78] sm:$0xf]
      %v301 = vld [vmem:[%s257 + $0x7c] sm:$0xf]
      %v302 = vunpack.c.l.bf16 %v270
      %v303 = vunpack.c.l.bf16 %v271
      %v304 = vunpack.c.l.bf16 %v272
      %v305 = vunpack.c.l.bf16 %v273
      %v306 = vunpack.c.l.bf16 %v274
      %v307 = vunpack.c.l.bf16 %v275
      %v308 = vunpack.c.l.bf16 %v276
      %v309 = vunpack.c.l.bf16 %v277
      %v310 = vunpack.c.l.bf16 %v278
      %v311 = vunpack.c.l.bf16 %v279
      %v312 = vunpack.c.l.bf16 %v280
      %v313 = vunpack.c.l.bf16 %v281
      %v314 = vunpack.c.l.bf16 %v282
      %v315 = vunpack.c.l.bf16 %v283
      %v316 = vunpack.c.l.bf16 %v284
      %v317 = vunpack.c.l.bf16 %v285
      %v318 = vunpack.c.l.bf16 %v286
      %v319 = vunpack.c.l.bf16 %v287
      %v320 = vunpack.c.l.bf16 %v288
      %v321 = vunpack.c.l.bf16 %v289
      %v322 = vunpack.c.l.bf16 %v290
      %v323 = vunpack.c.l.bf16 %v291
      %v324 = vunpack.c.l.bf16 %v292
      %v325 = vunpack.c.l.bf16 %v293
      %v326 = vunpack.c.l.bf16 %v294
      %v327 = vunpack.c.l.bf16 %v295
      %v328 = vunpack.c.l.bf16 %v296
      %v329 = vunpack.c.l.bf16 %v297
      %v330 = vunpack.c.l.bf16 %v298
      %v331 = vunpack.c.l.bf16 %v299
      %v332 = vunpack.c.l.bf16 %v300
      %v333 = vunpack.c.l.bf16 %v301
      %v334 = vld [vmem:[%s1] sm:$0x1]
      %v336 = vlaneseq
      %v337 = vshrl.u32 %v336, 7
      %v338 = vsub.s32 0, %v337
      %v339 = vrot.slane %v334, %v338
      %v341 = vmul.f32 %v302, %v339
      %v342 = vmul.f32 %v303, %v339
      %v343 = vmul.f32 %v304, %v339
      %v344 = vmul.f32 %v305, %v339
      %v345 = vmul.f32 %v306, %v339
      %v346 = vmul.f32 %v307, %v339
      %v347 = vmul.f32 %v308, %v339
      %v348 = vmul.f32 %v309, %v339
      %v349 = vmul.f32 %v310, %v339
      %v350 = vmul.f32 %v311, %v339
      %v351 = vmul.f32 %v312, %v339
      %v352 = vmul.f32 %v313, %v339
      %v353 = vmul.f32 %v314, %v339
      %v354 = vmul.f32 %v315, %v339
      %v355 = vmul.f32 %v316, %v339
      %v356 = vmul.f32 %v317, %v339
      %v357 = vmul.f32 %v318, %v339
      %v358 = vmul.f32 %v319, %v339
      %v359 = vmul.f32 %v320, %v339
      %v360 = vmul.f32 %v321, %v339
      %v361 = vmul.f32 %v322, %v339
      %v362 = vmul.f32 %v323, %v339
      %v363 = vmul.f32 %v324, %v339
      %v364 = vmul.f32 %v325, %v339
      %v365 = vmul.f32 %v326, %v339
      %v366 = vmul.f32 %v327, %v339
      %v367 = vmul.f32 %v328, %v339
      %v368 = vmul.f32 %v329, %v339
      %v369 = vmul.f32 %v330, %v339
      %v370 = vmul.f32 %v331, %v339
      %v371 = vmul.f32 %v332, %v339
      %v372 = vmul.f32 %v333, %v339
      %v373 = vld [vmem:[%s2] sm:$0x1]
      %v375 = vlaneseq
      %v376 = vshrl.u32 %v375, 7
      %v377 = vsub.s32 0, %v376
      %v378 = vrot.slane %v373, %v377
      %v380 = vadd.f32 %v341, %v378
      %v381 = vadd.f32 %v342, %v378
      %v382 = vadd.f32 %v343, %v378
      %v383 = vadd.f32 %v344, %v378
      %v384 = vadd.f32 %v345, %v378
      %v385 = vadd.f32 %v346, %v378
      %v386 = vadd.f32 %v347, %v378
      %v387 = vadd.f32 %v348, %v378
      %v388 = vadd.f32 %v349, %v378
      %v389 = vadd.f32 %v350, %v378
      %v390 = vadd.f32 %v351, %v378
      %v391 = vadd.f32 %v352, %v378
      %v392 = vadd.f32 %v353, %v378
      %v393 = vadd.f32 %v354, %v378
      %v394 = vadd.f32 %v355, %v378
      %v395 = vadd.f32 %v356, %v378
      %v396 = vadd.f32 %v357, %v378
      %v397 = vadd.f32 %v358, %v378
      %v398 = vadd.f32 %v359, %v378
      %v399 = vadd.f32 %v360, %v378
      %v400 = vadd.f32 %v361, %v378
      %v401 = vadd.f32 %v362, %v378
      %v402 = vadd.f32 %v363, %v378
      %v403 = vadd.f32 %v364, %v378
      %v404 = vadd.f32 %v365, %v378
      %v405 = vadd.f32 %v366, %v378
      %v406 = vadd.f32 %v367, %v378
      %v407 = vadd.f32 %v368, %v378
      %v408 = vadd.f32 %v369, %v378
      %v409 = vadd.f32 %v370, %v378
      %v410 = vadd.f32 %v371, %v378
      %v411 = vadd.f32 %v372, %v378
      %v412 = vmax.f32 %v380, 0.0
      %v413 = vmax.f32 %v381, 0.0
      %v414 = vmax.f32 %v382, 0.0
      %v415 = vmax.f32 %v383, 0.0
      %v416 = vmax.f32 %v384, 0.0
      %v417 = vmax.f32 %v385, 0.0
      %v418 = vmax.f32 %v386, 0.0
      %v419 = vmax.f32 %v387, 0.0
      %v420 = vmax.f32 %v388, 0.0
      %v421 = vmax.f32 %v389, 0.0
      %v422 = vmax.f32 %v390, 0.0
      %v423 = vmax.f32 %v391, 0.0
      %v424 = vmax.f32 %v392, 0.0
      %v425 = vmax.f32 %v393, 0.0
      %v426 = vmax.f32 %v394, 0.0
      %v427 = vmax.f32 %v395, 0.0
      %v428 = vmax.f32 %v396, 0.0
      %v429 = vmax.f32 %v397, 0.0
      %v430 = vmax.f32 %v398, 0.0
      %v431 = vmax.f32 %v399, 0.0
      %v432 = vmax.f32 %v400, 0.0
      %v433 = vmax.f32 %v401, 0.0
      %v434 = vmax.f32 %v402, 0.0
      %v435 = vmax.f32 %v403, 0.0
      %v436 = vmax.f32 %v404, 0.0
      %v437 = vmax.f32 %v405, 0.0
      %v438 = vmax.f32 %v406, 0.0
      %v439 = vmax.f32 %v407, 0.0
      %v440 = vmax.f32 %v408, 0.0
      %v441 = vmax.f32 %v409, 0.0
      %v442 = vmax.f32 %v410, 0.0
      %v443 = vmax.f32 %v411, 0.0
      %vm444 = vcmask 31744
      %445 = vst.msk [vmem:[#allocation2] sm:$0xff] %vm444, 0
      %vm446 = vcmask 27648
      %447 = vst.msk [vmem:[#allocation2 + $0x8] sm:$0xf] %vm446, 0
      %vm448 = vcmask 31748
      %449 = vst.msk [vmem:[#allocation2 + $0x88] sm:$0xf0] %vm448, 0
      %450 = vst.msk [vmem:[#allocation2 + $0x90] sm:$0xff] %vm444, 0
      %v451 = vpack.c.bf16 %v413, %v412
      %v452 = vpack.c.bf16 %v415, %v414
      %v453 = vpack.c.bf16 %v417, %v416
      %v454 = vpack.c.bf16 %v419, %v418
      %v455 = vpack.c.bf16 %v421, %v420
      %v456 = vpack.c.bf16 %v423, %v422
      %v457 = vpack.c.bf16 %v425, %v424
      %v458 = vpack.c.bf16 %v427, %v426
      %v459 = vpack.c.bf16 %v429, %v428
      %v460 = vpack.c.bf16 %v431, %v430
      %v461 = vpack.c.bf16 %v433, %v432
      %v462 = vpack.c.bf16 %v435, %v434
      %v463 = vpack.c.bf16 %v437, %v436
      %v464 = vpack.c.bf16 %v439, %v438
      %v465 = vpack.c.bf16 %v441, %v440
      %v466 = vpack.c.bf16 %v443, %v442
      %vm483 = vcmask 1043456
      %v484 = vrot.slane %v451, 4
      %v485 = vrot.slane %v452, 4
      %v486 = vsel %vm483, %v484, %v485
      %v487 = vrot.slane %v453, 4
      %v488 = vsel %vm483, %v485, %v487
      %v489 = vrot.slane %v454, 4
      %v490 = vsel %vm483, %v487, %v489
      %v491 = vrot.slane %v455, 4
      %v492 = vsel %vm483, %v489, %v491
      %v493 = vrot.slane %v456, 4
      %v494 = vsel %vm483, %v491, %v493
      %v495 = vrot.slane %v457, 4
      %v496 = vsel %vm483, %v493, %v495
      %v497 = vrot.slane %v458, 4
      %v498 = vsel %vm483, %v495, %v497
      %v499 = vrot.slane %v459, 4
      %v500 = vsel %vm483, %v497, %v499
      %v501 = vrot.slane %v460, 4
      %v502 = vsel %vm483, %v499, %v501
      %v503 = vrot.slane %v461, 4
      %v504 = vsel %vm483, %v501, %v503
      %v505 = vrot.slane %v462, 4
      %v506 = vsel %vm483, %v503, %v505
      %v507 = vrot.slane %v463, 4
      %v508 = vsel %vm483, %v505, %v507
      %v509 = vrot.slane %v464, 4
      %v510 = vsel %vm483, %v507, %v509
      %v511 = vrot.slane %v465, 4
      %v512 = vsel %vm483, %v509, %v511
      %v513 = vrot.slane %v466, 4
      %v514 = vsel %vm483, %v511, %v513
      %532 = vst.msk [vmem:[#allocation2 + $0x8] sm:$0xf0] %vm448, %v484
      %533 = vst.msk [vmem:[#allocation2 + $0x10] sm:$0xff] %vm444, %v486
      %534 = vst.msk [vmem:[#allocation2 + $0x18] sm:$0xff] %vm444, %v488
      %535 = vst.msk [vmem:[#allocation2 + $0x20] sm:$0xff] %vm444, %v490
      %536 = vst.msk [vmem:[#allocation2 + $0x28] sm:$0xff] %vm444, %v492
      %537 = vst.msk [vmem:[#allocation2 + $0x30] sm:$0xff] %vm444, %v494
      %538 = vst.msk [vmem:[#allocation2 + $0x38] sm:$0xff] %vm444, %v496
      %539 = vst.msk [vmem:[#allocation2 + $0x40] sm:$0xff] %vm444, %v498
      %540 = vst.msk [vmem:[#allocation2 + $0x48] sm:$0xff] %vm444, %v500
      %541 = vst.msk [vmem:[#allocation2 + $0x50] sm:$0xff] %vm444, %v502
      %542 = vst.msk [vmem:[#allocation2 + $0x58] sm:$0xff] %vm444, %v504
      %543 = vst.msk [vmem:[#allocation2 + $0x60] sm:$0xff] %vm444, %v506
      %544 = vst.msk [vmem:[#allocation2 + $0x68] sm:$0xff] %vm444, %v508
      %545 = vst.msk [vmem:[#allocation2 + $0x70] sm:$0xff] %vm444, %v510
      %546 = vst.msk [vmem:[#allocation2 + $0x78] sm:$0xff] %vm444, %v512
      %547 = vst.msk [vmem:[#allocation2 + $0x80] sm:$0xff] %vm444, %v514
      %548 = vst.msk [vmem:[#allocation2 + $0x88] sm:$0xf] %vm446, %v513
      %v549 = vlaneseq
      %v550 = vshrl.u32 %v549, 7
      %v551 = vadd.s32 %v550, 8
      %v552 = vadd.s32 %v550, 16
      %v553 = vadd.s32 %v550, 24
      %v554 = vadd.s32 %v550, 32
      %v555 = vadd.s32 %v550, 40
      %v556 = vadd.s32 %v550, 48
      %v557 = vadd.s32 %v550, 56
      %v558 = vadd.s32 %v550, 64
      %v559 = vadd.s32 %v550, 72
      %v560 = vadd.s32 %v550, 80
      %v561 = vadd.s32 %v550, 88
      %v562 = vadd.s32 %v550, 96
      %v563 = vadd.s32 %v550, 104
      %v564 = vadd.s32 %v550, 112
      %v565 = vadd.s32 %v550, 120
      %v566 = vadd.s32 %v550, 128
      %v567 = vadd.s32 %v550, 136
      %v568 = vadd.s32 %v550, 144
      %v569 = vadd.s32 %v550, 152
      %v570 = vadd.s32 %v550, 160
      %v571 = vadd.s32 %v550, 168
      %v572 = vadd.s32 %v550, 176
      %v573 = vadd.s32 %v550, 184
      %v574 = vadd.s32 %v550, 192
      %v575 = vadd.s32 %v550, 200
      %v576 = vadd.s32 %v550, 208
      %v577 = vadd.s32 %v550, 216
      %v578 = vadd.s32 %v550, 224
      %v579 = vadd.s32 %v550, 232
      %v580 = vadd.s32 %v550, 240
      %v581 = vadd.s32 %v550, 248
      %vm582 = vcmp.lt.s32.totalorder %v550, 0
      %v583 = vsub.s32 0, %v550
      %v584 = vsel %vm582, %v583, %v550
      %v585 = vshrl.u32 %v584, 4
      %v586 = vand.u32 %v584, 15
      %v587 = vsub.s32 0, %v586
      %v588 = vsel %vm582, %v587, %v586
      %vm589 = vcmp.lt.s32.totalorder %v551, 0
      %v590 = vsub.s32 0, %v551
      %v591 = vsel %vm589, %v590, %v551
      %v592 = vshrl.u32 %v591, 4
      %v593 = vand.u32 %v591, 15
      %v594 = vsub.s32 0, %v593
      %v595 = vsel %vm589, %v594, %v593
      %vm596 = vcmp.lt.s32.totalorder %v552, 0
      %v597 = vsub.s32 0, %v552
      %v598 = vsel %vm596, %v597, %v552
      %v599 = vshrl.u32 %v598, 4
      %v600 = vand.u32 %v598, 15
      %v601 = vsub.s32 0, %v600
      %v602 = vsel %vm596, %v601, %v600
      %vm603 = vcmp.lt.s32.totalorder %v553, 0
      %v604 = vsub.s32 0, %v553
      %v605 = vsel %vm603, %v604, %v553
      %v606 = vshrl.u32 %v605, 4
      %v607 = vand.u32 %v605, 15
      %v608 = vsub.s32 0, %v607
      %v609 = vsel %vm603, %v608, %v607
      %vm610 = vcmp.lt.s32.totalorder %v554, 0
      %v611 = vsub.s32 0, %v554
      %v612 = vsel %vm610, %v611, %v554
      %v613 = vshrl.u32 %v612, 4
      %v614 = vand.u32 %v612, 15
      %v615 = vsub.s32 0, %v614
      %v616 = vsel %vm610, %v615, %v614
      %vm617 = vcmp.lt.s32.totalorder %v555, 0
      %v618 = vsub.s32 0, %v555
      %v619 = vsel %vm617, %v618, %v555
      %v620 = vshrl.u32 %v619, 4
      %v621 = vand.u32 %v619, 15
      %v622 = vsub.s32 0, %v621
      %v623 = vsel %vm617, %v622, %v621
      %vm624 = vcmp.lt.s32.totalorder %v556, 0
      %v625 = vsub.s32 0, %v556
      %v626 = vsel %vm624, %v625, %v556
      %v627 = vshrl.u32 %v626, 4
      %v628 = vand.u32 %v626, 15
      %v629 = vsub.s32 0, %v628
      %v630 = vsel %vm624, %v629, %v628
      %vm631 = vcmp.lt.s32.totalorder %v557, 0
      %v632 = vsub.s32 0, %v557
      %v633 = vsel %vm631, %v632, %v557
      %v634 = vshrl.u32 %v633, 4
      %v635 = vand.u32 %v633, 15
      %v636 = vsub.s32 0, %v635
      %v637 = vsel %vm631, %v636, %v635
      %vm638 = vcmp.lt.s32.totalorder %v558, 0
      %v639 = vsub.s32 0, %v558
      %v640 = vsel %vm638, %v639, %v558
      %v641 = vshrl.u32 %v640, 4
      %v642 = vand.u32 %v640, 15
      %v643 = vsub.s32 0, %v642
      %v644 = vsel %vm638, %v643, %v642
      %vm645 = vcmp.lt.s32.totalorder %v559, 0
      %v646 = vsub.s32 0, %v559
      %v647 = vsel %vm645, %v646, %v559
      %v648 = vshrl.u32 %v647, 4
      %v649 = vand.u32 %v647, 15
      %v650 = vsub.s32 0, %v649
      %v651 = vsel %vm645, %v650, %v649
      %vm652 = vcmp.lt.s32.totalorder %v560, 0
      %v653 = vsub.s32 0, %v560
      %v654 = vsel %vm652, %v653, %v560
      %v655 = vshrl.u32 %v654, 4
      %v656 = vand.u32 %v654, 15
      %v657 = vsub.s32 0, %v656
      %v658 = vsel %vm652, %v657, %v656
      %vm659 = vcmp.lt.s32.totalorder %v561, 0
      %v660 = vsub.s32 0, %v561
      %v661 = vsel %vm659, %v660, %v561
      %v662 = vshrl.u32 %v661, 4
      %v663 = vand.u32 %v661, 15
      %v664 = vsub.s32 0, %v663
      %v665 = vsel %vm659, %v664, %v663
      %vm666 = vcmp.lt.s32.totalorder %v562, 0
      %v667 = vsub.s32 0, %v562
      %v668 = vsel %vm666, %v667, %v562
      %v669 = vshrl.u32 %v668, 4
      %v670 = vand.u32 %v668, 15
      %v671 = vsub.s32 0, %v670
      %v672 = vsel %vm666, %v671, %v670
      %vm673 = vcmp.lt.s32.totalorder %v563, 0
      %v674 = vsub.s32 0, %v563
      %v675 = vsel %vm673, %v674, %v563
      %v676 = vshrl.u32 %v675, 4
      %v677 = vand.u32 %v675, 15
      %v678 = vsub.s32 0, %v677
      %v679 = vsel %vm673, %v678, %v677
      %vm680 = vcmp.lt.s32.totalorder %v564, 0
      %v681 = vsub.s32 0, %v564
      %v682 = vsel %vm680, %v681, %v564
      %v683 = vshrl.u32 %v682, 4
      %v684 = vand.u32 %v682, 15
      %v685 = vsub.s32 0, %v684
      %v686 = vsel %vm680, %v685, %v684
      %vm687 = vcmp.lt.s32.totalorder %v565, 0
      %v688 = vsub.s32 0, %v565
      %v689 = vsel %vm687, %v688, %v565
      %v690 = vshrl.u32 %v689, 4
      %v691 = vand.u32 %v689, 15
      %v692 = vsub.s32 0, %v691
      %v693 = vsel %vm687, %v692, %v691
      %vm694 = vcmp.lt.s32.totalorder %v566, 0
      %v695 = vsub.s32 0, %v566
      %v696 = vsel %vm694, %v695, %v566
      %v697 = vshrl.u32 %v696, 4
      %v698 = vand.u32 %v696, 15
      %v699 = vsub.s32 0, %v698
      %v700 = vsel %vm694, %v699, %v698
      %vm701 = vcmp.lt.s32.totalorder %v567, 0
      %v702 = vsub.s32 0, %v567
      %v703 = vsel %vm701, %v702, %v567
      %v704 = vshrl.u32 %v703, 4
      %v705 = vand.u32 %v703, 15
      %v706 = vsub.s32 0, %v705
      %v707 = vsel %vm701, %v706, %v705
      %vm708 = vcmp.lt.s32.totalorder %v568, 0
      %v709 = vsub.s32 0, %v568
      %v710 = vsel %vm708, %v709, %v568
      %v711 = vshrl.u32 %v710, 4
      %v712 = vand.u32 %v710, 15
      %v713 = vsub.s32 0, %v712
      %v714 = vsel %vm708, %v713, %v712
      %vm715 = vcmp.lt.s32.totalorder %v569, 0
      %v716 = vsub.s32 0, %v569
      %v717 = vsel %vm715, %v716, %v569
      %v718 = vshrl.u32 %v717, 4
      %v719 = vand.u32 %v717, 15
      %v720 = vsub.s32 0, %v719
      %v721 = vsel %vm715, %v720, %v719
      %vm722 = vcmp.lt.s32.totalorder %v570, 0
      %v723 = vsub.s32 0, %v570
      %v724 = vsel %vm722, %v723, %v570
      %v725 = vshrl.u32 %v724, 4
      %v726 = vand.u32 %v724, 15
      %v727 = vsub.s32 0, %v726
      %v728 = vsel %vm722, %v727, %v726
      %vm729 = vcmp.lt.s32.totalorder %v571, 0
      %v730 = vsub.s32 0, %v571
      %v731 = vsel %vm729, %v730, %v571
      %v732 = vshrl.u32 %v731, 4
      %v733 = vand.u32 %v731, 15
      %v734 = vsub.s32 0, %v733
      %v735 = vsel %vm729, %v734, %v733
      %vm736 = vcmp.lt.s32.totalorder %v572, 0
      %v737 = vsub.s32 0, %v572
      %v738 = vsel %vm736, %v737, %v572
      %v739 = vshrl.u32 %v738, 4
      %v740 = vand.u32 %v738, 15
      %v741 = vsub.s32 0, %v740
      %v742 = vsel %vm736, %v741, %v740
      %vm743 = vcmp.lt.s32.totalorder %v573, 0
      %v744 = vsub.s32 0, %v573
      %v745 = vsel %vm743, %v744, %v573
      %v746 = vshrl.u32 %v745, 4
      %v747 = vand.u32 %v745, 15
      %v748 = vsub.s32 0, %v747
      %v749 = vsel %vm743, %v748, %v747
      %vm750 = vcmp.lt.s32.totalorder %v574, 0
      %v751 = vsub.s32 0, %v574
      %v752 = vsel %vm750, %v751, %v574
      %v753 = vshrl.u32 %v752, 4
      %v754 = vand.u32 %v752, 15
      %v755 = vsub.s32 0, %v754
      %v756 = vsel %vm750, %v755, %v754
      %vm757 = vcmp.lt.s32.totalorder %v575, 0
      %v758 = vsub.s32 0, %v575
      %v759 = vsel %vm757, %v758, %v575
      %v760 = vshrl.u32 %v759, 4
      %v761 = vand.u32 %v759, 15
      %v762 = vsub.s32 0, %v761
      %v763 = vsel %vm757, %v762, %v761
      %vm764 = vcmp.lt.s32.totalorder %v576, 0
      %v765 = vsub.s32 0, %v576
      %v766 = vsel %vm764, %v765, %v576
      %v767 = vshrl.u32 %v766, 4
      %v768 = vand.u32 %v766, 15
      %v769 = vsub.s32 0, %v768
      %v770 = vsel %vm764, %v769, %v768
      %vm771 = vcmp.lt.s32.totalorder %v577, 0
      %v772 = vsub.s32 0, %v577
      %v773 = vsel %vm771, %v772, %v577
      %v774 = vshrl.u32 %v773, 4
      %v775 = vand.u32 %v773, 15
      %v776 = vsub.s32 0, %v775
      %v777 = vsel %vm771, %v776, %v775
      %vm778 = vcmp.lt.s32.totalorder %v578, 0
      %v779 = vsub.s32 0, %v578
      %v780 = vsel %vm778, %v779, %v578
      %v781 = vshrl.u32 %v780, 4
      %v782 = vand.u32 %v780, 15
      %v783 = vsub.s32 0, %v782
      %v784 = vsel %vm778, %v783, %v782
      %vm785 = vcmp.lt.s32.totalorder %v579, 0
      %v786 = vsub.s32 0, %v579
      %v787 = vsel %vm785, %v786, %v579
      %v788 = vshrl.u32 %v787, 4
      %v789 = vand.u32 %v787, 15
      %v790 = vsub.s32 0, %v789
      %v791 = vsel %vm785, %v790, %v789
      %vm792 = vcmp.lt.s32.totalorder %v580, 0
      %v793 = vsub.s32 0, %v580
      %v794 = vsel %vm792, %v793, %v580
      %v795 = vshrl.u32 %v794, 4
      %v796 = vand.u32 %v794, 15
      %v797 = vsub.s32 0, %v796
      %v798 = vsel %vm792, %v797, %v796
      %vm799 = vcmp.lt.s32.totalorder %v581, 0
      %v800 = vsub.s32 0, %v581
      %v801 = vsel %vm799, %v800, %v581
      %v802 = vshrl.u32 %v801, 4
      %v803 = vand.u32 %v801, 15
      %v804 = vsub.s32 0, %v803
      %v805 = vsel %vm799, %v804, %v803
      %vm806 = vcmp.ne.s32.totalorder %v588, 0
      %vm807 = vcmp.ne.s32.totalorder %v595, 0
      %vm808 = vcmp.ne.s32.totalorder %v602, 0
      %vm809 = vcmp.ne.s32.totalorder %v609, 0
      %vm810 = vcmp.ne.s32.totalorder %v616, 0
      %vm811 = vcmp.ne.s32.totalorder %v623, 0
      %vm812 = vcmp.ne.s32.totalorder %v630, 0
      %vm813 = vcmp.ne.s32.totalorder %v637, 0
      %vm814 = vcmp.ne.s32.totalorder %v644, 0
      %vm815 = vcmp.ne.s32.totalorder %v651, 0
      %vm816 = vcmp.ne.s32.totalorder %v658, 0
      %vm817 = vcmp.ne.s32.totalorder %v665, 0
      %vm818 = vcmp.ne.s32.totalorder %v672, 0
      %vm819 = vcmp.ne.s32.totalorder %v679, 0
      %vm820 = vcmp.ne.s32.totalorder %v686, 0
      %vm821 = vcmp.ne.s32.totalorder %v693, 0
      %vm822 = vcmp.ne.s32.totalorder %v700, 0
      %vm823 = vcmp.ne.s32.totalorder %v707, 0
      %vm824 = vcmp.ne.s32.totalorder %v714, 0
      %vm825 = vcmp.ne.s32.totalorder %v721, 0
      %vm826 = vcmp.ne.s32.totalorder %v728, 0
      %vm827 = vcmp.ne.s32.totalorder %v735, 0
      %vm828 = vcmp.ne.s32.totalorder %v742, 0
      %vm829 = vcmp.ne.s32.totalorder %v749, 0
      %vm830 = vcmp.ne.s32.totalorder %v756, 0
      %vm831 = vcmp.ne.s32.totalorder %v763, 0
      %vm832 = vcmp.ne.s32.totalorder %v770, 0
      %vm833 = vcmp.ne.s32.totalorder %v777, 0
      %vm834 = vcmp.ne.s32.totalorder %v784, 0
      %vm835 = vcmp.ne.s32.totalorder %v791, 0
      %vm836 = vcmp.ne.s32.totalorder %v798, 0
      %vm837 = vcmp.ne.s32.totalorder %v805, 0
      %vm838 = vcmp.lt.s32.totalorder %v588, 0
      %vm839 = vcmp.lt.s32.totalorder %v595, 0
      %vm840 = vcmp.lt.s32.totalorder %v602, 0
      %vm841 = vcmp.lt.s32.totalorder %v609, 0
      %vm842 = vcmp.lt.s32.totalorder %v616, 0
      %vm843 = vcmp.lt.s32.totalorder %v623, 0
      %vm844 = vcmp.lt.s32.totalorder %v630, 0
      %vm845 = vcmp.lt.s32.totalorder %v637, 0
      %vm846 = vcmp.lt.s32.totalorder %v644, 0
      %vm847 = vcmp.lt.s32.totalorder %v651, 0
      %vm848 = vcmp.lt.s32.totalorder %v658, 0
      %vm849 = vcmp.lt.s32.totalorder %v665, 0
      %vm850 = vcmp.lt.s32.totalorder %v672, 0
      %vm851 = vcmp.lt.s32.totalorder %v679, 0
      %vm852 = vcmp.lt.s32.totalorder %v686, 0
      %vm853 = vcmp.lt.s32.totalorder %v693, 0
      %vm854 = vcmp.lt.s32.totalorder %v700, 0
      %vm855 = vcmp.lt.s32.totalorder %v707, 0
      %vm856 = vcmp.lt.s32.totalorder %v714, 0
      %vm857 = vcmp.lt.s32.totalorder %v721, 0
      %vm858 = vcmp.lt.s32.totalorder %v728, 0
      %vm859 = vcmp.lt.s32.totalorder %v735, 0
      %vm860 = vcmp.lt.s32.totalorder %v742, 0
      %vm861 = vcmp.lt.s32.totalorder %v749, 0
      %vm862 = vcmp.lt.s32.totalorder %v756, 0
      %vm863 = vcmp.lt.s32.totalorder %v763, 0
      %vm864 = vcmp.lt.s32.totalorder %v770, 0
      %vm865 = vcmp.lt.s32.totalorder %v777, 0
      %vm866 = vcmp.lt.s32.totalorder %v784, 0
      %vm867 = vcmp.lt.s32.totalorder %v791, 0
      %vm868 = vcmp.lt.s32.totalorder %v798, 0
      %vm869 = vcmp.lt.s32.totalorder %v805, 0
      %vm870 = vmand %vm838, %vm806
      %vm871 = vmand %vm839, %vm807
      %vm872 = vmand %vm840, %vm808
      %vm873 = vmand %vm841, %vm809
      %vm874 = vmand %vm842, %vm810
      %vm875 = vmand %vm843, %vm811
      %vm876 = vmand %vm844, %vm812
      %vm877 = vmand %vm845, %vm813
      %vm878 = vmand %vm846, %vm814
      %vm879 = vmand %vm847, %vm815
      %vm880 = vmand %vm848, %vm816
      %vm881 = vmand %vm849, %vm817
      %vm882 = vmand %vm850, %vm818
      %vm883 = vmand %vm851, %vm819
      %vm884 = vmand %vm852, %vm820
      %vm885 = vmand %vm853, %vm821
      %vm886 = vmand %vm854, %vm822
      %vm887 = vmand %vm855, %vm823
      %vm888 = vmand %vm856, %vm824
      %vm889 = vmand %vm857, %vm825
      %vm890 = vmand %vm858, %vm826
      %vm891 = vmand %vm859, %vm827
      %vm892 = vmand %vm860, %vm828
      %vm893 = vmand %vm861, %vm829
      %vm894 = vmand %vm862, %vm830
      %vm895 = vmand %vm863, %vm831
      %vm896 = vmand %vm864, %vm832
      %vm897 = vmand %vm865, %vm833
      %vm898 = vmand %vm866, %vm834
      %vm899 = vmand %vm867, %vm835
      %vm900 = vmand %vm868, %vm836
      %vm901 = vmand %vm869, %vm837
      %v902 = vadd.s32 %v588, 16
      %v903 = vadd.s32 %v595, 16
      %v904 = vadd.s32 %v602, 16
      %v905 = vadd.s32 %v609, 16
      %v906 = vadd.s32 %v616, 16
      %v907 = vadd.s32 %v623, 16
      %v908 = vadd.s32 %v630, 16
      %v909 = vadd.s32 %v637, 16
      %v910 = vadd.s32 %v644, 16
      %v911 = vadd.s32 %v651, 16
      %v912 = vadd.s32 %v658, 16
      %v913 = vadd.s32 %v665, 16
      %v914 = vadd.s32 %v672, 16
      %v915 = vadd.s32 %v679, 16
      %v916 = vadd.s32 %v686, 16
      %v917 = vadd.s32 %v693, 16
      %v918 = vadd.s32 %v700, 16
      %v919 = vadd.s32 %v707, 16
      %v920 = vadd.s32 %v714, 16
      %v921 = vadd.s32 %v721, 16
      %v922 = vadd.s32 %v728, 16
      %v923 = vadd.s32 %v735, 16
      %v924 = vadd.s32 %v742, 16
      %v925 = vadd.s32 %v749, 16
      %v926 = vadd.s32 %v756, 16
      %v927 = vadd.s32 %v763, 16
      %v928 = vadd.s32 %v770, 16
      %v929 = vadd.s32 %v777, 16
      %v930 = vadd.s32 %v784, 16
      %v931 = vadd.s32 %v791, 16
      %v932 = vadd.s32 %v798, 16
      %v933 = vadd.s32 %v805, 16
      %v934 = vsel %vm870, %v902, %v588
      %v935 = vsel %vm871, %v903, %v595
      %v936 = vsel %vm872, %v904, %v602
      %v937 = vsel %vm873, %v905, %v609
      %v938 = vsel %vm874, %v906, %v616
      %v939 = vsel %vm875, %v907, %v623
      %v940 = vsel %vm876, %v908, %v630
      %v941 = vsel %vm877, %v909, %v637
      %v942 = vsel %vm878, %v910, %v644
      %v943 = vsel %vm879, %v911, %v651
      %v944 = vsel %vm880, %v912, %v658
      %v945 = vsel %vm881, %v913, %v665
      %v946 = vsel %vm882, %v914, %v672
      %v947 = vsel %vm883, %v915, %v679
      %v948 = vsel %vm884, %v916, %v686
      %v949 = vsel %vm885, %v917, %v693
      %v950 = vsel %vm886, %v918, %v700
      %v951 = vsel %vm887, %v919, %v707
      %v952 = vsel %vm888, %v920, %v714
      %v953 = vsel %vm889, %v921, %v721
      %v954 = vsel %vm890, %v922, %v728
      %v955 = vsel %vm891, %v923, %v735
      %v956 = vsel %vm892, %v924, %v742
      %v957 = vsel %vm893, %v925, %v749
      %v958 = vsel %vm894, %v926, %v756
      %v959 = vsel %vm895, %v927, %v763
      %v960 = vsel %vm896, %v928, %v770
      %v961 = vsel %vm897, %v929, %v777
      %v962 = vsel %vm898, %v930, %v784
      %v963 = vsel %vm899, %v931, %v791
      %v964 = vsel %vm900, %v932, %v798
      %v965 = vsel %vm901, %v933, %v805
      %vm966 = vcmp.ge.s32.totalorder %v934, 1
      %vm967 = vcmp.ge.s32.totalorder %v935, 1
      %vm968 = vcmp.ge.s32.totalorder %v936, 1
      %vm969 = vcmp.ge.s32.totalorder %v937, 1
      %vm970 = vcmp.ge.s32.totalorder %v938, 1
      %vm971 = vcmp.ge.s32.totalorder %v939, 1
      %vm972 = vcmp.ge.s32.totalorder %v940, 1
      %vm973 = vcmp.ge.s32.totalorder %v941, 1
      %vm974 = vcmp.ge.s32.totalorder %v942, 1
      %vm975 = vcmp.ge.s32.totalorder %v943, 1
      %vm976 = vcmp.ge.s32.totalorder %v944, 1
      %vm977 = vcmp.ge.s32.totalorder %v945, 1
      %vm978 = vcmp.ge.s32.totalorder %v946, 1
      %vm979 = vcmp.ge.s32.totalorder %v947, 1
      %vm980 = vcmp.ge.s32.totalorder %v948, 1
      %vm981 = vcmp.ge.s32.totalorder %v949, 1
      %vm982 = vcmp.ge.s32.totalorder %v950, 1
      %vm983 = vcmp.ge.s32.totalorder %v951, 1
      %vm984 = vcmp.ge.s32.totalorder %v952, 1
      %vm985 = vcmp.ge.s32.totalorder %v953, 1
      %vm986 = vcmp.ge.s32.totalorder %v954, 1
      %vm987 = vcmp.ge.s32.totalorder %v955, 1
      %vm988 = vcmp.ge.s32.totalorder %v956, 1
      %vm989 = vcmp.ge.s32.totalorder %v957, 1
      %vm990 = vcmp.ge.s32.totalorder %v958, 1
      %vm991 = vcmp.ge.s32.totalorder %v959, 1
      %vm992 = vcmp.ge.s32.totalorder %v960, 1
      %vm993 = vcmp.ge.s32.totalorder %v961, 1
      %vm994 = vcmp.ge.s32.totalorder %v962, 1
      %vm995 = vcmp.ge.s32.totalorder %v963, 1
      %vm996 = vcmp.ge.s32.totalorder %v964, 1
      %vm997 = vcmp.ge.s32.totalorder %v965, 1
      %v998 = vsel %vm966, 1, 0
      %v999 = vsel %vm967, 1, 0
      %v1000 = vsel %vm968, 1, 0
      %v1001 = vsel %vm969, 1, 0
      %v1002 = vsel %vm970, 1, 0
      %v1003 = vsel %vm971, 1, 0
      %v1004 = vsel %vm972, 1, 0
      %v1005 = vsel %vm973, 1, 0
      %v1006 = vsel %vm974, 1, 0
      %v1007 = vsel %vm975, 1, 0
      %v1008 = vsel %vm976, 1, 0
      %v1009 = vsel %vm977, 1, 0
      %v1010 = vsel %vm978, 1, 0
      %v1011 = vsel %vm979, 1, 0
      %v1012 = vsel %vm980, 1, 0
      %v1013 = vsel %vm981, 1, 0
      %v1014 = vsel %vm982, 1, 0
      %v1015 = vsel %vm983, 1, 0
      %v1016 = vsel %vm984, 1, 0
      %v1017 = vsel %vm985, 1, 0
      %v1018 = vsel %vm986, 1, 0
      %v1019 = vsel %vm987, 1, 0
      %v1020 = vsel %vm988, 1, 0
      %v1021 = vsel %vm989, 1, 0
      %v1022 = vsel %vm990, 1, 0
      %v1023 = vsel %vm991, 1, 0
      %v1024 = vsel %vm992, 1, 0
      %v1025 = vsel %vm993, 1, 0
      %v1026 = vsel %vm994, 1, 0
      %v1027 = vsel %vm995, 1, 0
      %v1028 = vsel %vm996, 1, 0
      %v1029 = vsel %vm997, 1, 0
      %v1030 = vcvt.s32.f32 %v998
      %v1031 = vcvt.s32.f32 %v999
      %v1032 = vcvt.s32.f32 %v1000
      %v1033 = vcvt.s32.f32 %v1001
      %v1034 = vcvt.s32.f32 %v1002
      %v1035 = vcvt.s32.f32 %v1003
      %v1036 = vcvt.s32.f32 %v1004
      %v1037 = vcvt.s32.f32 %v1005
      %v1038 = vcvt.s32.f32 %v1006
      %v1039 = vcvt.s32.f32 %v1007
      %v1040 = vcvt.s32.f32 %v1008
      %v1041 = vcvt.s32.f32 %v1009
      %v1042 = vcvt.s32.f32 %v1010
      %v1043 = vcvt.s32.f32 %v1011
      %v1044 = vcvt.s32.f32 %v1012
      %v1045 = vcvt.s32.f32 %v1013
      %v1046 = vcvt.s32.f32 %v1014
      %v1047 = vcvt.s32.f32 %v1015
      %v1048 = vcvt.s32.f32 %v1016
      %v1049 = vcvt.s32.f32 %v1017
      %v1050 = vcvt.s32.f32 %v1018
      %v1051 = vcvt.s32.f32 %v1019
      %v1052 = vcvt.s32.f32 %v1020
      %v1053 = vcvt.s32.f32 %v1021
      %v1054 = vcvt.s32.f32 %v1022
      %v1055 = vcvt.s32.f32 %v1023
      %v1056 = vcvt.s32.f32 %v1024
      %v1057 = vcvt.s32.f32 %v1025
      %v1058 = vcvt.s32.f32 %v1026
      %v1059 = vcvt.s32.f32 %v1027
      %v1060 = vcvt.s32.f32 %v1028
      %v1061 = vcvt.s32.f32 %v1029
      %vm1062 = vcmp.le.s32.totalorder %v934, 14
      %vm1063 = vcmp.le.s32.totalorder %v935, 14
      %vm1064 = vcmp.le.s32.totalorder %v936, 14
      %vm1065 = vcmp.le.s32.totalorder %v937, 14
      %vm1066 = vcmp.le.s32.totalorder %v938, 14
      %vm1067 = vcmp.le.s32.totalorder %v939, 14
      %vm1068 = vcmp.le.s32.totalorder %v940, 14
      %vm1069 = vcmp.le.s32.totalorder %v941, 14
      %vm1070 = vcmp.le.s32.totalorder %v942, 14
      %vm1071 = vcmp.le.s32.totalorder %v943, 14
      %vm1072 = vcmp.le.s32.totalorder %v944, 14
      %vm1073 = vcmp.le.s32.totalorder %v945, 14
      %vm1074 = vcmp.le.s32.totalorder %v946, 14
      %vm1075 = vcmp.le.s32.totalorder %v947, 14
      %vm1076 = vcmp.le.s32.totalorder %v948, 14
      %vm1077 = vcmp.le.s32.totalorder %v949, 14
      %vm1078 = vcmp.le.s32.totalorder %v950, 14
      %vm1079 = vcmp.le.s32.totalorder %v951, 14
      %vm1080 = vcmp.le.s32.totalorder %v952, 14
      %vm1081 = vcmp.le.s32.totalorder %v953, 14
      %vm1082 = vcmp.le.s32.totalorder %v954, 14
      %vm1083 = vcmp.le.s32.totalorder %v955, 14
      %vm1084 = vcmp.le.s32.totalorder %v956, 14
      %vm1085 = vcmp.le.s32.totalorder %v957, 14
      %vm1086 = vcmp.le.s32.totalorder %v958, 14
      %vm1087 = vcmp.le.s32.totalorder %v959, 14
      %vm1088 = vcmp.le.s32.totalorder %v960, 14
      %vm1089 = vcmp.le.s32.totalorder %v961, 14
      %vm1090 = vcmp.le.s32.totalorder %v962, 14
      %vm1091 = vcmp.le.s32.totalorder %v963, 14
      %vm1092 = vcmp.le.s32.totalorder %v964, 14
      %vm1093 = vcmp.le.s32.totalorder %v965, 14
      %v1094 = vsel %vm1062, 1, 0
      %v1095 = vsel %vm1063, 1, 0
      %v1096 = vsel %vm1064, 1, 0
      %v1097 = vsel %vm1065, 1, 0
      %v1098 = vsel %vm1066, 1, 0
      %v1099 = vsel %vm1067, 1, 0
      %v1100 = vsel %vm1068, 1, 0
      %v1101 = vsel %vm1069, 1, 0
      %v1102 = vsel %vm1070, 1, 0
      %v1103 = vsel %vm1071, 1, 0
      %v1104 = vsel %vm1072, 1, 0
      %v1105 = vsel %vm1073, 1, 0
      %v1106 = vsel %vm1074, 1, 0
      %v1107 = vsel %vm1075, 1, 0
      %v1108 = vsel %vm1076, 1, 0
      %v1109 = vsel %vm1077, 1, 0
      %v1110 = vsel %vm1078, 1, 0
      %v1111 = vsel %vm1079, 1, 0
      %v1112 = vsel %vm1080, 1, 0
      %v1113 = vsel %vm1081, 1, 0
      %v1114 = vsel %vm1082, 1, 0
      %v1115 = vsel %vm1083, 1, 0
      %v1116 = vsel %vm1084, 1, 0
      %v1117 = vsel %vm1085, 1, 0
      %v1118 = vsel %vm1086, 1, 0
      %v1119 = vsel %vm1087, 1, 0
      %v1120 = vsel %vm1088, 1, 0
      %v1121 = vsel %vm1089, 1, 0
      %v1122 = vsel %vm1090, 1, 0
      %v1123 = vsel %vm1091, 1, 0
      %v1124 = vsel %vm1092, 1, 0
      %v1125 = vsel %vm1093, 1, 0
      %v1126 = vcvt.s32.f32 %v1094
      %v1127 = vcvt.s32.f32 %v1095
      %v1128 = vcvt.s32.f32 %v1096
      %v1129 = vcvt.s32.f32 %v1097
      %v1130 = vcvt.s32.f32 %v1098
      %v1131 = vcvt.s32.f32 %v1099
      %v1132 = vcvt.s32.f32 %v1100
      %v1133 = vcvt.s32.f32 %v1101
      %v1134 = vcvt.s32.f32 %v1102
      %v1135 = vcvt.s32.f32 %v1103
      %v1136 = vcvt.s32.f32 %v1104
      %v1137 = vcvt.s32.f32 %v1105
      %v1138 = vcvt.s32.f32 %v1106
      %v1139 = vcvt.s32.f32 %v1107
      %v1140 = vcvt.s32.f32 %v1108
      %v1141 = vcvt.s32.f32 %v1109
      %v1142 = vcvt.s32.f32 %v1110
      %v1143 = vcvt.s32.f32 %v1111
      %v1144 = vcvt.s32.f32 %v1112
      %v1145 = vcvt.s32.f32 %v1113
      %v1146 = vcvt.s32.f32 %v1114
      %v1147 = vcvt.s32.f32 %v1115
      %v1148 = vcvt.s32.f32 %v1116
      %v1149 = vcvt.s32.f32 %v1117
      %v1150 = vcvt.s32.f32 %v1118
      %v1151 = vcvt.s32.f32 %v1119
      %v1152 = vcvt.s32.f32 %v1120
      %v1153 = vcvt.s32.f32 %v1121
      %v1154 = vcvt.s32.f32 %v1122
      %v1155 = vcvt.s32.f32 %v1123
      %v1156 = vcvt.s32.f32 %v1124
      %v1157 = vcvt.s32.f32 %v1125
      %v1158 = vld [vmem:[#allocation2] sm:$0xf0]
      %v1159 = vld [vmem:[#allocation2 + $0x8] sm:$0xff]
      %v1160 = vld [vmem:[#allocation2 + $0x10] sm:$0xff]
      %v1161 = vld [vmem:[#allocation2 + $0x18] sm:$0xff]
      %v1162 = vld [vmem:[#allocation2 + $0x20] sm:$0xff]
      %v1163 = vld [vmem:[#allocation2 + $0x28] sm:$0xff]
      %v1164 = vld [vmem:[#allocation2 + $0x30] sm:$0xff]
      %v1165 = vld [vmem:[#allocation2 + $0x38] sm:$0xff]
      %v1166 = vld [vmem:[#allocation2 + $0x40] sm:$0xff]
      %v1167 = vld [vmem:[#allocation2 + $0x48] sm:$0xff]
      %v1168 = vld [vmem:[#allocation2 + $0x50] sm:$0xff]
      %v1169 = vld [vmem:[#allocation2 + $0x58] sm:$0xff]
      %v1170 = vld [vmem:[#allocation2 + $0x60] sm:$0xff]
      %v1171 = vld [vmem:[#allocation2 + $0x68] sm:$0xff]
      %v1172 = vld [vmem:[#allocation2 + $0x70] sm:$0xff]
      %v1173 = vld [vmem:[#allocation2 + $0x78] sm:$0xff]
      %v1174 = vld [vmem:[#allocation2 + $0x80] sm:$0xf]
      %s1175 = scalar_lea.vmem %s3, 2
      %v1176 = vld [vmem:[%s1175] sm:$0x3]
      %v1177 = vld [vmem:[#allocation2 + $0x8] sm:$0xf0]
      %v1178 = vld [vmem:[#allocation2 + $0x80] sm:$0xff]
      %v1179 = vld [vmem:[#allocation2 + $0x88] sm:$0xf]
      %s1180 = scalar_lea.vmem %s3, 8
      %v1181 = vld [vmem:[%s1180] sm:$0x3]
      %v1199 = vrot.slane %v1177, 4
      %v1200 = vrot.slane %v1160, 4
      %v1201 = vsel %vm483, %v1199, %v1200
      %v1202 = vrot.slane %v1161, 4
      %v1203 = vsel %vm483, %v1200, %v1202
      %v1204 = vrot.slane %v1162, 4
      %v1205 = vsel %vm483, %v1202, %v1204
      %v1206 = vrot.slane %v1163, 4
      %v1207 = vsel %vm483, %v1204, %v1206
      %v1208 = vrot.slane %v1164, 4
      %v1209 = vsel %vm483, %v1206, %v1208
      %v1210 = vrot.slane %v1165, 4
      %v1211 = vsel %vm483, %v1208, %v1210
      %v1212 = vrot.slane %v1166, 4
      %v1213 = vsel %vm483, %v1210, %v1212
      %v1214 = vrot.slane %v1167, 4
      %v1215 = vsel %vm483, %v1212, %v1214
      %v1216 = vrot.slane %v1168, 4
      %v1217 = vsel %vm483, %v1214, %v1216
      %v1218 = vrot.slane %v1169, 4
      %v1219 = vsel %vm483, %v1216, %v1218
      %v1220 = vrot.slane %v1170, 4
      %v1221 = vsel %vm483, %v1218, %v1220
      %v1222 = vrot.slane %v1171, 4
      %v1223 = vsel %vm483, %v1220, %v1222
      %v1224 = vrot.slane %v1172, 4
      %v1225 = vsel %vm483, %v1222, %v1224
      %v1226 = vrot.slane %v1173, 4
      %v1227 = vsel %vm483, %v1224, %v1226
      %v1228 = vrot.slane %v1178, 4
      %v1229 = vsel %vm483, %v1226, %v1228
      %v1230 = vrot.slane %v1179, 4
      %v1231 = vsel %vm483, %v1228, %v1230
      %v1233 = vsel %vm444, %v1201, 0
      %v1236 = vsel %vm444, %v1203, 0
      %v1239 = vsel %vm444, %v1205, 0
      %v1242 = vsel %vm444, %v1207, 0
      %v1245 = vsel %vm444, %v1209, 0
      %v1248 = vsel %vm444, %v1211, 0
      %v1251 = vsel %vm444, %v1213, 0
      %v1254 = vsel %vm444, %v1215, 0
      %v1257 = vsel %vm444, %v1217, 0
      %v1260 = vsel %vm444, %v1219, 0
      %v1263 = vsel %vm444, %v1221, 0
      %v1266 = vsel %vm444, %v1223, 0
      %v1269 = vsel %vm444, %v1225, 0
      %v1272 = vsel %vm444, %v1227, 0
      %v1275 = vsel %vm444, %v1229, 0
      %v1278 = vsel %vm444, %v1231, 0
      %vm1280 = vcmask 1041408
      %v1282 = vsel %vm1280, %v1181, 0
      %1284 = vmatprep.subr.bf16.mxu0 0
      %1285 = vmatpush1.bf16.msra.mxu0 %v1282
      %1286 = vmatprep.subr.bf16.mxu0 0
      %1287 = vmatpush1.bf16.msra.mxu0 0
      %1288 = vmatprep.subr.bf16.mxu0 0
      %1289 = vmatpush1.bf16.msra.mxu0 0
      %1290 = vmatprep.subr.bf16.mxu0 0
      %1291 = vmatpush1.bf16.msra.mxu0 0
      %1292 = vmatprep.subr.bf16.mxu0 0
      %1293 = vmatpush1.bf16.msra.mxu0 0
      %1294 = vmatprep.subr.bf16.mxu0 0
      %1295 = vmatpush1.bf16.msra.mxu0 0
      %1296 = vmatprep.subr.bf16.mxu0 0
      %1297 = vmatpush1.bf16.msra.mxu0 0
      %1298 = vmatprep.subr.bf16.mxu0 0
      %1299 = vmatpush1.bf16.msra.mxu0 0
      %1300 = vmatprep.subr.bf16.mxu0 0
      %1301 = vmatpush1.bf16.msra.mxu0 0
      %1302 = vmatprep.subr.bf16.mxu0 0
      %1303 = vmatpush1.bf16.msra.mxu0 0
      %1304 = vmatprep.subr.bf16.mxu0 0
      %1305 = vmatpush1.bf16.msra.mxu0 0
      %1306 = vmatprep.subr.bf16.mxu0 0
      %1307 = vmatpush1.bf16.msra.mxu0 0
      %1308 = vmatprep.subr.bf16.mxu0 0
      %1309 = vmatpush1.bf16.msra.mxu0 0
      %1310 = vmatprep.subr.bf16.mxu0 0
      %1311 = vmatpush1.bf16.msra.mxu0 0
      %1312 = vmatprep.subr.bf16.mxu0 0
      %1313 = vmatpush1.bf16.msra.mxu0 0
      %1314 = vmatprep.subr.bf16.mxu0 0
      %1315 = vmatpush1.bf16.msra.mxu0 0
      %1316 = vmatprep.mubr.bf16.mxu0 0
      %1317 = vmatmul.mubr.bf16.gmra.mrb[0].mxu0 %v1233
      %v1318 = vpop.f32.mrb[0].mxu0
      %v1319 = vadd.f32 0.0, %v1318
      %v1320 = vpop.f32.mrb[0].mxu0
      %v1321 = vpop.f32.mrb[0].mxu0
      %v1322 = vadd.f32 0.0, %v1321
      %v1323 = vpop.f32.mrb[0].mxu0
      %1324 = vmatprep.mubr.bf16.mxu0 0
      %1325 = vmatmul.mubr.bf16.gmra.mrb[0].mxu0 %v1236
      %v1326 = vpop.f32.mrb[0].mxu0
      %v1327 = vadd.f32 0.0, %v1326
      %v1328 = vpop.f32.mrb[0].mxu0
      %v1329 = vpop.f32.mrb[0].mxu0
      %v1330 = vadd.f32 0.0, %v1329
      %v1331 = vpop.f32.mrb[0].mxu0
      %1332 = vmatprep.mubr.bf16.mxu0 0
      %1333 = vmatmul.mubr.bf16.gmra.mrb[0].mxu0 %v1239
      %v1334 = vpop.f32.mrb[0].mxu0
      %v1335 = vadd.f32 0.0, %v1334
      %v1336 = vpop.f32.mrb[0].mxu0
      %v1337 = vpop.f32.mrb[0].mxu0
      %v1338 = vadd.f32 0.0, %v1337
      %v1339 = vpop.f32.mrb[0].mxu0
      %1340 = vmatprep.mubr.bf16.mxu0 0
      %1341 = vmatmul.mubr.bf16.gmra.mrb[0].mxu0 %v1242
      %v1342 = vpop.f32.mrb[0].mxu0
      %v1343 = vadd.f32 0.0, %v1342
      %v1344 = vpop.f32.mrb[0].mxu0
      %v1345 = vpop.f32.mrb[0].mxu0
      %v1346 = vadd.f32 0.0, %v1345
      %v1347 = vpop.f32.mrb[0].mxu0
      %1348 = vmatprep.mubr.bf16.mxu0 0
      %1349 = vmatmul.mubr.bf16.gmra.mrb[0].mxu0 %v1245
      %v1350 = vpop.f32.mrb[0].mxu0
      %v1351 = vadd.f32 0.0, %v1350
      %v1352 = vpop.f32.mrb[0].mxu0
      %v1353 = vpop.f32.mrb[0].mxu0
      %v1354 = vadd.f32 0.0, %v1353
      %v1355 = vpop.f32.mrb[0].mxu0
      %1356 = vmatprep.mubr.bf16.mxu0 0
      %1357 = vmatmul.mubr.bf16.gmra.mrb[0].mxu0 %v1248
      %v1358 = vpop.f32.mrb[0].mxu0
      %v1359 = vadd.f32 0.0, %v1358
      %v1360 = vpop.f32.mrb[0].mxu0
      %v1361 = vpop.f32.mrb[0].mxu0
      %v1362 = vadd.f32 0.0, %v1361
      %v1363 = vpop.f32.mrb[0].mxu0
      %1364 = vmatprep.mubr.bf16.mxu0 0
      %1365 = vmatmul.mubr.bf16.gmra.mrb[0].mxu0 %v1251
      %v1366 = vpop.f32.mrb[0].mxu0
      %v1367 = vadd.f32 0.0, %v1366
      %v1368 = vpop.f32.mrb[0].mxu0
      %v1369 = vpop.f32.mrb[0].mxu0
      %v1370 = vadd.f32 0.0, %v1369
      %v1371 = vpop.f32.mrb[0].mxu0
      %1372 = vmatprep.mubr.bf16.mxu0 0
      %1373 = vmatmul.mubr.bf16.gmra.mrb[0].mxu0 %v1254
      %v1374 = vpop.f32.mrb[0].mxu0
      %v1375 = vadd.f32 0.0, %v1374
      %v1376 = vpop.f32.mrb[0].mxu0
      %v1377 = vpop.f32.mrb[0].mxu0
      %v1378 = vadd.f32 0.0, %v1377
      %v1379 = vpop.f32.mrb[0].mxu0
      %1380 = vmatprep.mubr.bf16.mxu0 0
      %1381 = vmatmul.mubr.bf16.gmra.mrb[0].mxu0 %v1257
      %v1382 = vpop.f32.mrb[0].mxu0
      %v1383 = vadd.f32 0.0, %v1382
      %v1384 = vpop.f32.mrb[0].mxu0
      %v1385 = vpop.f32.mrb[0].mxu0
      %v1386 = vadd.f32 0.0, %v1385
      %v1387 = vpop.f32.mrb[0].mxu0
      %1388 = vmatprep.mubr.bf16.mxu0 0
      %1389 = vmatmul.mubr.bf16.gmra.mrb[0].mxu0 %v1260
      %v1390 = vpop.f32.mrb[0].mxu0
      %v1391 = vadd.f32 0.0, %v1390
      %v1392 = vpop.f32.mrb[0].mxu0
      %v1393 = vpop.f32.mrb[0].mxu0
      %v1394 = vadd.f32 0.0, %v1393
      %v1395 = vpop.f32.mrb[0].mxu0
      %1396 = vmatprep.mubr.bf16.mxu0 0
      %1397 = vmatmul.mubr.bf16.gmra.mrb[0].mxu0 %v1263
      %v1398 = vpop.f32.mrb[0].mxu0
      %v1399 = vadd.f32 0.0, %v1398
      %v1400 = vpop.f32.mrb[0].mxu0
      %v1401 = vpop.f32.mrb[0].mxu0
      %v1402 = vadd.f32 0.0, %v1401
      %v1403 = vpop.f32.mrb[0].mxu0
      %1404 = vmatprep.mubr.bf16.mxu0 0
      %1405 = vmatmul.mubr.bf16.gmra.mrb[0].mxu0 %v1266
      %v1406 = vpop.f32.mrb[0].mxu0
      %v1407 = vadd.f32 0.0, %v1406
      %v1408 = vpop.f32.mrb[0].mxu0
      %v1409 = vpop.f32.mrb[0].mxu0
      %v1410 = vadd.f32 0.0, %v1409
      %v1411 = vpop.f32.mrb[0].mxu0
      %1412 = vmatprep.mubr.bf16.mxu0 0
      %1413 = vmatmul.mubr.bf16.gmra.mrb[0].mxu0 %v1269
      %v1414 = vpop.f32.mrb[0].mxu0
      %v1415 = vadd.f32 0.0, %v1414
      %v1416 = vpop.f32.mrb[0].mxu0
      %v1417 = vpop.f32.mrb[0].mxu0
      %v1418 = vadd.f32 0.0, %v1417
      %v1419 = vpop.f32.mrb[0].mxu0
      %1420 = vmatprep.mubr.bf16.mxu0 0
      %1421 = vmatmul.mubr.bf16.gmra.mrb[0].mxu0 %v1272
      %v1422 = vpop.f32.mrb[0].mxu0
      %v1423 = vadd.f32 0.0, %v1422
      %v1424 = vpop.f32.mrb[0].mxu0
      %v1425 = vpop.f32.mrb[0].mxu0
      %v1426 = vadd.f32 0.0, %v1425
      %v1427 = vpop.f32.mrb[0].mxu0
      %1428 = vmatprep.mubr.bf16.mxu0 0
      %1429 = vmatmul.mubr.bf16.gmra.mrb[0].mxu0 %v1275
      %v1430 = vpop.f32.mrb[0].mxu0
      %v1431 = vadd.f32 0.0, %v1430
      %v1432 = vpop.f32.mrb[0].mxu0
      %v1433 = vpop.f32.mrb[0].mxu0
      %v1434 = vadd.f32 0.0, %v1433
      %v1435 = vpop.f32.mrb[0].mxu0
      %1436 = vmatprep.mubr.bf16.mxu0 0
      %1437 = vmatmul.mubr.bf16.gmra.mrb[0].mxu0 %v1278
      %v1438 = vpop.f32.mrb[0].mxu0
      %v1439 = vadd.f32 0.0, %v1438
      %v1440 = vpop.f32.mrb[0].mxu0
      %v1441 = vpop.f32.mrb[0].mxu0
      %v1442 = vadd.f32 0.0, %v1441
      %v1443 = vpop.f32.mrb[0].mxu0
      %1444 = vdwg.mxu0
      %v1448 = vrot.slane %v1158, 4
      %v1449 = vrot.slane %v1159, 4
      %v1450 = vsel %vm483, %v1448, %v1449
      %v1451 = vsel %vm483, %v1449, %v1200
      %v1452 = vrot.slane %v1174, 4
      %v1453 = vsel %vm483, %v1226, %v1452
      %v1455 = vsel %vm444, %v1450, 0
      %v1458 = vsel %vm444, %v1451, 0
      %v1461 = vsel %vm444, %v1453, 0
      %v1464 = vsel %vm1280, %v1176, 0
      %1466 = vmatprep.subr.bf16.mxu0 0
      %1467 = vmatpush1.bf16.msra.mxu0 %v1464
      %1468 = vmatprep.subr.bf16.mxu0 0
      %1469 = vmatpush1.bf16.msra.mxu0 0
      %1470 = vmatprep.subr.bf16.mxu0 0
      %1471 = vmatpush1.bf16.msra.mxu0 0
      %1472 = vmatprep.subr.bf16.mxu0 0
      %1473 = vmatpush1.bf16.msra.mxu0 0
      %1474 = vmatprep.subr.bf16.mxu0 0
      %1475 = vmatpush1.bf16.msra.mxu0 0
      %1476 = vmatprep.subr.bf16.mxu0 0
      %1477 = vmatpush1.bf16.msra.mxu0 0
      %1478 = vmatprep.subr.bf16.mxu0 0
      %1479 = vmatpush1.bf16.msra.mxu0 0
      %1480 = vmatprep.subr.bf16.mxu0 0
      %1481 = vmatpush1.bf16.msra.mxu0 0
      %1482 = vmatprep.subr.bf16.mxu0 0
      %1483 = vmatpush1.bf16.msra.mxu0 0
      %1484 = vmatprep.subr.bf16.mxu0 0
      %1485 = vmatpush1.bf16.msra.mxu0 0
      %1486 = vmatprep.subr.bf16.mxu0 0
      %1487 = vmatpush1.bf16.msra.mxu0 0
      %1488 = vmatprep.subr.bf16.mxu0 0
      %1489 = vmatpush1.bf16.msra.mxu0 0
      %1490 = vmatprep.subr.bf16.mxu0 0
      %1491 = vmatpush1.bf16.msra.mxu0 0
      %1492 = vmatprep.subr.bf16.mxu0 0
      %1493 = vmatpush1.bf16.msra.mxu0 0
      %1494 = vmatprep.subr.bf16.mxu0 0
      %1495 = vmatpush1.bf16.msra.mxu0 0
      %1496 = vmatprep.subr.bf16.mxu0 0
      %1497 = vmatpush1.bf16.msra.mxu0 0
      %1498 = vmatprep.mubr.bf16.mxu0 0
      %1499 = vmatmul.mubr.bf16.gmra.mrb[0].mxu0 %v1455
      %v1500 = vpop.f32.mrb[0].mxu0
      %v1501 = vadd.f32 %v1319, %v1500
      %v1502 = vpop.f32.mrb[0].mxu0
      %v1503 = vpop.f32.mrb[0].mxu0
      %v1504 = vadd.f32 %v1322, %v1503
      %v1505 = vpop.f32.mrb[0].mxu0
      %1506 = vmatprep.mubr.bf16.mxu0 0
      %1507 = vmatmul.mubr.bf16.gmra.mrb[0].mxu0 %v1458
      %v1508 = vpop.f32.mrb[0].mxu0
      %v1509 = vadd.f32 %v1327, %v1508
      %v1510 = vpop.f32.mrb[0].mxu0
      %v1511 = vpop.f32.mrb[0].mxu0
      %v1512 = vadd.f32 %v1330, %v1511
      %v1513 = vpop.f32.mrb[0].mxu0
      %1514 = vmatprep.mubr.bf16.mxu0 0
      %1515 = vmatmul.mubr.bf16.gmra.mrb[0].mxu0 %v1236
      %v1516 = vpop.f32.mrb[0].mxu0
      %v1517 = vadd.f32 %v1335, %v1516
      %v1518 = vpop.f32.mrb[0].mxu0
      %v1519 = vpop.f32.mrb[0].mxu0
      %v1520 = vadd.f32 %v1338, %v1519
      %v1521 = vpop.f32.mrb[0].mxu0
      %1522 = vmatprep.mubr.bf16.mxu0 0
      %1523 = vmatmul.mubr.bf16.gmra.mrb[0].mxu0 %v1239
      %v1524 = vpop.f32.mrb[0].mxu0
      %v1525 = vadd.f32 %v1343, %v1524
      %v1526 = vpop.f32.mrb[0].mxu0
      %v1527 = vpop.f32.mrb[0].mxu0
      %v1528 = vadd.f32 %v1346, %v1527
      %v1529 = vpop.f32.mrb[0].mxu0
      %1530 = vmatprep.mubr.bf16.mxu0 0
      %1531 = vmatmul.mubr.bf16.gmra.mrb[0].mxu0 %v1242
      %v1532 = vpop.f32.mrb[0].mxu0
      %v1533 = vadd.f32 %v1351, %v1532
      %v1534 = vpop.f32.mrb[0].mxu0
      %v1535 = vpop.f32.mrb[0].mxu0
      %v1536 = vadd.f32 %v1354, %v1535
      %v1537 = vpop.f32.mrb[0].mxu0
      %1538 = vmatprep.mubr.bf16.mxu0 0
      %1539 = vmatmul.mubr.bf16.gmra.mrb[0].mxu0 %v1245
      %v1540 = vpop.f32.mrb[0].mxu0
      %v1541 = vadd.f32 %v1359, %v1540
      %v1542 = vpop.f32.mrb[0].mxu0
      %v1543 = vpop.f32.mrb[0].mxu0
      %v1544 = vadd.f32 %v1362, %v1543
      %v1545 = vpop.f32.mrb[0].mxu0
      %1546 = vmatprep.mubr.bf16.mxu0 0
      %1547 = vmatmul.mubr.bf16.gmra.mrb[0].mxu0 %v1248
      %v1548 = vpop.f32.mrb[0].mxu0
      %v1549 = vadd.f32 %v1367, %v1548
      %v1550 = vpop.f32.mrb[0].mxu0
      %v1551 = vpop.f32.mrb[0].mxu0
      %v1552 = vadd.f32 %v1370, %v1551
      %v1553 = vpop.f32.mrb[0].mxu0
      %1554 = vmatprep.mubr.bf16.mxu0 0
      %1555 = vmatmul.mubr.bf16.gmra.mrb[0].mxu0 %v1251
      %v1556 = vpop.f32.mrb[0].mxu0
      %v1557 = vadd.f32 %v1375, %v1556
      %v1558 = vpop.f32.mrb[0].mxu0
      %v1559 = vpop.f32.mrb[0].mxu0
      %v1560 = vadd.f32 %v1378, %v1559
      %v1561 = vpop.f32.mrb[0].mxu0
      %1562 = vmatprep.mubr.bf16.mxu0 0
      %1563 = vmatmul.mubr.bf16.gmra.mrb[0].mxu0 %v1254
      %v1564 = vpop.f32.mrb[0].mxu0
      %v1565 = vadd.f32 %v1383, %v1564
      %v1566 = vpop.f32.mrb[0].mxu0
      %v1567 = vpop.f32.mrb[0].mxu0
      %v1568 = vadd.f32 %v1386, %v1567
      %v1569 = vpop.f32.mrb[0].mxu0
      %1570 = vmatprep.mubr.bf16.mxu0 0
      %1571 = vmatmul.mubr.bf16.gmra.mrb[0].mxu0 %v1257
      %v1572 = vpop.f32.mrb[0].mxu0
      %v1573 = vadd.f32 %v1391, %v1572
      %v1574 = vpop.f32.mrb[0].mxu0
      %v1575 = vpop.f32.mrb[0].mxu0
      %v1576 = vadd.f32 %v1394, %v1575
      %v1577 = vpop.f32.mrb[0].mxu0
      %1578 = vmatprep.mubr.bf16.mxu0 0
      %1579 = vmatmul.mubr.bf16.gmra.mrb[0].mxu0 %v1260
      %v1580 = vpop.f32.mrb[0].mxu0
      %v1581 = vadd.f32 %v1399, %v1580
      %v1582 = vpop.f32.mrb[0].mxu0
      %v1583 = vpop.f32.mrb[0].mxu0
      %v1584 = vadd.f32 %v1402, %v1583
      %v1585 = vpop.f32.mrb[0].mxu0
      %1586 = vmatprep.mubr.bf16.mxu0 0
      %1587 = vmatmul.mubr.bf16.gmra.mrb[0].mxu0 %v1263
      %v1588 = vpop.f32.mrb[0].mxu0
      %v1589 = vadd.f32 %v1407, %v1588
      %v1590 = vpop.f32.mrb[0].mxu0
      %v1591 = vpop.f32.mrb[0].mxu0
      %v1592 = vadd.f32 %v1410, %v1591
      %v1593 = vpop.f32.mrb[0].mxu0
      %1594 = vmatprep.mubr.bf16.mxu0 0
      %1595 = vmatmul.mubr.bf16.gmra.mrb[0].mxu0 %v1266
      %v1596 = vpop.f32.mrb[0].mxu0
      %v1597 = vadd.f32 %v1415, %v1596
      %v1598 = vpop.f32.mrb[0].mxu0
      %v1599 = vpop.f32.mrb[0].mxu0
      %v1600 = vadd.f32 %v1418, %v1599
      %v1601 = vpop.f32.mrb[0].mxu0
      %1602 = vmatprep.mubr.bf16.mxu0 0
      %1603 = vmatmul.mubr.bf16.gmra.mrb[0].mxu0 %v1269
      %v1604 = vpop.f32.mrb[0].mxu0
      %v1605 = vadd.f32 %v1423, %v1604
      %v1606 = vpop.f32.mrb[0].mxu0
      %v1607 = vpop.f32.mrb[0].mxu0
      %v1608 = vadd.f32 %v1426, %v1607
      %v1609 = vpop.f32.mrb[0].mxu0
      %1610 = vmatprep.mubr.bf16.mxu0 0
      %1611 = vmatmul.mubr.bf16.gmra.mrb[0].mxu0 %v1272
      %v1612 = vpop.f32.mrb[0].mxu0
      %v1613 = vadd.f32 %v1431, %v1612
      %v1614 = vpop.f32.mrb[0].mxu0
      %v1615 = vpop.f32.mrb[0].mxu0
      %v1616 = vadd.f32 %v1434, %v1615
      %v1617 = vpop.f32.mrb[0].mxu0
      %1618 = vmatprep.mubr.bf16.mxu0 0
      %1619 = vmatmul.mubr.bf16.gmra.mrb[0].mxu0 %v1461
      %v1620 = vpop.f32.mrb[0].mxu0
      %v1621 = vadd.f32 %v1439, %v1620
      %v1622 = vpop.f32.mrb[0].mxu0
      %v1623 = vpop.f32.mrb[0].mxu0
      %v1624 = vadd.f32 %v1442, %v1623
      %v1625 = vpop.f32.mrb[0].mxu0
      %1626 = vdwg.mxu0
      %v1627 = vld [vmem:[#allocation2 + $0x10] sm:$0xf0]
      %v1628 = vld [vmem:[#allocation2 + $0x18] sm:$0xff]
      %v1629 = vld [vmem:[#allocation2 + $0x20] sm:$0xff]
      %v1630 = vld [vmem:[#allocation2 + $0x28] sm:$0xff]
      %v1631 = vld [vmem:[#allocation2 + $0x30] sm:$0xff]
      %v1632 = vld [vmem:[#allocation2 + $0x38] sm:$0xff]
      %v1633 = vld [vmem:[#allocation2 + $0x40] sm:$0xff]
      %v1634 = vld [vmem:[#allocation2 + $0x48] sm:$0xff]
      %v1635 = vld [vmem:[#allocation2 + $0x50] sm:$0xff]
      %v1636 = vld [vmem:[#allocation2 + $0x58] sm:$0xff]
      %v1637 = vld [vmem:[#allocation2 + $0x60] sm:$0xff]
      %v1638 = vld [vmem:[#allocation2 + $0x68] sm:$0xff]
      %v1639 = vld [vmem:[#allocation2 + $0x70] sm:$0xff]
      %v1640 = vld [vmem:[#allocation2 + $0x78] sm:$0xff]
      %v1641 = vld [vmem:[#allocation2 + $0x80] sm:$0xff]
      %v1642 = vld [vmem:[#allocation2 + $0x88] sm:$0xff]
      %v1643 = vld [vmem:[#allocation2 + $0x90] sm:$0xf]
      %s1644 = scalar_lea.vmem %s3, 14
      %v1645 = vld [vmem:[%s1644] sm:$0x3]
      %v1663 = vrot.slane %v1627, 4
      %v1664 = vrot.slane %v1628, 4
      %v1665 = vsel %vm483, %v1663, %v1664
      %v1666 = vrot.slane %v1629, 4
      %v1667 = vsel %vm483, %v1664, %v1666
      %v1668 = vrot.slane %v1630, 4
      %v1669 = vsel %vm483, %v1666, %v1668
      %v1670 = vrot.slane %v1631, 4
      %v1671 = vsel %vm483, %v1668, %v1670
      %v1672 = vrot.slane %v1632, 4
      %v1673 = vsel %vm483, %v1670, %v1672
      %v1674 = vrot.slane %v1633, 4
      %v1675 = vsel %vm483, %v1672, %v1674
      %v1676 = vrot.slane %v1634, 4
      %v1677 = vsel %vm483, %v1674, %v1676
      %v1678 = vrot.slane %v1635, 4
      %v1679 = vsel %vm483, %v1676, %v1678
      %v1680 = vrot.slane %v1636, 4
      %v1681 = vsel %vm483, %v1678, %v1680
      %v1682 = vrot.slane %v1637, 4
      %v1683 = vsel %vm483, %v1680, %v1682
      %v1684 = vrot.slane %v1638, 4
      %v1685 = vsel %vm483, %v1682, %v1684
      %v1686 = vrot.slane %v1639, 4
      %v1687 = vsel %vm483, %v1684, %v1686
      %v1688 = vrot.slane %v1640, 4
      %v1689 = vsel %vm483, %v1686, %v1688
      %v1690 = vrot.slane %v1641, 4
      %v1691 = vsel %vm483, %v1688, %v1690
      %v1692 = vrot.slane %v1642, 4
      %v1693 = vsel %vm483, %v1690, %v1692
      %v1694 = vrot.slane %v1643, 4
      %v1695 = vsel %vm483, %v1692, %v1694
      %v1697 = vsel %vm444, %v1665, 0
      %v1700 = vsel %vm444, %v1667, 0
      %v1703 = vsel %vm444, %v1669, 0
      %v1706 = vsel %vm444, %v1671, 0
      %v1709 = vsel %vm444, %v1673, 0
      %v1712 = vsel %vm444, %v1675, 0
      %v1715 = vsel %vm444, %v1677, 0
      %v1718 = vsel %vm444, %v1679, 0
      %v1721 = vsel %vm444, %v1681, 0
      %v1724 = vsel %vm444, %v1683, 0
      %v1727 = vsel %vm444, %v1685, 0
      %v1730 = vsel %vm444, %v1687, 0
      %v1733 = vsel %vm444, %v1689, 0
      %v1736 = vsel %vm444, %v1691, 0
      %v1739 = vsel %vm444, %v1693, 0
      %v1742 = vsel %vm444, %v1695, 0
      %v1745 = vsel %vm1280, %v1645, 0
      %1747 = vmatprep.subr.bf16.mxu0 0
      %1748 = vmatpush1.bf16.msra.mxu0 %v1745
      %1749 = vmatprep.subr.bf16.mxu0 0
      %1750 = vmatpush1.bf16.msra.mxu0 0
      %1751 = vmatprep.subr.bf16.mxu0 0
      %1752 = vmatpush1.bf16.msra.mxu0 0
      %1753 = vmatprep.subr.bf16.mxu0 0
      %1754 = vmatpush1.bf16.msra.mxu0 0
      %1755 = vmatprep.subr.bf16.mxu0 0
      %1756 = vmatpush1.bf16.msra.mxu0 0
      %1757 = vmatprep.subr.bf16.mxu0 0
      %1758 = vmatpush1.bf16.msra.mxu0 0
      %1759 = vmatprep.subr.bf16.mxu0 0
      %1760 = vmatpush1.bf16.msra.mxu0 0
      %1761 = vmatprep.subr.bf16.mxu0 0
      %1762 = vmatpush1.bf16.msra.mxu0 0
      %1763 = vmatprep.subr.bf16.mxu0 0
      %1764 = vmatpush1.bf16.msra.mxu0 0
      %1765 = vmatprep.subr.bf16.mxu0 0
      %1766 = vmatpush1.bf16.msra.mxu0 0
      %1767 = vmatprep.subr.bf16.mxu0 0
      %1768 = vmatpush1.bf16.msra.mxu0 0
      %1769 = vmatprep.subr.bf16.mxu0 0
      %1770 = vmatpush1.bf16.msra.mxu0 0
      %1771 = vmatprep.subr.bf16.mxu0 0
      %1772 = vmatpush1.bf16.msra.mxu0 0
      %1773 = vmatprep.subr.bf16.mxu0 0
      %1774 = vmatpush1.bf16.msra.mxu0 0
      %1775 = vmatprep.subr.bf16.mxu0 0
      %1776 = vmatpush1.bf16.msra.mxu0 0
      %1777 = vmatprep.subr.bf16.mxu0 0
      %1778 = vmatpush1.bf16.msra.mxu0 0
      %1779 = vmatprep.mubr.bf16.mxu0 0
      %1780 = vmatmul.mubr.bf16.gmra.mrb[0].mxu0 %v1697
      %v1781 = vpop.f32.mrb[0].mxu0
      %v1782 = vadd.f32 0.0, %v1781
      %v1783 = vpop.f32.mrb[0].mxu0
      %v1784 = vpop.f32.mrb[0].mxu0
      %v1785 = vadd.f32 0.0, %v1784
      %v1786 = vpop.f32.mrb[0].mxu0
      %1787 = vmatprep.mubr.bf16.mxu0 0
      %1788 = vmatmul.mubr.bf16.gmra.mrb[0].mxu0 %v1700
      %v1789 = vpop.f32.mrb[0].mxu0
      %v1790 = vadd.f32 0.0, %v1789
      %v1791 = vpop.f32.mrb[0].mxu0
      %v1792 = vpop.f32.mrb[0].mxu0
      %v1793 = vadd.f32 0.0, %v1792
      %v1794 = vpop.f32.mrb[0].mxu0
      %1795 = vmatprep.mubr.bf16.mxu0 0
      %1796 = vmatmul.mubr.bf16.gmra.mrb[0].mxu0 %v1703
      %v1797 = vpop.f32.mrb[0].mxu0
      %v1798 = vadd.f32 0.0, %v1797
      %v1799 = vpop.f32.mrb[0].mxu0
      %v1800 = vpop.f32.mrb[0].mxu0
      %v1801 = vadd.f32 0.0, %v1800
      %v1802 = vpop.f32.mrb[0].mxu0
      %1803 = vmatprep.mubr.bf16.mxu0 0
      %1804 = vmatmul.mubr.bf16.gmra.mrb[0].mxu0 %v1706
      %v1805 = vpop.f32.mrb[0].mxu0
      %v1806 = vadd.f32 0.0, %v1805
      %v1807 = vpop.f32.mrb[0].mxu0
      %v1808 = vpop.f32.mrb[0].mxu0
      %v1809 = vadd.f32 0.0, %v1808
      %v1810 = vpop.f32.mrb[0].mxu0
      %1811 = vmatprep.mubr.bf16.mxu0 0
      %1812 = vmatmul.mubr.bf16.gmra.mrb[0].mxu0 %v1709
      %v1813 = vpop.f32.mrb[0].mxu0
      %v1814 = vadd.f32 0.0, %v1813
      %v1815 = vpop.f32.mrb[0].mxu0
      %v1816 = vpop.f32.mrb[0].mxu0
      %v1817 = vadd.f32 0.0, %v1816
      %v1818 = vpop.f32.mrb[0].mxu0
      %1819 = vmatprep.mubr.bf16.mxu0 0
      %1820 = vmatmul.mubr.bf16.gmra.mrb[0].mxu0 %v1712
      %v1821 = vpop.f32.mrb[0].mxu0
      %v1822 = vadd.f32 0.0, %v1821
      %v1823 = vpop.f32.mrb[0].mxu0
      %v1824 = vpop.f32.mrb[0].mxu0
      %v1825 = vadd.f32 0.0, %v1824
      %v1826 = vpop.f32.mrb[0].mxu0
      %1827 = vmatprep.mubr.bf16.mxu0 0
      %1828 = vmatmul.mubr.bf16.gmra.mrb[0].mxu0 %v1715
      %v1829 = vpop.f32.mrb[0].mxu0
      %v1830 = vadd.f32 0.0, %v1829
      %v1831 = vpop.f32.mrb[0].mxu0
      %v1832 = vpop.f32.mrb[0].mxu0
      %v1833 = vadd.f32 0.0, %v1832
      %v1834 = vpop.f32.mrb[0].mxu0
      %1835 = vmatprep.mubr.bf16.mxu0 0
      %1836 = vmatmul.mubr.bf16.gmra.mrb[0].mxu0 %v1718
      %v1837 = vpop.f32.mrb[0].mxu0
      %v1838 = vadd.f32 0.0, %v1837
      %v1839 = vpop.f32.mrb[0].mxu0
      %v1840 = vpop.f32.mrb[0].mxu0
      %v1841 = vadd.f32 0.0, %v1840
      %v1842 = vpop.f32.mrb[0].mxu0
      %1843 = vmatprep.mubr.bf16.mxu0 0
      %1844 = vmatmul.mubr.bf16.gmra.mrb[0].mxu0 %v1721
      %v1845 = vpop.f32.mrb[0].mxu0
      %v1846 = vadd.f32 0.0, %v1845
      %v1847 = vpop.f32.mrb[0].mxu0
      %v1848 = vpop.f32.mrb[0].mxu0
      %v1849 = vadd.f32 0.0, %v1848
      %v1850 = vpop.f32.mrb[0].mxu0
      %1851 = vmatprep.mubr.bf16.mxu0 0
      %1852 = vmatmul.mubr.bf16.gmra.mrb[0].mxu0 %v1724
      %v1853 = vpop.f32.mrb[0].mxu0
      %v1854 = vadd.f32 0.0, %v1853
      %v1855 = vpop.f32.mrb[0].mxu0
      %v1856 = vpop.f32.mrb[0].mxu0
      %v1857 = vadd.f32 0.0, %v1856
      %v1858 = vpop.f32.mrb[0].mxu0
      %1859 = vmatprep.mubr.bf16.mxu0 0
      %1860 = vmatmul.mubr.bf16.gmra.mrb[0].mxu0 %v1727
      %v1861 = vpop.f32.mrb[0].mxu0
      %v1862 = vadd.f32 0.0, %v1861
      %v1863 = vpop.f32.mrb[0].mxu0
      %v1864 = vpop.f32.mrb[0].mxu0
      %v1865 = vadd.f32 0.0, %v1864
      %v1866 = vpop.f32.mrb[0].mxu0
      %1867 = vmatprep.mubr.bf16.mxu0 0
      %1868 = vmatmul.mubr.bf16.gmra.mrb[0].mxu0 %v1730
      %v1869 = vpop.f32.mrb[0].mxu0
      %v1870 = vadd.f32 0.0, %v1869
      %v1871 = vpop.f32.mrb[0].mxu0
      %v1872 = vpop.f32.mrb[0].mxu0
      %v1873 = vadd.f32 0.0, %v1872
      %v1874 = vpop.f32.mrb[0].mxu0
      %1875 = vmatprep.mubr.bf16.mxu0 0
      %1876 = vmatmul.mubr.bf16.gmra.mrb[0].mxu0 %v1733
      %v1877 = vpop.f32.mrb[0].mxu0
      %v1878 = vadd.f32 0.0, %v1877
      %v1879 = vpop.f32.mrb[0].mxu0
      %v1880 = vpop.f32.mrb[0].mxu0
      %v1881 = vadd.f32 0.0, %v1880
      %v1882 = vpop.f32.mrb[0].mxu0
      %1883 = vmatprep.mubr.bf16.mxu0 0
      %1884 = vmatmul.mubr.bf16.gmra.mrb[0].mxu0 %v1736
      %v1885 = vpop.f32.mrb[0].mxu0
      %v1886 = vadd.f32 0.0, %v1885
      %v1887 = vpop.f32.mrb[0].mxu0
      %v1888 = vpop.f32.mrb[0].mxu0
      %v1889 = vadd.f32 0.0, %v1888
      %v1890 = vpop.f32.mrb[0].mxu0
      %1891 = vmatprep.mubr.bf16.mxu0 0
      %1892 = vmatmul.mubr.bf16.gmra.mrb[0].mxu0 %v1739
      %v1893 = vpop.f32.mrb[0].mxu0
      %v1894 = vadd.f32 0.0, %v1893
      %v1895 = vpop.f32.mrb[0].mxu0
      %v1896 = vpop.f32.mrb[0].mxu0
      %v1897 = vadd.f32 0.0, %v1896
      %v1898 = vpop.f32.mrb[0].mxu0
      %1899 = vmatprep.mubr.bf16.mxu0 0
      %1900 = vmatmul.mubr.bf16.gmra.mrb[0].mxu0 %v1742
      %v1901 = vpop.f32.mrb[0].mxu0
      %v1902 = vadd.f32 0.0, %v1901
      %v1903 = vpop.f32.mrb[0].mxu0
      %v1904 = vpop.f32.mrb[0].mxu0
      %v1905 = vadd.f32 0.0, %v1904
      %v1906 = vpop.f32.mrb[0].mxu0
      %1907 = vdwg.mxu0
      %v1908 = vadd.f32 %v1501, %v1782
      %v1909 = vadd.f32 %v1504, %v1785
      %v1910 = vadd.f32 %v1509, %v1790
      %v1911 = vadd.f32 %v1512, %v1793
      %v1912 = vadd.f32 %v1517, %v1798
      %v1913 = vadd.f32 %v1520, %v1801
      %v1914 = vadd.f32 %v1525, %v1806
      %v1915 = vadd.f32 %v1528, %v1809
      %v1916 = vadd.f32 %v1533, %v1814
      %v1917 = vadd.f32 %v1536, %v1817
      %v1918 = vadd.f32 %v1541, %v1822
      %v1919 = vadd.f32 %v1544, %v1825
      %v1920 = vadd.f32 %v1549, %v1830
      %v1921 = vadd.f32 %v1552, %v1833
      %v1922 = vadd.f32 %v1557, %v1838
      %v1923 = vadd.f32 %v1560, %v1841
      %v1924 = vadd.f32 %v1565, %v1846
      %v1925 = vadd.f32 %v1568, %v1849
      %v1926 = vadd.f32 %v1573, %v1854
      %v1927 = vadd.f32 %v1576, %v1857
      %v1928 = vadd.f32 %v1581, %v1862
      %v1929 = vadd.f32 %v1584, %v1865
      %v1930 = vadd.f32 %v1589, %v1870
      %v1931 = vadd.f32 %v1592, %v1873
      %v1932 = vadd.f32 %v1597, %v1878
      %v1933 = vadd.f32 %v1600, %v1881
      %v1934 = vadd.f32 %v1605, %v1886
      %v1935 = vadd.f32 %v1608, %v1889
      %v1936 = vadd.f32 %v1613, %v1894
      %v1937 = vadd.f32 %v1616, %v1897
      %v1938 = vadd.f32 %v1621, %v1902
      %v1939 = vadd.f32 %v1624, %v1905
      %v1940 = vld [vmem:[#allocation2] sm:$0xf8]
      %v1941 = vld [vmem:[%s3] sm:$0x3]
      %v1942 = vld [vmem:[#allocation2 + $0x8] sm:$0xf8]
      %s1943 = scalar_lea.vmem %s3, 6
      %v1944 = vld [vmem:[%s1943] sm:$0x3]
      %vm1945 = vsmask.f32 4352
      %v1947 = vshrl.u32 %v1942, 16
      %v1949 = vrot.slane %v1947, 3
      %v1950 = vshll.u32 %v1942, 16
      %v1952 = vrot.slane %v1950, 4
      %v1953 = vor.u32 %v1949, %v1952
      %v1955 = vshrl.u32 %v1160, 16
      %v1957 = vrot.slane %v1955, 3
      %v1958 = vshll.u32 %v1160, 16
      %v1960 = vrot.slane %v1958, 4
      %v1961 = vor.u32 %v1957, %v1960
      %v1962 = vsel %vm1945, %v1953, %v1961
      %v1964 = vshrl.u32 %v1161, 16
      %v1966 = vrot.slane %v1964, 3
      %v1967 = vshll.u32 %v1161, 16
      %v1969 = vrot.slane %v1967, 4
      %v1970 = vor.u32 %v1966, %v1969
      %v1971 = vsel %vm1945, %v1961, %v1970
      %v1973 = vshrl.u32 %v1162, 16
      %v1975 = vrot.slane %v1973, 3
      %v1976 = vshll.u32 %v1162, 16
      %v1978 = vrot.slane %v1976, 4
      %v1979 = vor.u32 %v1975, %v1978
      %v1980 = vsel %vm1945, %v1970, %v1979
      %v1982 = vshrl.u32 %v1163, 16
      %v1984 = vrot.slane %v1982, 3
      %v1985 = vshll.u32 %v1163, 16
      %v1987 = vrot.slane %v1985, 4
      %v1988 = vor.u32 %v1984, %v1987
      %v1989 = vsel %vm1945, %v1979, %v1988
      %v1991 = vshrl.u32 %v1164, 16
      %v1993 = vrot.slane %v1991, 3
      %v1994 = vshll.u32 %v1164, 16
      %v1996 = vrot.slane %v1994, 4
      %v1997 = vor.u32 %v1993, %v1996
      %v1998 = vsel %vm1945, %v1988, %v1997
      %v2000 = vshrl.u32 %v1165, 16
      %v2002 = vrot.slane %v2000, 3
      %v2003 = vshll.u32 %v1165, 16
      %v2005 = vrot.slane %v2003, 4
      %v2006 = vor.u32 %v2002, %v2005
      %v2007 = vsel %vm1945, %v1997, %v2006
      %v2009 = vshrl.u32 %v1166, 16
      %v2011 = vrot.slane %v2009, 3
      %v2012 = vshll.u32 %v1166, 16
      %v2014 = vrot.slane %v2012, 4
      %v2015 = vor.u32 %v2011, %v2014
      %v2016 = vsel %vm1945, %v2006, %v2015
      %v2018 = vshrl.u32 %v1167, 16
      %v2020 = vrot.slane %v2018, 3
      %v2021 = vshll.u32 %v1167, 16
      %v2023 = vrot.slane %v2021, 4
      %v2024 = vor.u32 %v2020, %v2023
      %v2025 = vsel %vm1945, %v2015, %v2024
      %v2027 = vshrl.u32 %v1168, 16
      %v2029 = vrot.slane %v2027, 3
      %v2030 = vshll.u32 %v1168, 16
      %v2032 = vrot.slane %v2030, 4
      %v2033 = vor.u32 %v2029, %v2032
      %v2034 = vsel %vm1945, %v2024, %v2033
      %v2036 = vshrl.u32 %v1169, 16
      %v2038 = vrot.slane %v2036, 3
      %v2039 = vshll.u32 %v1169, 16
      %v2041 = vrot.slane %v2039, 4
      %v2042 = vor.u32 %v2038, %v2041
      %v2043 = vsel %vm1945, %v2033, %v2042
      %v2045 = vshrl.u32 %v1170, 16
      %v2047 = vrot.slane %v2045, 3
      %v2048 = vshll.u32 %v1170, 16
      %v2050 = vrot.slane %v2048, 4
      %v2051 = vor.u32 %v2047, %v2050
      %v2052 = vsel %vm1945, %v2042, %v2051
      %v2054 = vshrl.u32 %v1171, 16
      %v2056 = vrot.slane %v2054, 3
      %v2057 = vshll.u32 %v1171, 16
      %v2059 = vrot.slane %v2057, 4
      %v2060 = vor.u32 %v2056, %v2059
      %v2061 = vsel %vm1945, %v2051, %v2060
      %v2063 = vshrl.u32 %v1172, 16
      %v2065 = vrot.slane %v2063, 3
      %v2066 = vshll.u32 %v1172, 16
      %v2068 = vrot.slane %v2066, 4
      %v2069 = vor.u32 %v2065, %v2068
      %v2070 = vsel %vm1945, %v2060, %v2069
      %v2072 = vshrl.u32 %v1173, 16
      %v2074 = vrot.slane %v2072, 3
      %v2075 = vshll.u32 %v1173, 16
      %v2077 = vrot.slane %v2075, 4
      %v2078 = vor.u32 %v2074, %v2077
      %v2079 = vsel %vm1945, %v2069, %v2078
      %v2081 = vshrl.u32 %v1178, 16
      %v2083 = vrot.slane %v2081, 3
      %v2084 = vshll.u32 %v1178, 16
      %v2086 = vrot.slane %v2084, 4
      %v2087 = vor.u32 %v2083, %v2086
      %v2088 = vsel %vm1945, %v2078, %v2087
      %v2090 = vshrl.u32 %v1179, 16
      %v2092 = vrot.slane %v2090, 3
      %v2093 = vshll.u32 %v1179, 16
      %v2095 = vrot.slane %v2093, 4
      %v2096 = vor.u32 %v2092, %v2095
      %v2097 = vsel %vm1945, %v2087, %v2096
      %v2099 = vsel %vm444, %v1962, 0
      %v2102 = vsel %vm444, %v1971, 0
      %v2105 = vsel %vm444, %v1980, 0
      %v2108 = vsel %vm444, %v1989, 0
      %v2111 = vsel %vm444, %v1998, 0
      %v2114 = vsel %vm444, %v2007, 0
      %v2117 = vsel %vm444, %v2016, 0
      %v2120 = vsel %vm444, %v2025, 0
      %v2123 = vsel %vm444, %v2034, 0
      %v2126 = vsel %vm444, %v2043, 0
      %v2129 = vsel %vm444, %v2052, 0
      %v2132 = vsel %vm444, %v2061, 0
      %v2135 = vsel %vm444, %v2070, 0
      %v2138 = vsel %vm444, %v2079, 0
      %v2141 = vsel %vm444, %v2088, 0
      %v2144 = vsel %vm444, %v2097, 0
      %v2147 = vsel %vm1280, %v1944, 0
      %2149 = vmatprep.subr.bf16.mxu0 0
      %2150 = vmatpush1.bf16.msra.mxu0 %v2147
      %2151 = vmatprep.subr.bf16.mxu0 0
      %2152 = vmatpush1.bf16.msra.mxu0 0
      %2153 = vmatprep.subr.bf16.mxu0 0
      %2154 = vmatpush1.bf16.msra.mxu0 0
      %2155 = vmatprep.subr.bf16.mxu0 0
      %2156 = vmatpush1.bf16.msra.mxu0 0
      %2157 = vmatprep.subr.bf16.mxu0 0
      %2158 = vmatpush1.bf16.msra.mxu0 0
      %2159 = vmatprep.subr.bf16.mxu0 0
      %2160 = vmatpush1.bf16.msra.mxu0 0
      %2161 = vmatprep.subr.bf16.mxu0 0
      %2162 = vmatpush1.bf16.msra.mxu0 0
      %2163 = vmatprep.subr.bf16.mxu0 0
      %2164 = vmatpush1.bf16.msra.mxu0 0
      %2165 = vmatprep.subr.bf16.mxu0 0
      %2166 = vmatpush1.bf16.msra.mxu0 0
      %2167 = vmatprep.subr.bf16.mxu0 0
      %2168 = vmatpush1.bf16.msra.mxu0 0
      %2169 = vmatprep.subr.bf16.mxu0 0
      %2170 = vmatpush1.bf16.msra.mxu0 0
      %2171 = vmatprep.subr.bf16.mxu0 0
      %2172 = vmatpush1.bf16.msra.mxu0 0
      %2173 = vmatprep.subr.bf16.mxu0 0
      %2174 = vmatpush1.bf16.msra.mxu0 0
      %2175 = vmatprep.subr.bf16.mxu0 0
      %2176 = vmatpush1.bf16.msra.mxu0 0
      %2177 = vmatprep.subr.bf16.mxu0 0
      %2178 = vmatpush1.bf16.msra.mxu0 0
      %2179 = vmatprep.subr.bf16.mxu0 0
      %2180 = vmatpush1.bf16.msra.mxu0 0
      %2181 = vmatprep.mubr.bf16.mxu0 0
      %2182 = vmatmul.mubr.bf16.gmra.mrb[0].mxu0 %v2099
      %v2183 = vpop.f32.mrb[0].mxu0
      %v2184 = vadd.f32 0.0, %v2183
      %v2185 = vpop.f32.mrb[0].mxu0
      %v2186 = vpop.f32.mrb[0].mxu0
      %v2187 = vadd.f32 0.0, %v2186
      %v2188 = vpop.f32.mrb[0].mxu0
      %2189 = vmatprep.mubr.bf16.mxu0 0
      %2190 = vmatmul.mubr.bf16.gmra.mrb[0].mxu0 %v2102
      %v2191 = vpop.f32.mrb[0].mxu0
      %v2192 = vadd.f32 0.0, %v2191
      %v2193 = vpop.f32.mrb[0].mxu0
      %v2194 = vpop.f32.mrb[0].mxu0
      %v2195 = vadd.f32 0.0, %v2194
      %v2196 = vpop.f32.mrb[0].mxu0
      %2197 = vmatprep.mubr.bf16.mxu0 0
      %2198 = vmatmul.mubr.bf16.gmra.mrb[0].mxu0 %v2105
      %v2199 = vpop.f32.mrb[0].mxu0
      %v2200 = vadd.f32 0.0, %v2199
      %v2201 = vpop.f32.mrb[0].mxu0
      %v2202 = vpop.f32.mrb[0].mxu0
      %v2203 = vadd.f32 0.0, %v2202
      %v2204 = vpop.f32.mrb[0].mxu0
      %2205 = vmatprep.mubr.bf16.mxu0 0
      %2206 = vmatmul.mubr.bf16.gmra.mrb[0].mxu0 %v2108
      %v2207 = vpop.f32.mrb[0].mxu0
      %v2208 = vadd.f32 0.0, %v2207
      %v2209 = vpop.f32.mrb[0].mxu0
      %v2210 = vpop.f32.mrb[0].mxu0
      %v2211 = vadd.f32 0.0, %v2210
      %v2212 = vpop.f32.mrb[0].mxu0
      %2213 = vmatprep.mubr.bf16.mxu0 0
      %2214 = vmatmul.mubr.bf16.gmra.mrb[0].mxu0 %v2111
      %v2215 = vpop.f32.mrb[0].mxu0
      %v2216 = vadd.f32 0.0, %v2215
      %v2217 = vpop.f32.mrb[0].mxu0
      %v2218 = vpop.f32.mrb[0].mxu0
      %v2219 = vadd.f32 0.0, %v2218
      %v2220 = vpop.f32.mrb[0].mxu0
      %2221 = vmatprep.mubr.bf16.mxu0 0
      %2222 = vmatmul.mubr.bf16.gmra.mrb[0].mxu0 %v2114
      %v2223 = vpop.f32.mrb[0].mxu0
      %v2224 = vadd.f32 0.0, %v2223
      %v2225 = vpop.f32.mrb[0].mxu0
      %v2226 = vpop.f32.mrb[0].mxu0
      %v2227 = vadd.f32 0.0, %v2226
      %v2228 = vpop.f32.mrb[0].mxu0
      %2229 = vmatprep.mubr.bf16.mxu0 0
      %2230 = vmatmul.mubr.bf16.gmra.mrb[0].mxu0 %v2117
      %v2231 = vpop.f32.mrb[0].mxu0
      %v2232 = vadd.f32 0.0, %v2231
      %v2233 = vpop.f32.mrb[0].mxu0
      %v2234 = vpop.f32.mrb[0].mxu0
      %v2235 = vadd.f32 0.0, %v2234
      %v2236 = vpop.f32.mrb[0].mxu0
      %2237 = vmatprep.mubr.bf16.mxu0 0
      %2238 = vmatmul.mubr.bf16.gmra.mrb[0].mxu0 %v2120
      %v2239 = vpop.f32.mrb[0].mxu0
      %v2240 = vadd.f32 0.0, %v2239
      %v2241 = vpop.f32.mrb[0].mxu0
      %v2242 = vpop.f32.mrb[0].mxu0
      %v2243 = vadd.f32 0.0, %v2242
      %v2244 = vpop.f32.mrb[0].mxu0
      %2245 = vmatprep.mubr.bf16.mxu0 0
      %2246 = vmatmul.mubr.bf16.gmra.mrb[0].mxu0 %v2123
      %v2247 = vpop.f32.mrb[0].mxu0
      %v2248 = vadd.f32 0.0, %v2247
      %v2249 = vpop.f32.mrb[0].mxu0
      %v2250 = vpop.f32.mrb[0].mxu0
      %v2251 = vadd.f32 0.0, %v2250
      %v2252 = vpop.f32.mrb[0].mxu0
      %2253 = vmatprep.mubr.bf16.mxu0 0
      %2254 = vmatmul.mubr.bf16.gmra.mrb[0].mxu0 %v2126
      %v2255 = vpop.f32.mrb[0].mxu0
      %v2256 = vadd.f32 0.0, %v2255
      %v2257 = vpop.f32.mrb[0].mxu0
      %v2258 = vpop.f32.mrb[0].mxu0
      %v2259 = vadd.f32 0.0, %v2258
      %v2260 = vpop.f32.mrb[0].mxu0
      %2261 = vmatprep.mubr.bf16.mxu0 0
      %2262 = vmatmul.mubr.bf16.gmra.mrb[0].mxu0 %v2129
      %v2263 = vpop.f32.mrb[0].mxu0
      %v2264 = vadd.f32 0.0, %v2263
      %v2265 = vpop.f32.mrb[0].mxu0
      %v2266 = vpop.f32.mrb[0].mxu0
      %v2267 = vadd.f32 0.0, %v2266
      %v2268 = vpop.f32.mrb[0].mxu0
      %2269 = vmatprep.mubr.bf16.mxu0 0
      %2270 = vmatmul.mubr.bf16.gmra.mrb[0].mxu0 %v2132
      %v2271 = vpop.f32.mrb[0].mxu0
      %v2272 = vadd.f32 0.0, %v2271
      %v2273 = vpop.f32.mrb[0].mxu0
      %v2274 = vpop.f32.mrb[0].mxu0
      %v2275 = vadd.f32 0.0, %v2274
      %v2276 = vpop.f32.mrb[0].mxu0
      %2277 = vmatprep.mubr.bf16.mxu0 0
      %2278 = vmatmul.mubr.bf16.gmra.mrb[0].mxu0 %v2135
      %v2279 = vpop.f32.mrb[0].mxu0
      %v2280 = vadd.f32 0.0, %v2279
      %v2281 = vpop.f32.mrb[0].mxu0
      %v2282 = vpop.f32.mrb[0].mxu0
      %v2283 = vadd.f32 0.0, %v2282
      %v2284 = vpop.f32.mrb[0].mxu0
      %2285 = vmatprep.mubr.bf16.mxu0 0
      %2286 = vmatmul.mubr.bf16.gmra.mrb[0].mxu0 %v2138
      %v2287 = vpop.f32.mrb[0].mxu0
      %v2288 = vadd.f32 0.0, %v2287
      %v2289 = vpop.f32.mrb[0].mxu0
      %v2290 = vpop.f32.mrb[0].mxu0
      %v2291 = vadd.f32 0.0, %v2290
      %v2292 = vpop.f32.mrb[0].mxu0
      %2293 = vmatprep.mubr.bf16.mxu0 0
      %2294 = vmatmul.mubr.bf16.gmra.mrb[0].mxu0 %v2141
      %v2295 = vpop.f32.mrb[0].mxu0
      %v2296 = vadd.f32 0.0, %v2295
      %v2297 = vpop.f32.mrb[0].mxu0
      %v2298 = vpop.f32.mrb[0].mxu0
      %v2299 = vadd.f32 0.0, %v2298
      %v2300 = vpop.f32.mrb[0].mxu0
      %2301 = vmatprep.mubr.bf16.mxu0 0
      %2302 = vmatmul.mubr.bf16.gmra.mrb[0].mxu0 %v2144
      %v2303 = vpop.f32.mrb[0].mxu0
      %v2304 = vadd.f32 0.0, %v2303
      %v2305 = vpop.f32.mrb[0].mxu0
      %v2306 = vpop.f32.mrb[0].mxu0
      %v2307 = vadd.f32 0.0, %v2306
      %v2308 = vpop.f32.mrb[0].mxu0
      %2309 = vdwg.mxu0
      %v2311 = vshrl.u32 %v1940, 16
      %v2313 = vrot.slane %v2311, 3
      %v2314 = vshll.u32 %v1940, 16
      %v2316 = vrot.slane %v2314, 4
      %v2317 = vor.u32 %v2313, %v2316
      %v2319 = vshrl.u32 %v1159, 16
      %v2321 = vrot.slane %v2319, 3
      %v2322 = vshll.u32 %v1159, 16
      %v2324 = vrot.slane %v2322, 4
      %v2325 = vor.u32 %v2321, %v2324
      %v2326 = vsel %vm1945, %v2317, %v2325
      %v2327 = vsel %vm1945, %v2325, %v1961
      %v2329 = vshrl.u32 %v1174, 16
      %v2331 = vrot.slane %v2329, 3
      %v2332 = vshll.u32 %v1174, 16
      %v2334 = vrot.slane %v2332, 4
      %v2335 = vor.u32 %v2331, %v2334
      %v2336 = vsel %vm1945, %v2078, %v2335
      %v2338 = vsel %vm444, %v2326, 0
      %v2341 = vsel %vm444, %v2327, 0
      %v2344 = vsel %vm444, %v2336, 0
      %v2347 = vsel %vm1280, %v1941, 0
      %2349 = vmatprep.subr.bf16.mxu0 0
      %2350 = vmatpush1.bf16.msra.mxu0 %v2347
      %2351 = vmatprep.subr.bf16.mxu0 0
      %2352 = vmatpush1.bf16.msra.mxu0 0
      %2353 = vmatprep.subr.bf16.mxu0 0
      %2354 = vmatpush1.bf16.msra.mxu0 0
      %2355 = vmatprep.subr.bf16.mxu0 0
      %2356 = vmatpush1.bf16.msra.mxu0 0
      %2357 = vmatprep.subr.bf16.mxu0 0
      %2358 = vmatpush1.bf16.msra.mxu0 0
      %2359 = vmatprep.subr.bf16.mxu0 0
      %2360 = vmatpush1.bf16.msra.mxu0 0
      %2361 = vmatprep.subr.bf16.mxu0 0
      %2362 = vmatpush1.bf16.msra.mxu0 0
      %2363 = vmatprep.subr.bf16.mxu0 0
      %2364 = vmatpush1.bf16.msra.mxu0 0
      %2365 = vmatprep.subr.bf16.mxu0 0
      %2366 = vmatpush1.bf16.msra.mxu0 0
      %2367 = vmatprep.subr.bf16.mxu0 0
      %2368 = vmatpush1.bf16.msra.mxu0 0
      %2369 = vmatprep.subr.bf16.mxu0 0
      %2370 = vmatpush1.bf16.msra.mxu0 0
      %2371 = vmatprep.subr.bf16.mxu0 0
      %2372 = vmatpush1.bf16.msra.mxu0 0
      %2373 = vmatprep.subr.bf16.mxu0 0
      %2374 = vmatpush1.bf16.msra.mxu0 0
      %2375 = vmatprep.subr.bf16.mxu0 0
      %2376 = vmatpush1.bf16.msra.mxu0 0
      %2377 = vmatprep.subr.bf16.mxu0 0
      %2378 = vmatpush1.bf16.msra.mxu0 0
      %2379 = vmatprep.subr.bf16.mxu0 0
      %2380 = vmatpush1.bf16.msra.mxu0 0
      %2381 = vmatprep.mubr.bf16.mxu0 0
      %2382 = vmatmul.mubr.bf16.gmra.mrb[0].mxu0 %v2338
      %v2383 = vpop.f32.mrb[0].mxu0
      %v2384 = vadd.f32 %v2184, %v2383
      %v2385 = vpop.f32.mrb[0].mxu0
      %v2386 = vpop.f32.mrb[0].mxu0
      %v2387 = vadd.f32 %v2187, %v2386
      %v2388 = vpop.f32.mrb[0].mxu0
      %2389 = vmatprep.mubr.bf16.mxu0 0
      %2390 = vmatmul.mubr.bf16.gmra.mrb[0].mxu0 %v2341
      %v2391 = vpop.f32.mrb[0].mxu0
      %v2392 = vadd.f32 %v2192, %v2391
      %v2393 = vpop.f32.mrb[0].mxu0
      %v2394 = vpop.f32.mrb[0].mxu0
      %v2395 = vadd.f32 %v2195, %v2394
      %v2396 = vpop.f32.mrb[0].mxu0
      %2397 = vmatprep.mubr.bf16.mxu0 0
      %2398 = vmatmul.mubr.bf16.gmra.mrb[0].mxu0 %v2102
      %v2399 = vpop.f32.mrb[0].mxu0
      %v2400 = vadd.f32 %v2200, %v2399
      %v2401 = vpop.f32.mrb[0].mxu0
      %v2402 = vpop.f32.mrb[0].mxu0
      %v2403 = vadd.f32 %v2203, %v2402
      %v2404 = vpop.f32.mrb[0].mxu0
      %2405 = vmatprep.mubr.bf16.mxu0 0
      %2406 = vmatmul.mubr.bf16.gmra.mrb[0].mxu0 %v2105
      %v2407 = vpop.f32.mrb[0].mxu0
      %v2408 = vadd.f32 %v2208, %v2407
      %v2409 = vpop.f32.mrb[0].mxu0
      %v2410 = vpop.f32.mrb[0].mxu0
      %v2411 = vadd.f32 %v2211, %v2410
      %v2412 = vpop.f32.mrb[0].mxu0
      %2413 = vmatprep.mubr.bf16.mxu0 0
      %2414 = vmatmul.mubr.bf16.gmra.mrb[0].mxu0 %v2108
      %v2415 = vpop.f32.mrb[0].mxu0
      %v2416 = vadd.f32 %v2216, %v2415
      %v2417 = vpop.f32.mrb[0].mxu0
      %v2418 = vpop.f32.mrb[0].mxu0
      %v2419 = vadd.f32 %v2219, %v2418
      %v2420 = vpop.f32.mrb[0].mxu0
      %2421 = vmatprep.mubr.bf16.mxu0 0
      %2422 = vmatmul.mubr.bf16.gmra.mrb[0].mxu0 %v2111
      %v2423 = vpop.f32.mrb[0].mxu0
      %v2424 = vadd.f32 %v2224, %v2423
      %v2425 = vpop.f32.mrb[0].mxu0
      %v2426 = vpop.f32.mrb[0].mxu0
      %v2427 = vadd.f32 %v2227, %v2426
      %v2428 = vpop.f32.mrb[0].mxu0
      %2429 = vmatprep.mubr.bf16.mxu0 0
      %2430 = vmatmul.mubr.bf16.gmra.mrb[0].mxu0 %v2114
      %v2431 = vpop.f32.mrb[0].mxu0
      %v2432 = vadd.f32 %v2232, %v2431
      %v2433 = vpop.f32.mrb[0].mxu0
      %v2434 = vpop.f32.mrb[0].mxu0
      %v2435 = vadd.f32 %v2235, %v2434
      %v2436 = vpop.f32.mrb[0].mxu0
      %2437 = vmatprep.mubr.bf16.mxu0 0
      %2438 = vmatmul.mubr.bf16.gmra.mrb[0].mxu0 %v2117
      %v2439 = vpop.f32.mrb[0].mxu0
      %v2440 = vadd.f32 %v2240, %v2439
      %v2441 = vpop.f32.mrb[0].mxu0
      %v2442 = vpop.f32.mrb[0].mxu0
      %v2443 = vadd.f32 %v2243, %v2442
      %v2444 = vpop.f32.mrb[0].mxu0
      %2445 = vmatprep.mubr.bf16.mxu0 0
      %2446 = vmatmul.mubr.bf16.gmra.mrb[0].mxu0 %v2120
      %v2447 = vpop.f32.mrb[0].mxu0
      %v2448 = vadd.f32 %v2248, %v2447
      %v2449 = vpop.f32.mrb[0].mxu0
      %v2450 = vpop.f32.mrb[0].mxu0
      %v2451 = vadd.f32 %v2251, %v2450
      %v2452 = vpop.f32.mrb[0].mxu0
      %2453 = vmatprep.mubr.bf16.mxu0 0
      %2454 = vmatmul.mubr.bf16.gmra.mrb[0].mxu0 %v2123
      %v2455 = vpop.f32.mrb[0].mxu0
      %v2456 = vadd.f32 %v2256, %v2455
      %v2457 = vpop.f32.mrb[0].mxu0
      %v2458 = vpop.f32.mrb[0].mxu0
      %v2459 = vadd.f32 %v2259, %v2458
      %v2460 = vpop.f32.mrb[0].mxu0
      %2461 = vmatprep.mubr.bf16.mxu0 0
      %2462 = vmatmul.mubr.bf16.gmra.mrb[0].mxu0 %v2126
      %v2463 = vpop.f32.mrb[0].mxu0
      %v2464 = vadd.f32 %v2264, %v2463
      %v2465 = vpop.f32.mrb[0].mxu0
      %v2466 = vpop.f32.mrb[0].mxu0
      %v2467 = vadd.f32 %v2267, %v2466
      %v2468 = vpop.f32.mrb[0].mxu0
      %2469 = vmatprep.mubr.bf16.mxu0 0
      %2470 = vmatmul.mubr.bf16.gmra.mrb[0].mxu0 %v2129
      %v2471 = vpop.f32.mrb[0].mxu0
      %v2472 = vadd.f32 %v2272, %v2471
      %v2473 = vpop.f32.mrb[0].mxu0
      %v2474 = vpop.f32.mrb[0].mxu0
      %v2475 = vadd.f32 %v2275, %v2474
      %v2476 = vpop.f32.mrb[0].mxu0
      %2477 = vmatprep.mubr.bf16.mxu0 0
      %2478 = vmatmul.mubr.bf16.gmra.mrb[0].mxu0 %v2132
      %v2479 = vpop.f32.mrb[0].mxu0
      %v2480 = vadd.f32 %v2280, %v2479
      %v2481 = vpop.f32.mrb[0].mxu0
      %v2482 = vpop.f32.mrb[0].mxu0
      %v2483 = vadd.f32 %v2283, %v2482
      %v2484 = vpop.f32.mrb[0].mxu0
      %2485 = vmatprep.mubr.bf16.mxu0 0
      %2486 = vmatmul.mubr.bf16.gmra.mrb[0].mxu0 %v2135
      %v2487 = vpop.f32.mrb[0].mxu0
      %v2488 = vadd.f32 %v2288, %v2487
      %v2489 = vpop.f32.mrb[0].mxu0
      %v2490 = vpop.f32.mrb[0].mxu0
      %v2491 = vadd.f32 %v2291, %v2490
      %v2492 = vpop.f32.mrb[0].mxu0
      %2493 = vmatprep.mubr.bf16.mxu0 0
      %2494 = vmatmul.mubr.bf16.gmra.mrb[0].mxu0 %v2138
      %v2495 = vpop.f32.mrb[0].mxu0
      %v2496 = vadd.f32 %v2296, %v2495
      %v2497 = vpop.f32.mrb[0].mxu0
      %v2498 = vpop.f32.mrb[0].mxu0
      %v2499 = vadd.f32 %v2299, %v2498
      %v2500 = vpop.f32.mrb[0].mxu0
      %2501 = vmatprep.mubr.bf16.mxu0 0
      %2502 = vmatmul.mubr.bf16.gmra.mrb[0].mxu0 %v2344
      %v2503 = vpop.f32.mrb[0].mxu0
      %v2504 = vadd.f32 %v2304, %v2503
      %v2505 = vpop.f32.mrb[0].mxu0
      %v2506 = vpop.f32.mrb[0].mxu0
      %v2507 = vadd.f32 %v2307, %v2506
      %v2508 = vpop.f32.mrb[0].mxu0
      %2509 = vdwg.mxu0
      %v2510 = vld [vmem:[#allocation2 + $0x10] sm:$0xf8]
      %s2511 = scalar_lea.vmem %s3, 12
      %v2512 = vld [vmem:[%s2511] sm:$0x3]
      %v2514 = vshrl.u32 %v2510, 16
      %v2516 = vrot.slane %v2514, 3
      %v2517 = vshll.u32 %v2510, 16
      %v2519 = vrot.slane %v2517, 4
      %v2520 = vor.u32 %v2516, %v2519
      %v2522 = vshrl.u32 %v1628, 16
      %v2524 = vrot.slane %v2522, 3
      %v2525 = vshll.u32 %v1628, 16
      %v2527 = vrot.slane %v2525, 4
      %v2528 = vor.u32 %v2524, %v2527
      %v2529 = vsel %vm1945, %v2520, %v2528
      %v2531 = vshrl.u32 %v1629, 16
      %v2533 = vrot.slane %v2531, 3
      %v2534 = vshll.u32 %v1629, 16
      %v2536 = vrot.slane %v2534, 4
      %v2537 = vor.u32 %v2533, %v2536
      %v2538 = vsel %vm1945, %v2528, %v2537
      %v2540 = vshrl.u32 %v1630, 16
      %v2542 = vrot.slane %v2540, 3
      %v2543 = vshll.u32 %v1630, 16
      %v2545 = vrot.slane %v2543, 4
      %v2546 = vor.u32 %v2542, %v2545
      %v2547 = vsel %vm1945, %v2537, %v2546
      %v2549 = vshrl.u32 %v1631, 16
      %v2551 = vrot.slane %v2549, 3
      %v2552 = vshll.u32 %v1631, 16
      %v2554 = vrot.slane %v2552, 4
      %v2555 = vor.u32 %v2551, %v2554
      %v2556 = vsel %vm1945, %v2546, %v2555
      %v2558 = vshrl.u32 %v1632, 16
      %v2560 = vrot.slane %v2558, 3
      %v2561 = vshll.u32 %v1632, 16
      %v2563 = vrot.slane %v2561, 4
      %v2564 = vor.u32 %v2560, %v2563
      %v2565 = vsel %vm1945, %v2555, %v2564
      %v2567 = vshrl.u32 %v1633, 16
      %v2569 = vrot.slane %v2567, 3
      %v2570 = vshll.u32 %v1633, 16
      %v2572 = vrot.slane %v2570, 4
      %v2573 = vor.u32 %v2569, %v2572
      %v2574 = vsel %vm1945, %v2564, %v2573
      %v2576 = vshrl.u32 %v1634, 16
      %v2578 = vrot.slane %v2576, 3
      %v2579 = vshll.u32 %v1634, 16
      %v2581 = vrot.slane %v2579, 4
      %v2582 = vor.u32 %v2578, %v2581
      %v2583 = vsel %vm1945, %v2573, %v2582
      %v2585 = vshrl.u32 %v1635, 16
      %v2587 = vrot.slane %v2585, 3
      %v2588 = vshll.u32 %v1635, 16
      %v2590 = vrot.slane %v2588, 4
      %v2591 = vor.u32 %v2587, %v2590
      %v2592 = vsel %vm1945, %v2582, %v2591
      %v2594 = vshrl.u32 %v1636, 16
      %v2596 = vrot.slane %v2594, 3
      %v2597 = vshll.u32 %v1636, 16
      %v2599 = vrot.slane %v2597, 4
      %v2600 = vor.u32 %v2596, %v2599
      %v2601 = vsel %vm1945, %v2591, %v2600
      %v2603 = vshrl.u32 %v1637, 16
      %v2605 = vrot.slane %v2603, 3
      %v2606 = vshll.u32 %v1637, 16
      %v2608 = vrot.slane %v2606, 4
      %v2609 = vor.u32 %v2605, %v2608
      %v2610 = vsel %vm1945, %v2600, %v2609
      %v2612 = vshrl.u32 %v1638, 16
      %v2614 = vrot.slane %v2612, 3
      %v2615 = vshll.u32 %v1638, 16
      %v2617 = vrot.slane %v2615, 4
      %v2618 = vor.u32 %v2614, %v2617
      %v2619 = vsel %vm1945, %v2609, %v2618
      %v2621 = vshrl.u32 %v1639, 16
      %v2623 = vrot.slane %v2621, 3
      %v2624 = vshll.u32 %v1639, 16
      %v2626 = vrot.slane %v2624, 4
      %v2627 = vor.u32 %v2623, %v2626
      %v2628 = vsel %vm1945, %v2618, %v2627
      %v2630 = vshrl.u32 %v1640, 16
      %v2632 = vrot.slane %v2630, 3
      %v2633 = vshll.u32 %v1640, 16
      %v2635 = vrot.slane %v2633, 4
      %v2636 = vor.u32 %v2632, %v2635
      %v2637 = vsel %vm1945, %v2627, %v2636
      %v2639 = vshrl.u32 %v1641, 16
      %v2641 = vrot.slane %v2639, 3
      %v2642 = vshll.u32 %v1641, 16
      %v2644 = vrot.slane %v2642, 4
      %v2645 = vor.u32 %v2641, %v2644
      %v2646 = vsel %vm1945, %v2636, %v2645
      %v2648 = vshrl.u32 %v1642, 16
      %v2650 = vrot.slane %v2648, 3
      %v2651 = vshll.u32 %v1642, 16
      %v2653 = vrot.slane %v2651, 4
      %v2654 = vor.u32 %v2650, %v2653
      %v2655 = vsel %vm1945, %v2645, %v2654
      %v2657 = vshrl.u32 %v1643, 16
      %v2659 = vrot.slane %v2657, 3
      %v2660 = vshll.u32 %v1643, 16
      %v2662 = vrot.slane %v2660, 4
      %v2663 = vor.u32 %v2659, %v2662
      %v2664 = vsel %vm1945, %v2654, %v2663
      %v2666 = vsel %vm444, %v2529, 0
      %v2669 = vsel %vm444, %v2538, 0
      %v2672 = vsel %vm444, %v2547, 0
      %v2675 = vsel %vm444, %v2556, 0
      %v2678 = vsel %vm444, %v2565, 0
      %v2681 = vsel %vm444, %v2574, 0
      %v2684 = vsel %vm444, %v2583, 0
      %v2687 = vsel %vm444, %v2592, 0
      %v2690 = vsel %vm444, %v2601, 0
      %v2693 = vsel %vm444, %v2610, 0
      %v2696 = vsel %vm444, %v2619, 0
      %v2699 = vsel %vm444, %v2628, 0
      %v2702 = vsel %vm444, %v2637, 0
      %v2705 = vsel %vm444, %v2646, 0
      %v2708 = vsel %vm444, %v2655, 0
      %v2711 = vsel %vm444, %v2664, 0
      %v2714 = vsel %vm1280, %v2512, 0
      %2716 = vmatprep.subr.bf16.mxu0 0
      %2717 = vmatpush1.bf16.msra.mxu0 %v2714
      %2718 = vmatprep.subr.bf16.mxu0 0
      %2719 = vmatpush1.bf16.msra.mxu0 0
      %2720 = vmatprep.subr.bf16.mxu0 0
      %2721 = vmatpush1.bf16.msra.mxu0 0
      %2722 = vmatprep.subr.bf16.mxu0 0
      %2723 = vmatpush1.bf16.msra.mxu0 0
      %2724 = vmatprep.subr.bf16.mxu0 0
      %2725 = vmatpush1.bf16.msra.mxu0 0
      %2726 = vmatprep.subr.bf16.mxu0 0
      %2727 = vmatpush1.bf16.msra.mxu0 0
      %2728 = vmatprep.subr.bf16.mxu0 0
      %2729 = vmatpush1.bf16.msra.mxu0 0
      %2730 = vmatprep.subr.bf16.mxu0 0
      %2731 = vmatpush1.bf16.msra.mxu0 0
      %2732 = vmatprep.subr.bf16.mxu0 0
      %2733 = vmatpush1.bf16.msra.mxu0 0
      %2734 = vmatprep.subr.bf16.mxu0 0
      %2735 = vmatpush1.bf16.msra.mxu0 0
      %2736 = vmatprep.subr.bf16.mxu0 0
      %2737 = vmatpush1.bf16.msra.mxu0 0
      %2738 = vmatprep.subr.bf16.mxu0 0
      %2739 = vmatpush1.bf16.msra.mxu0 0
      %2740 = vmatprep.subr.bf16.mxu0 0
      %2741 = vmatpush1.bf16.msra.mxu0 0
      %2742 = vmatprep.subr.bf16.mxu0 0
      %2743 = vmatpush1.bf16.msra.mxu0 0
      %2744 = vmatprep.subr.bf16.mxu0 0
      %2745 = vmatpush1.bf16.msra.mxu0 0
      %2746 = vmatprep.subr.bf16.mxu0 0
      %2747 = vmatpush1.bf16.msra.mxu0 0
      %2748 = vmatprep.mubr.bf16.mxu0 0
      %2749 = vmatmul.mubr.bf16.gmra.mrb[0].mxu0 %v2666
      %v2750 = vpop.f32.mrb[0].mxu0
      %v2751 = vadd.f32 0.0, %v2750
      %v2752 = vpop.f32.mrb[0].mxu0
      %v2753 = vpop.f32.mrb[0].mxu0
      %v2754 = vadd.f32 0.0, %v2753
      %v2755 = vpop.f32.mrb[0].mxu0
      %2756 = vmatprep.mubr.bf16.mxu0 0
      %2757 = vmatmul.mubr.bf16.gmra.mrb[0].mxu0 %v2669
      %v2758 = vpop.f32.mrb[0].mxu0
      %v2759 = vadd.f32 0.0, %v2758
      %v2760 = vpop.f32.mrb[0].mxu0
      %v2761 = vpop.f32.mrb[0].mxu0
      %v2762 = vadd.f32 0.0, %v2761
      %v2763 = vpop.f32.mrb[0].mxu0
      %2764 = vmatprep.mubr.bf16.mxu0 0
      %2765 = vmatmul.mubr.bf16.gmra.mrb[0].mxu0 %v2672
      %v2766 = vpop.f32.mrb[0].mxu0
      %v2767 = vadd.f32 0.0, %v2766
      %v2768 = vpop.f32.mrb[0].mxu0
      %v2769 = vpop.f32.mrb[0].mxu0
      %v2770 = vadd.f32 0.0, %v2769
      %v2771 = vpop.f32.mrb[0].mxu0
      %2772 = vmatprep.mubr.bf16.mxu0 0
      %2773 = vmatmul.mubr.bf16.gmra.mrb[0].mxu0 %v2675
      %v2774 = vpop.f32.mrb[0].mxu0
      %v2775 = vadd.f32 0.0, %v2774
      %v2776 = vpop.f32.mrb[0].mxu0
      %v2777 = vpop.f32.mrb[0].mxu0
      %v2778 = vadd.f32 0.0, %v2777
      %v2779 = vpop.f32.mrb[0].mxu0
      %2780 = vmatprep.mubr.bf16.mxu0 0
      %2781 = vmatmul.mubr.bf16.gmra.mrb[0].mxu0 %v2678
      %v2782 = vpop.f32.mrb[0].mxu0
      %v2783 = vadd.f32 0.0, %v2782
      %v2784 = vpop.f32.mrb[0].mxu0
      %v2785 = vpop.f32.mrb[0].mxu0
      %v2786 = vadd.f32 0.0, %v2785
      %v2787 = vpop.f32.mrb[0].mxu0
      %2788 = vmatprep.mubr.bf16.mxu0 0
      %2789 = vmatmul.mubr.bf16.gmra.mrb[0].mxu0 %v2681
      %v2790 = vpop.f32.mrb[0].mxu0
      %v2791 = vadd.f32 0.0, %v2790
      %v2792 = vpop.f32.mrb[0].mxu0
      %v2793 = vpop.f32.mrb[0].mxu0
      %v2794 = vadd.f32 0.0, %v2793
      %v2795 = vpop.f32.mrb[0].mxu0
      %2796 = vmatprep.mubr.bf16.mxu0 0
      %2797 = vmatmul.mubr.bf16.gmra.mrb[0].mxu0 %v2684
      %v2798 = vpop.f32.mrb[0].mxu0
      %v2799 = vadd.f32 0.0, %v2798
      %v2800 = vpop.f32.mrb[0].mxu0
      %v2801 = vpop.f32.mrb[0].mxu0
      %v2802 = vadd.f32 0.0, %v2801
      %v2803 = vpop.f32.mrb[0].mxu0
      %2804 = vmatprep.mubr.bf16.mxu0 0
      %2805 = vmatmul.mubr.bf16.gmra.mrb[0].mxu0 %v2687
      %v2806 = vpop.f32.mrb[0].mxu0
      %v2807 = vadd.f32 0.0, %v2806
      %v2808 = vpop.f32.mrb[0].mxu0
      %v2809 = vpop.f32.mrb[0].mxu0
      %v2810 = vadd.f32 0.0, %v2809
      %v2811 = vpop.f32.mrb[0].mxu0
      %2812 = vmatprep.mubr.bf16.mxu0 0
      %2813 = vmatmul.mubr.bf16.gmra.mrb[0].mxu0 %v2690
      %v2814 = vpop.f32.mrb[0].mxu0
      %v2815 = vadd.f32 0.0, %v2814
      %v2816 = vpop.f32.mrb[0].mxu0
      %v2817 = vpop.f32.mrb[0].mxu0
      %v2818 = vadd.f32 0.0, %v2817
      %v2819 = vpop.f32.mrb[0].mxu0
      %2820 = vmatprep.mubr.bf16.mxu0 0
      %2821 = vmatmul.mubr.bf16.gmra.mrb[0].mxu0 %v2693
      %v2822 = vpop.f32.mrb[0].mxu0
      %v2823 = vadd.f32 0.0, %v2822
      %v2824 = vpop.f32.mrb[0].mxu0
      %v2825 = vpop.f32.mrb[0].mxu0
      %v2826 = vadd.f32 0.0, %v2825
      %v2827 = vpop.f32.mrb[0].mxu0
      %2828 = vmatprep.mubr.bf16.mxu0 0
      %2829 = vmatmul.mubr.bf16.gmra.mrb[0].mxu0 %v2696
      %v2830 = vpop.f32.mrb[0].mxu0
      %v2831 = vadd.f32 0.0, %v2830
      %v2832 = vpop.f32.mrb[0].mxu0
      %v2833 = vpop.f32.mrb[0].mxu0
      %v2834 = vadd.f32 0.0, %v2833
      %v2835 = vpop.f32.mrb[0].mxu0
      %2836 = vmatprep.mubr.bf16.mxu0 0
      %2837 = vmatmul.mubr.bf16.gmra.mrb[0].mxu0 %v2699
      %v2838 = vpop.f32.mrb[0].mxu0
      %v2839 = vadd.f32 0.0, %v2838
      %v2840 = vpop.f32.mrb[0].mxu0
      %v2841 = vpop.f32.mrb[0].mxu0
      %v2842 = vadd.f32 0.0, %v2841
      %v2843 = vpop.f32.mrb[0].mxu0
      %2844 = vmatprep.mubr.bf16.mxu0 0
      %2845 = vmatmul.mubr.bf16.gmra.mrb[0].mxu0 %v2702
      %v2846 = vpop.f32.mrb[0].mxu0
      %v2847 = vadd.f32 0.0, %v2846
      %v2848 = vpop.f32.mrb[0].mxu0
      %v2849 = vpop.f32.mrb[0].mxu0
      %v2850 = vadd.f32 0.0, %v2849
      %v2851 = vpop.f32.mrb[0].mxu0
      %2852 = vmatprep.mubr.bf16.mxu0 0
      %2853 = vmatmul.mubr.bf16.gmra.mrb[0].mxu0 %v2705
      %v2854 = vpop.f32.mrb[0].mxu0
      %v2855 = vadd.f32 0.0, %v2854
      %v2856 = vpop.f32.mrb[0].mxu0
      %v2857 = vpop.f32.mrb[0].mxu0
      %v2858 = vadd.f32 0.0, %v2857
      %v2859 = vpop.f32.mrb[0].mxu0
      %2860 = vmatprep.mubr.bf16.mxu0 0
      %2861 = vmatmul.mubr.bf16.gmra.mrb[0].mxu0 %v2708
      %v2862 = vpop.f32.mrb[0].mxu0
      %v2863 = vadd.f32 0.0, %v2862
      %v2864 = vpop.f32.mrb[0].mxu0
      %v2865 = vpop.f32.mrb[0].mxu0
      %v2866 = vadd.f32 0.0, %v2865
      %v2867 = vpop.f32.mrb[0].mxu0
      %2868 = vmatprep.mubr.bf16.mxu0 0
      %2869 = vmatmul.mubr.bf16.gmra.mrb[0].mxu0 %v2711
      %v2870 = vpop.f32.mrb[0].mxu0
      %v2871 = vadd.f32 0.0, %v2870
      %v2872 = vpop.f32.mrb[0].mxu0
      %v2873 = vpop.f32.mrb[0].mxu0
      %v2874 = vadd.f32 0.0, %v2873
      %v2875 = vpop.f32.mrb[0].mxu0
      %2876 = vdwg.mxu0
      %v2877 = vadd.f32 %v2384, %v2751
      %v2878 = vadd.f32 %v2387, %v2754
      %v2879 = vadd.f32 %v2392, %v2759
      %v2880 = vadd.f32 %v2395, %v2762
      %v2881 = vadd.f32 %v2400, %v2767
      %v2882 = vadd.f32 %v2403, %v2770
      %v2883 = vadd.f32 %v2408, %v2775
      %v2884 = vadd.f32 %v2411, %v2778
      %v2885 = vadd.f32 %v2416, %v2783
      %v2886 = vadd.f32 %v2419, %v2786
      %v2887 = vadd.f32 %v2424, %v2791
      %v2888 = vadd.f32 %v2427, %v2794
      %v2889 = vadd.f32 %v2432, %v2799
      %v2890 = vadd.f32 %v2435, %v2802
      %v2891 = vadd.f32 %v2440, %v2807
      %v2892 = vadd.f32 %v2443, %v2810
      %v2893 = vadd.f32 %v2448, %v2815
      %v2894 = vadd.f32 %v2451, %v2818
      %v2895 = vadd.f32 %v2456, %v2823
      %v2896 = vadd.f32 %v2459, %v2826
      %v2897 = vadd.f32 %v2464, %v2831
      %v2898 = vadd.f32 %v2467, %v2834
      %v2899 = vadd.f32 %v2472, %v2839
      %v2900 = vadd.f32 %v2475, %v2842
      %v2901 = vadd.f32 %v2480, %v2847
      %v2902 = vadd.f32 %v2483, %v2850
      %v2903 = vadd.f32 %v2488, %v2855
      %v2904 = vadd.f32 %v2491, %v2858
      %v2905 = vadd.f32 %v2496, %v2863
      %v2906 = vadd.f32 %v2499, %v2866
      %v2907 = vadd.f32 %v2504, %v2871
      %v2908 = vadd.f32 %v2507, %v2874
      %v2909 = vmul.f32 %v1030, %v2877
      %v2910 = vmul.f32 %v1031, %v2878
      %v2911 = vmul.f32 %v1032, %v2879
      %v2912 = vmul.f32 %v1033, %v2880
      %v2913 = vmul.f32 %v1034, %v2881
      %v2914 = vmul.f32 %v1035, %v2882
      %v2915 = vmul.f32 %v1036, %v2883
      %v2916 = vmul.f32 %v1037, %v2884
      %v2917 = vmul.f32 %v1038, %v2885
      %v2918 = vmul.f32 %v1039, %v2886
      %v2919 = vmul.f32 %v1040, %v2887
      %v2920 = vmul.f32 %v1041, %v2888
      %v2921 = vmul.f32 %v1042, %v2889
      %v2922 = vmul.f32 %v1043, %v2890
      %v2923 = vmul.f32 %v1044, %v2891
      %v2924 = vmul.f32 %v1045, %v2892
      %v2925 = vmul.f32 %v1046, %v2893
      %v2926 = vmul.f32 %v1047, %v2894
      %v2927 = vmul.f32 %v1048, %v2895
      %v2928 = vmul.f32 %v1049, %v2896
      %v2929 = vmul.f32 %v1050, %v2897
      %v2930 = vmul.f32 %v1051, %v2898
      %v2931 = vmul.f32 %v1052, %v2899
      %v2932 = vmul.f32 %v1053, %v2900
      %v2933 = vmul.f32 %v1054, %v2901
      %v2934 = vmul.f32 %v1055, %v2902
      %v2935 = vmul.f32 %v1056, %v2903
      %v2936 = vmul.f32 %v1057, %v2904
      %v2937 = vmul.f32 %v1058, %v2905
      %v2938 = vmul.f32 %v1059, %v2906
      %v2939 = vmul.f32 %v1060, %v2907
      %v2940 = vmul.f32 %v1061, %v2908
      %v2941 = vadd.f32 %v1908, %v2909
      %v2942 = vadd.f32 %v1909, %v2910
      %v2943 = vadd.f32 %v1910, %v2911
      %v2944 = vadd.f32 %v1911, %v2912
      %v2945 = vadd.f32 %v1912, %v2913
      %v2946 = vadd.f32 %v1913, %v2914
      %v2947 = vadd.f32 %v1914, %v2915
      %v2948 = vadd.f32 %v1915, %v2916
      %v2949 = vadd.f32 %v1916, %v2917
      %v2950 = vadd.f32 %v1917, %v2918
      %v2951 = vadd.f32 %v1918, %v2919
      %v2952 = vadd.f32 %v1919, %v2920
      %v2953 = vadd.f32 %v1920, %v2921
      %v2954 = vadd.f32 %v1921, %v2922
      %v2955 = vadd.f32 %v1922, %v2923
      %v2956 = vadd.f32 %v1923, %v2924
      %v2957 = vadd.f32 %v1924, %v2925
      %v2958 = vadd.f32 %v1925, %v2926
      %v2959 = vadd.f32 %v1926, %v2927
      %v2960 = vadd.f32 %v1927, %v2928
      %v2961 = vadd.f32 %v1928, %v2929
      %v2962 = vadd.f32 %v1929, %v2930
      %v2963 = vadd.f32 %v1930, %v2931
      %v2964 = vadd.f32 %v1931, %v2932
      %v2965 = vadd.f32 %v1932, %v2933
      %v2966 = vadd.f32 %v1933, %v2934
      %v2967 = vadd.f32 %v1934, %v2935
      %v2968 = vadd.f32 %v1935, %v2936
      %v2969 = vadd.f32 %v1936, %v2937
      %v2970 = vadd.f32 %v1937, %v2938
      %v2971 = vadd.f32 %v1938, %v2939
      %v2972 = vadd.f32 %v1939, %v2940
      %v2973 = vld [vmem:[#allocation2 + $0x80] sm:$0x1f]
      %s2974 = scalar_lea.vmem %s3, 4
      %v2975 = vld [vmem:[%s2974] sm:$0x3]
      %v2976 = vld [vmem:[#allocation2 + $0x88] sm:$0x1f]
      %s2977 = scalar_lea.vmem %s3, 10
      %v2978 = vld [vmem:[%s2977] sm:$0x3]
      %vm2979 = vsmask.f32 3328
      %v2981 = vshrl.u32 %v1177, 16
      %v2983 = vrot.slane %v2981, 4
      %v2984 = vshll.u32 %v1177, 16
      %v2986 = vrot.slane %v2984, 5
      %v2987 = vor.u32 %v2983, %v2986
      %v2988 = vrot.slane %v1955, 4
      %v2989 = vrot.slane %v1958, 5
      %v2990 = vor.u32 %v2988, %v2989
      %v2991 = vsel %vm2979, %v2987, %v2990
      %v2992 = vrot.slane %v1964, 4
      %v2993 = vrot.slane %v1967, 5
      %v2994 = vor.u32 %v2992, %v2993
      %v2995 = vsel %vm2979, %v2990, %v2994
      %v2996 = vrot.slane %v1973, 4
      %v2997 = vrot.slane %v1976, 5
      %v2998 = vor.u32 %v2996, %v2997
      %v2999 = vsel %vm2979, %v2994, %v2998
      %v3000 = vrot.slane %v1982, 4
      %v3001 = vrot.slane %v1985, 5
      %v3002 = vor.u32 %v3000, %v3001
      %v3003 = vsel %vm2979, %v2998, %v3002
      %v3004 = vrot.slane %v1991, 4
      %v3005 = vrot.slane %v1994, 5
      %v3006 = vor.u32 %v3004, %v3005
      %v3007 = vsel %vm2979, %v3002, %v3006
      %v3008 = vrot.slane %v2000, 4
      %v3009 = vrot.slane %v2003, 5
      %v3010 = vor.u32 %v3008, %v3009
      %v3011 = vsel %vm2979, %v3006, %v3010
      %v3012 = vrot.slane %v2009, 4
      %v3013 = vrot.slane %v2012, 5
      %v3014 = vor.u32 %v3012, %v3013
      %v3015 = vsel %vm2979, %v3010, %v3014
      %v3016 = vrot.slane %v2018, 4
      %v3017 = vrot.slane %v2021, 5
      %v3018 = vor.u32 %v3016, %v3017
      %v3019 = vsel %vm2979, %v3014, %v3018
      %v3020 = vrot.slane %v2027, 4
      %v3021 = vrot.slane %v2030, 5
      %v3022 = vor.u32 %v3020, %v3021
      %v3023 = vsel %vm2979, %v3018, %v3022
      %v3024 = vrot.slane %v2036, 4
      %v3025 = vrot.slane %v2039, 5
      %v3026 = vor.u32 %v3024, %v3025
      %v3027 = vsel %vm2979, %v3022, %v3026
      %v3028 = vrot.slane %v2045, 4
      %v3029 = vrot.slane %v2048, 5
      %v3030 = vor.u32 %v3028, %v3029
      %v3031 = vsel %vm2979, %v3026, %v3030
      %v3032 = vrot.slane %v2054, 4
      %v3033 = vrot.slane %v2057, 5
      %v3034 = vor.u32 %v3032, %v3033
      %v3035 = vsel %vm2979, %v3030, %v3034
      %v3036 = vrot.slane %v2063, 4
      %v3037 = vrot.slane %v2066, 5
      %v3038 = vor.u32 %v3036, %v3037
      %v3039 = vsel %vm2979, %v3034, %v3038
      %v3040 = vrot.slane %v2072, 4
      %v3041 = vrot.slane %v2075, 5
      %v3042 = vor.u32 %v3040, %v3041
      %v3043 = vsel %vm2979, %v3038, %v3042
      %v3044 = vrot.slane %v2081, 4
      %v3045 = vrot.slane %v2084, 5
      %v3046 = vor.u32 %v3044, %v3045
      %v3047 = vsel %vm2979, %v3042, %v3046
      %v3049 = vshrl.u32 %v2976, 16
      %v3051 = vrot.slane %v3049, 4
      %v3052 = vshll.u32 %v2976, 16
      %v3054 = vrot.slane %v3052, 5
      %v3055 = vor.u32 %v3051, %v3054
      %v3056 = vsel %vm2979, %v3046, %v3055
      %v3058 = vsel %vm444, %v2991, 0
      %v3061 = vsel %vm444, %v2995, 0
      %v3064 = vsel %vm444, %v2999, 0
      %v3067 = vsel %vm444, %v3003, 0
      %v3070 = vsel %vm444, %v3007, 0
      %v3073 = vsel %vm444, %v3011, 0
      %v3076 = vsel %vm444, %v3015, 0
      %v3079 = vsel %vm444, %v3019, 0
      %v3082 = vsel %vm444, %v3023, 0
      %v3085 = vsel %vm444, %v3027, 0
      %v3088 = vsel %vm444, %v3031, 0
      %v3091 = vsel %vm444, %v3035, 0
      %v3094 = vsel %vm444, %v3039, 0
      %v3097 = vsel %vm444, %v3043, 0
      %v3100 = vsel %vm444, %v3047, 0
      %v3103 = vsel %vm444, %v3056, 0
      %v3106 = vsel %vm1280, %v2978, 0
      %3108 = vmatprep.subr.bf16.mxu0 0
      %3109 = vmatpush1.bf16.msra.mxu0 %v3106
      %3110 = vmatprep.subr.bf16.mxu0 0
      %3111 = vmatpush1.bf16.msra.mxu0 0
      %3112 = vmatprep.subr.bf16.mxu0 0
      %3113 = vmatpush1.bf16.msra.mxu0 0
      %3114 = vmatprep.subr.bf16.mxu0 0
      %3115 = vmatpush1.bf16.msra.mxu0 0
      %3116 = vmatprep.subr.bf16.mxu0 0
      %3117 = vmatpush1.bf16.msra.mxu0 0
      %3118 = vmatprep.subr.bf16.mxu0 0
      %3119 = vmatpush1.bf16.msra.mxu0 0
      %3120 = vmatprep.subr.bf16.mxu0 0
      %3121 = vmatpush1.bf16.msra.mxu0 0
      %3122 = vmatprep.subr.bf16.mxu0 0
      %3123 = vmatpush1.bf16.msra.mxu0 0
      %3124 = vmatprep.subr.bf16.mxu0 0
      %3125 = vmatpush1.bf16.msra.mxu0 0
      %3126 = vmatprep.subr.bf16.mxu0 0
      %3127 = vmatpush1.bf16.msra.mxu0 0
      %3128 = vmatprep.subr.bf16.mxu0 0
      %3129 = vmatpush1.bf16.msra.mxu0 0
      %3130 = vmatprep.subr.bf16.mxu0 0
      %3131 = vmatpush1.bf16.msra.mxu0 0
      %3132 = vmatprep.subr.bf16.mxu0 0
      %3133 = vmatpush1.bf16.msra.mxu0 0
      %3134 = vmatprep.subr.bf16.mxu0 0
      %3135 = vmatpush1.bf16.msra.mxu0 0
      %3136 = vmatprep.subr.bf16.mxu0 0
      %3137 = vmatpush1.bf16.msra.mxu0 0
      %3138 = vmatprep.subr.bf16.mxu0 0
      %3139 = vmatpush1.bf16.msra.mxu0 0
      %3140 = vmatprep.mubr.bf16.mxu0 0
      %3141 = vmatmul.mubr.bf16.gmra.mrb[0].mxu0 %v3058
      %v3142 = vpop.f32.mrb[0].mxu0
      %v3143 = vadd.f32 0.0, %v3142
      %v3144 = vpop.f32.mrb[0].mxu0
      %v3145 = vpop.f32.mrb[0].mxu0
      %v3146 = vadd.f32 0.0, %v3145
      %v3147 = vpop.f32.mrb[0].mxu0
      %3148 = vmatprep.mubr.bf16.mxu0 0
      %3149 = vmatmul.mubr.bf16.gmra.mrb[0].mxu0 %v3061
      %v3150 = vpop.f32.mrb[0].mxu0
      %v3151 = vadd.f32 0.0, %v3150
      %v3152 = vpop.f32.mrb[0].mxu0
      %v3153 = vpop.f32.mrb[0].mxu0
      %v3154 = vadd.f32 0.0, %v3153
      %v3155 = vpop.f32.mrb[0].mxu0
      %3156 = vmatprep.mubr.bf16.mxu0 0
      %3157 = vmatmul.mubr.bf16.gmra.mrb[0].mxu0 %v3064
      %v3158 = vpop.f32.mrb[0].mxu0
      %v3159 = vadd.f32 0.0, %v3158
      %v3160 = vpop.f32.mrb[0].mxu0
      %v3161 = vpop.f32.mrb[0].mxu0
      %v3162 = vadd.f32 0.0, %v3161
      %v3163 = vpop.f32.mrb[0].mxu0
      %3164 = vmatprep.mubr.bf16.mxu0 0
      %3165 = vmatmul.mubr.bf16.gmra.mrb[0].mxu0 %v3067
      %v3166 = vpop.f32.mrb[0].mxu0
      %v3167 = vadd.f32 0.0, %v3166
      %v3168 = vpop.f32.mrb[0].mxu0
      %v3169 = vpop.f32.mrb[0].mxu0
      %v3170 = vadd.f32 0.0, %v3169
      %v3171 = vpop.f32.mrb[0].mxu0
      %3172 = vmatprep.mubr.bf16.mxu0 0
      %3173 = vmatmul.mubr.bf16.gmra.mrb[0].mxu0 %v3070
      %v3174 = vpop.f32.mrb[0].mxu0
      %v3175 = vadd.f32 0.0, %v3174
      %v3176 = vpop.f32.mrb[0].mxu0
      %v3177 = vpop.f32.mrb[0].mxu0
      %v3178 = vadd.f32 0.0, %v3177
      %v3179 = vpop.f32.mrb[0].mxu0
      %3180 = vmatprep.mubr.bf16.mxu0 0
      %3181 = vmatmul.mubr.bf16.gmra.mrb[0].mxu0 %v3073
      %v3182 = vpop.f32.mrb[0].mxu0
      %v3183 = vadd.f32 0.0, %v3182
      %v3184 = vpop.f32.mrb[0].mxu0
      %v3185 = vpop.f32.mrb[0].mxu0
      %v3186 = vadd.f32 0.0, %v3185
      %v3187 = vpop.f32.mrb[0].mxu0
      %3188 = vmatprep.mubr.bf16.mxu0 0
      %3189 = vmatmul.mubr.bf16.gmra.mrb[0].mxu0 %v3076
      %v3190 = vpop.f32.mrb[0].mxu0
      %v3191 = vadd.f32 0.0, %v3190
      %v3192 = vpop.f32.mrb[0].mxu0
      %v3193 = vpop.f32.mrb[0].mxu0
      %v3194 = vadd.f32 0.0, %v3193
      %v3195 = vpop.f32.mrb[0].mxu0
      %3196 = vmatprep.mubr.bf16.mxu0 0
      %3197 = vmatmul.mubr.bf16.gmra.mrb[0].mxu0 %v3079
      %v3198 = vpop.f32.mrb[0].mxu0
      %v3199 = vadd.f32 0.0, %v3198
      %v3200 = vpop.f32.mrb[0].mxu0
      %v3201 = vpop.f32.mrb[0].mxu0
      %v3202 = vadd.f32 0.0, %v3201
      %v3203 = vpop.f32.mrb[0].mxu0
      %3204 = vmatprep.mubr.bf16.mxu0 0
      %3205 = vmatmul.mubr.bf16.gmra.mrb[0].mxu0 %v3082
      %v3206 = vpop.f32.mrb[0].mxu0
      %v3207 = vadd.f32 0.0, %v3206
      %v3208 = vpop.f32.mrb[0].mxu0
      %v3209 = vpop.f32.mrb[0].mxu0
      %v3210 = vadd.f32 0.0, %v3209
      %v3211 = vpop.f32.mrb[0].mxu0
      %3212 = vmatprep.mubr.bf16.mxu0 0
      %3213 = vmatmul.mubr.bf16.gmra.mrb[0].mxu0 %v3085
      %v3214 = vpop.f32.mrb[0].mxu0
      %v3215 = vadd.f32 0.0, %v3214
      %v3216 = vpop.f32.mrb[0].mxu0
      %v3217 = vpop.f32.mrb[0].mxu0
      %v3218 = vadd.f32 0.0, %v3217
      %v3219 = vpop.f32.mrb[0].mxu0
      %3220 = vmatprep.mubr.bf16.mxu0 0
      %3221 = vmatmul.mubr.bf16.gmra.mrb[0].mxu0 %v3088
      %v3222 = vpop.f32.mrb[0].mxu0
      %v3223 = vadd.f32 0.0, %v3222
      %v3224 = vpop.f32.mrb[0].mxu0
      %v3225 = vpop.f32.mrb[0].mxu0
      %v3226 = vadd.f32 0.0, %v3225
      %v3227 = vpop.f32.mrb[0].mxu0
      %3228 = vmatprep.mubr.bf16.mxu0 0
      %3229 = vmatmul.mubr.bf16.gmra.mrb[0].mxu0 %v3091
      %v3230 = vpop.f32.mrb[0].mxu0
      %v3231 = vadd.f32 0.0, %v3230
      %v3232 = vpop.f32.mrb[0].mxu0
      %v3233 = vpop.f32.mrb[0].mxu0
      %v3234 = vadd.f32 0.0, %v3233
      %v3235 = vpop.f32.mrb[0].mxu0
      %3236 = vmatprep.mubr.bf16.mxu0 0
      %3237 = vmatmul.mubr.bf16.gmra.mrb[0].mxu0 %v3094
      %v3238 = vpop.f32.mrb[0].mxu0
      %v3239 = vadd.f32 0.0, %v3238
      %v3240 = vpop.f32.mrb[0].mxu0
      %v3241 = vpop.f32.mrb[0].mxu0
      %v3242 = vadd.f32 0.0, %v3241
      %v3243 = vpop.f32.mrb[0].mxu0
      %3244 = vmatprep.mubr.bf16.mxu0 0
      %3245 = vmatmul.mubr.bf16.gmra.mrb[0].mxu0 %v3097
      %v3246 = vpop.f32.mrb[0].mxu0
      %v3247 = vadd.f32 0.0, %v3246
      %v3248 = vpop.f32.mrb[0].mxu0
      %v3249 = vpop.f32.mrb[0].mxu0
      %v3250 = vadd.f32 0.0, %v3249
      %v3251 = vpop.f32.mrb[0].mxu0
      %3252 = vmatprep.mubr.bf16.mxu0 0
      %3253 = vmatmul.mubr.bf16.gmra.mrb[0].mxu0 %v3100
      %v3254 = vpop.f32.mrb[0].mxu0
      %v3255 = vadd.f32 0.0, %v3254
      %v3256 = vpop.f32.mrb[0].mxu0
      %v3257 = vpop.f32.mrb[0].mxu0
      %v3258 = vadd.f32 0.0, %v3257
      %v3259 = vpop.f32.mrb[0].mxu0
      %3260 = vmatprep.mubr.bf16.mxu0 0
      %3261 = vmatmul.mubr.bf16.gmra.mrb[0].mxu0 %v3103
      %v3262 = vpop.f32.mrb[0].mxu0
      %v3263 = vadd.f32 0.0, %v3262
      %v3264 = vpop.f32.mrb[0].mxu0
      %v3265 = vpop.f32.mrb[0].mxu0
      %v3266 = vadd.f32 0.0, %v3265
      %v3267 = vpop.f32.mrb[0].mxu0
      %3268 = vdwg.mxu0
      %v3270 = vshrl.u32 %v1158, 16
      %v3272 = vrot.slane %v3270, 4
      %v3273 = vshll.u32 %v1158, 16
      %v3275 = vrot.slane %v3273, 5
      %v3276 = vor.u32 %v3272, %v3275
      %v3277 = vrot.slane %v2319, 4
      %v3278 = vrot.slane %v2322, 5
      %v3279 = vor.u32 %v3277, %v3278
      %v3280 = vsel %vm2979, %v3276, %v3279
      %v3281 = vsel %vm2979, %v3279, %v2990
      %v3283 = vshrl.u32 %v2973, 16
      %v3285 = vrot.slane %v3283, 4
      %v3286 = vshll.u32 %v2973, 16
      %v3288 = vrot.slane %v3286, 5
      %v3289 = vor.u32 %v3285, %v3288
      %v3290 = vsel %vm2979, %v3042, %v3289
      %v3292 = vsel %vm444, %v3280, 0
      %v3295 = vsel %vm444, %v3281, 0
      %v3298 = vsel %vm444, %v3290, 0
      %v3301 = vsel %vm1280, %v2975, 0
      %3303 = vmatprep.subr.bf16.mxu0 0
      %3304 = vmatpush1.bf16.msra.mxu0 %v3301
      %3305 = vmatprep.subr.bf16.mxu0 0
      %3306 = vmatpush1.bf16.msra.mxu0 0
      %3307 = vmatprep.subr.bf16.mxu0 0
      %3308 = vmatpush1.bf16.msra.mxu0 0
      %3309 = vmatprep.subr.bf16.mxu0 0
      %3310 = vmatpush1.bf16.msra.mxu0 0
      %3311 = vmatprep.subr.bf16.mxu0 0
      %3312 = vmatpush1.bf16.msra.mxu0 0
      %3313 = vmatprep.subr.bf16.mxu0 0
      %3314 = vmatpush1.bf16.msra.mxu0 0
      %3315 = vmatprep.subr.bf16.mxu0 0
      %3316 = vmatpush1.bf16.msra.mxu0 0
      %3317 = vmatprep.subr.bf16.mxu0 0
      %3318 = vmatpush1.bf16.msra.mxu0 0
      %3319 = vmatprep.subr.bf16.mxu0 0
      %3320 = vmatpush1.bf16.msra.mxu0 0
      %3321 = vmatprep.subr.bf16.mxu0 0
      %3322 = vmatpush1.bf16.msra.mxu0 0
      %3323 = vmatprep.subr.bf16.mxu0 0
      %3324 = vmatpush1.bf16.msra.mxu0 0
      %3325 = vmatprep.subr.bf16.mxu0 0
      %3326 = vmatpush1.bf16.msra.mxu0 0
      %3327 = vmatprep.subr.bf16.mxu0 0
      %3328 = vmatpush1.bf16.msra.mxu0 0
      %3329 = vmatprep.subr.bf16.mxu0 0
      %3330 = vmatpush1.bf16.msra.mxu0 0
      %3331 = vmatprep.subr.bf16.mxu0 0
      %3332 = vmatpush1.bf16.msra.mxu0 0
      %3333 = vmatprep.subr.bf16.mxu0 0
      %3334 = vmatpush1.bf16.msra.mxu0 0
      %3335 = vmatprep.mubr.bf16.mxu0 0
      %3336 = vmatmul.mubr.bf16.gmra.mrb[0].mxu0 %v3292
      %v3337 = vpop.f32.mrb[0].mxu0
      %v3338 = vadd.f32 %v3143, %v3337
      %v3339 = vpop.f32.mrb[0].mxu0
      %v3340 = vpop.f32.mrb[0].mxu0
      %v3341 = vadd.f32 %v3146, %v3340
      %v3342 = vpop.f32.mrb[0].mxu0
      %3343 = vmatprep.mubr.bf16.mxu0 0
      %3344 = vmatmul.mubr.bf16.gmra.mrb[0].mxu0 %v3295
      %v3345 = vpop.f32.mrb[0].mxu0
      %v3346 = vadd.f32 %v3151, %v3345
      %v3347 = vpop.f32.mrb[0].mxu0
      %v3348 = vpop.f32.mrb[0].mxu0
      %v3349 = vadd.f32 %v3154, %v3348
      %v3350 = vpop.f32.mrb[0].mxu0
      %3351 = vmatprep.mubr.bf16.mxu0 0
      %3352 = vmatmul.mubr.bf16.gmra.mrb[0].mxu0 %v3061
      %v3353 = vpop.f32.mrb[0].mxu0
      %v3354 = vadd.f32 %v3159, %v3353
      %v3355 = vpop.f32.mrb[0].mxu0
      %v3356 = vpop.f32.mrb[0].mxu0
      %v3357 = vadd.f32 %v3162, %v3356
      %v3358 = vpop.f32.mrb[0].mxu0
      %3359 = vmatprep.mubr.bf16.mxu0 0
      %3360 = vmatmul.mubr.bf16.gmra.mrb[0].mxu0 %v3064
      %v3361 = vpop.f32.mrb[0].mxu0
      %v3362 = vadd.f32 %v3167, %v3361
      %v3363 = vpop.f32.mrb[0].mxu0
      %v3364 = vpop.f32.mrb[0].mxu0
      %v3365 = vadd.f32 %v3170, %v3364
      %v3366 = vpop.f32.mrb[0].mxu0
      %3367 = vmatprep.mubr.bf16.mxu0 0
      %3368 = vmatmul.mubr.bf16.gmra.mrb[0].mxu0 %v3067
      %v3369 = vpop.f32.mrb[0].mxu0
      %v3370 = vadd.f32 %v3175, %v3369
      %v3371 = vpop.f32.mrb[0].mxu0
      %v3372 = vpop.f32.mrb[0].mxu0
      %v3373 = vadd.f32 %v3178, %v3372
      %v3374 = vpop.f32.mrb[0].mxu0
      %3375 = vmatprep.mubr.bf16.mxu0 0
      %3376 = vmatmul.mubr.bf16.gmra.mrb[0].mxu0 %v3070
      %v3377 = vpop.f32.mrb[0].mxu0
      %v3378 = vadd.f32 %v3183, %v3377
      %v3379 = vpop.f32.mrb[0].mxu0
      %v3380 = vpop.f32.mrb[0].mxu0
      %v3381 = vadd.f32 %v3186, %v3380
      %v3382 = vpop.f32.mrb[0].mxu0
      %3383 = vmatprep.mubr.bf16.mxu0 0
      %3384 = vmatmul.mubr.bf16.gmra.mrb[0].mxu0 %v3073
      %v3385 = vpop.f32.mrb[0].mxu0
      %v3386 = vadd.f32 %v3191, %v3385
      %v3387 = vpop.f32.mrb[0].mxu0
      %v3388 = vpop.f32.mrb[0].mxu0
      %v3389 = vadd.f32 %v3194, %v3388
      %v3390 = vpop.f32.mrb[0].mxu0
      %3391 = vmatprep.mubr.bf16.mxu0 0
      %3392 = vmatmul.mubr.bf16.gmra.mrb[0].mxu0 %v3076
      %v3393 = vpop.f32.mrb[0].mxu0
      %v3394 = vadd.f32 %v3199, %v3393
      %v3395 = vpop.f32.mrb[0].mxu0
      %v3396 = vpop.f32.mrb[0].mxu0
      %v3397 = vadd.f32 %v3202, %v3396
      %v3398 = vpop.f32.mrb[0].mxu0
      %3399 = vmatprep.mubr.bf16.mxu0 0
      %3400 = vmatmul.mubr.bf16.gmra.mrb[0].mxu0 %v3079
      %v3401 = vpop.f32.mrb[0].mxu0
      %v3402 = vadd.f32 %v3207, %v3401
      %v3403 = vpop.f32.mrb[0].mxu0
      %v3404 = vpop.f32.mrb[0].mxu0
      %v3405 = vadd.f32 %v3210, %v3404
      %v3406 = vpop.f32.mrb[0].mxu0
      %3407 = vmatprep.mubr.bf16.mxu0 0
      %3408 = vmatmul.mubr.bf16.gmra.mrb[0].mxu0 %v3082
      %v3409 = vpop.f32.mrb[0].mxu0
      %v3410 = vadd.f32 %v3215, %v3409
      %v3411 = vpop.f32.mrb[0].mxu0
      %v3412 = vpop.f32.mrb[0].mxu0
      %v3413 = vadd.f32 %v3218, %v3412
      %v3414 = vpop.f32.mrb[0].mxu0
      %3415 = vmatprep.mubr.bf16.mxu0 0
      %3416 = vmatmul.mubr.bf16.gmra.mrb[0].mxu0 %v3085
      %v3417 = vpop.f32.mrb[0].mxu0
      %v3418 = vadd.f32 %v3223, %v3417
      %v3419 = vpop.f32.mrb[0].mxu0
      %v3420 = vpop.f32.mrb[0].mxu0
      %v3421 = vadd.f32 %v3226, %v3420
      %v3422 = vpop.f32.mrb[0].mxu0
      %3423 = vmatprep.mubr.bf16.mxu0 0
      %3424 = vmatmul.mubr.bf16.gmra.mrb[0].mxu0 %v3088
      %v3425 = vpop.f32.mrb[0].mxu0
      %v3426 = vadd.f32 %v3231, %v3425
      %v3427 = vpop.f32.mrb[0].mxu0
      %v3428 = vpop.f32.mrb[0].mxu0
      %v3429 = vadd.f32 %v3234, %v3428
      %v3430 = vpop.f32.mrb[0].mxu0
      %3431 = vmatprep.mubr.bf16.mxu0 0
      %3432 = vmatmul.mubr.bf16.gmra.mrb[0].mxu0 %v3091
      %v3433 = vpop.f32.mrb[0].mxu0
      %v3434 = vadd.f32 %v3239, %v3433
      %v3435 = vpop.f32.mrb[0].mxu0
      %v3436 = vpop.f32.mrb[0].mxu0
      %v3437 = vadd.f32 %v3242, %v3436
      %v3438 = vpop.f32.mrb[0].mxu0
      %3439 = vmatprep.mubr.bf16.mxu0 0
      %3440 = vmatmul.mubr.bf16.gmra.mrb[0].mxu0 %v3094
      %v3441 = vpop.f32.mrb[0].mxu0
      %v3442 = vadd.f32 %v3247, %v3441
      %v3443 = vpop.f32.mrb[0].mxu0
      %v3444 = vpop.f32.mrb[0].mxu0
      %v3445 = vadd.f32 %v3250, %v3444
      %v3446 = vpop.f32.mrb[0].mxu0
      %3447 = vmatprep.mubr.bf16.mxu0 0
      %3448 = vmatmul.mubr.bf16.gmra.mrb[0].mxu0 %v3097
      %v3449 = vpop.f32.mrb[0].mxu0
      %v3450 = vadd.f32 %v3255, %v3449
      %v3451 = vpop.f32.mrb[0].mxu0
      %v3452 = vpop.f32.mrb[0].mxu0
      %v3453 = vadd.f32 %v3258, %v3452
      %v3454 = vpop.f32.mrb[0].mxu0
      %3455 = vmatprep.mubr.bf16.mxu0 0
      %3456 = vmatmul.mubr.bf16.gmra.mrb[0].mxu0 %v3298
      %v3457 = vpop.f32.mrb[0].mxu0
      %v3458 = vadd.f32 %v3263, %v3457
      %v3459 = vpop.f32.mrb[0].mxu0
      %v3460 = vpop.f32.mrb[0].mxu0
      %v3461 = vadd.f32 %v3266, %v3460
      %v3462 = vpop.f32.mrb[0].mxu0
      %3463 = vdwg.mxu0
      %v3464 = vld [vmem:[#allocation2 + $0x90] sm:$0x1f]
      %s3465 = scalar_lea.vmem %s3, 16
      %v3466 = vld [vmem:[%s3465] sm:$0x3]
      %v3468 = vshrl.u32 %v1627, 16
      %v3470 = vrot.slane %v3468, 4
      %v3471 = vshll.u32 %v1627, 16
      %v3473 = vrot.slane %v3471, 5
      %v3474 = vor.u32 %v3470, %v3473
      %v3475 = vrot.slane %v2522, 4
      %v3476 = vrot.slane %v2525, 5
      %v3477 = vor.u32 %v3475, %v3476
      %v3478 = vsel %vm2979, %v3474, %v3477
      %v3479 = vrot.slane %v2531, 4
      %v3480 = vrot.slane %v2534, 5
      %v3481 = vor.u32 %v3479, %v3480
      %v3482 = vsel %vm2979, %v3477, %v3481
      %v3483 = vrot.slane %v2540, 4
      %v3484 = vrot.slane %v2543, 5
      %v3485 = vor.u32 %v3483, %v3484
      %v3486 = vsel %vm2979, %v3481, %v3485
      %v3487 = vrot.slane %v2549, 4
      %v3488 = vrot.slane %v2552, 5
      %v3489 = vor.u32 %v3487, %v3488
      %v3490 = vsel %vm2979, %v3485, %v3489
      %v3491 = vrot.slane %v2558, 4
      %v3492 = vrot.slane %v2561, 5
      %v3493 = vor.u32 %v3491, %v3492
      %v3494 = vsel %vm2979, %v3489, %v3493
      %v3495 = vrot.slane %v2567, 4
      %v3496 = vrot.slane %v2570, 5
      %v3497 = vor.u32 %v3495, %v3496
      %v3498 = vsel %vm2979, %v3493, %v3497
      %v3499 = vrot.slane %v2576, 4
      %v3500 = vrot.slane %v2579, 5
      %v3501 = vor.u32 %v3499, %v3500
      %v3502 = vsel %vm2979, %v3497, %v3501
      %v3503 = vrot.slane %v2585, 4
      %v3504 = vrot.slane %v2588, 5
      %v3505 = vor.u32 %v3503, %v3504
      %v3506 = vsel %vm2979, %v3501, %v3505
      %v3507 = vrot.slane %v2594, 4
      %v3508 = vrot.slane %v2597, 5
      %v3509 = vor.u32 %v3507, %v3508
      %v3510 = vsel %vm2979, %v3505, %v3509
      %v3511 = vrot.slane %v2603, 4
      %v3512 = vrot.slane %v2606, 5
      %v3513 = vor.u32 %v3511, %v3512
      %v3514 = vsel %vm2979, %v3509, %v3513
      %v3515 = vrot.slane %v2612, 4
      %v3516 = vrot.slane %v2615, 5
      %v3517 = vor.u32 %v3515, %v3516
      %v3518 = vsel %vm2979, %v3513, %v3517
      %v3519 = vrot.slane %v2621, 4
      %v3520 = vrot.slane %v2624, 5
      %v3521 = vor.u32 %v3519, %v3520
      %v3522 = vsel %vm2979, %v3517, %v3521
      %v3523 = vrot.slane %v2630, 4
      %v3524 = vrot.slane %v2633, 5
      %v3525 = vor.u32 %v3523, %v3524
      %v3526 = vsel %vm2979, %v3521, %v3525
      %v3527 = vrot.slane %v2639, 4
      %v3528 = vrot.slane %v2642, 5
      %v3529 = vor.u32 %v3527, %v3528
      %v3530 = vsel %vm2979, %v3525, %v3529
      %v3531 = vrot.slane %v2648, 4
      %v3532 = vrot.slane %v2651, 5
      %v3533 = vor.u32 %v3531, %v3532
      %v3534 = vsel %vm2979, %v3529, %v3533
      %v3536 = vshrl.u32 %v3464, 16
      %v3538 = vrot.slane %v3536, 4
      %v3539 = vshll.u32 %v3464, 16
      %v3541 = vrot.slane %v3539, 5
      %v3542 = vor.u32 %v3538, %v3541
      %v3543 = vsel %vm2979, %v3533, %v3542
      %v3545 = vsel %vm444, %v3478, 0
      %v3548 = vsel %vm444, %v3482, 0
      %v3551 = vsel %vm444, %v3486, 0
      %v3554 = vsel %vm444, %v3490, 0
      %v3557 = vsel %vm444, %v3494, 0
      %v3560 = vsel %vm444, %v3498, 0
      %v3563 = vsel %vm444, %v3502, 0
      %v3566 = vsel %vm444, %v3506, 0
      %v3569 = vsel %vm444, %v3510, 0
      %v3572 = vsel %vm444, %v3514, 0
      %v3575 = vsel %vm444, %v3518, 0
      %v3578 = vsel %vm444, %v3522, 0
      %v3581 = vsel %vm444, %v3526, 0
      %v3584 = vsel %vm444, %v3530, 0
      %v3587 = vsel %vm444, %v3534, 0
      %v3590 = vsel %vm444, %v3543, 0
      %v3593 = vsel %vm1280, %v3466, 0
      %3595 = vmatprep.subr.bf16.mxu0 0
      %3596 = vmatpush1.bf16.msra.mxu0 %v3593
      %3597 = vmatprep.subr.bf16.mxu0 0
      %3598 = vmatpush1.bf16.msra.mxu0 0
      %3599 = vmatprep.subr.bf16.mxu0 0
      %3600 = vmatpush1.bf16.msra.mxu0 0
      %3601 = vmatprep.subr.bf16.mxu0 0
      %3602 = vmatpush1.bf16.msra.mxu0 0
      %3603 = vmatprep.subr.bf16.mxu0 0
      %3604 = vmatpush1.bf16.msra.mxu0 0
      %3605 = vmatprep.subr.bf16.mxu0 0
      %3606 = vmatpush1.bf16.msra.mxu0 0
      %3607 = vmatprep.subr.bf16.mxu0 0
      %3608 = vmatpush1.bf16.msra.mxu0 0
      %3609 = vmatprep.subr.bf16.mxu0 0
      %3610 = vmatpush1.bf16.msra.mxu0 0
      %3611 = vmatprep.subr.bf16.mxu0 0
      %3612 = vmatpush1.bf16.msra.mxu0 0
      %3613 = vmatprep.subr.bf16.mxu0 0
      %3614 = vmatpush1.bf16.msra.mxu0 0
      %3615 = vmatprep.subr.bf16.mxu0 0
      %3616 = vmatpush1.bf16.msra.mxu0 0
      %3617 = vmatprep.subr.bf16.mxu0 0
      %3618 = vmatpush1.bf16.msra.mxu0 0
      %3619 = vmatprep.subr.bf16.mxu0 0
      %3620 = vmatpush1.bf16.msra.mxu0 0
      %3621 = vmatprep.subr.bf16.mxu0 0
      %3622 = vmatpush1.bf16.msra.mxu0 0
      %3623 = vmatprep.subr.bf16.mxu0 0
      %3624 = vmatpush1.bf16.msra.mxu0 0
      %3625 = vmatprep.subr.bf16.mxu0 0
      %3626 = vmatpush1.bf16.msra.mxu0 0
      %3627 = vmatprep.mubr.bf16.mxu0 0
      %3628 = vmatmul.mubr.bf16.gmra.mrb[0].mxu0 %v3545
      %v3629 = vpop.f32.mrb[0].mxu0
      %v3630 = vadd.f32 0.0, %v3629
      %v3631 = vpop.f32.mrb[0].mxu0
      %v3632 = vpop.f32.mrb[0].mxu0
      %v3633 = vadd.f32 0.0, %v3632
      %v3634 = vpop.f32.mrb[0].mxu0
      %3635 = vmatprep.mubr.bf16.mxu0 0
      %3636 = vmatmul.mubr.bf16.gmra.mrb[0].mxu0 %v3548
      %v3637 = vpop.f32.mrb[0].mxu0
      %v3638 = vadd.f32 0.0, %v3637
      %v3639 = vpop.f32.mrb[0].mxu0
      %v3640 = vpop.f32.mrb[0].mxu0
      %v3641 = vadd.f32 0.0, %v3640
      %v3642 = vpop.f32.mrb[0].mxu0
      %3643 = vmatprep.mubr.bf16.mxu0 0
      %3644 = vmatmul.mubr.bf16.gmra.mrb[0].mxu0 %v3551
      %v3645 = vpop.f32.mrb[0].mxu0
      %v3646 = vadd.f32 0.0, %v3645
      %v3647 = vpop.f32.mrb[0].mxu0
      %v3648 = vpop.f32.mrb[0].mxu0
      %v3649 = vadd.f32 0.0, %v3648
      %v3650 = vpop.f32.mrb[0].mxu0
      %3651 = vmatprep.mubr.bf16.mxu0 0
      %3652 = vmatmul.mubr.bf16.gmra.mrb[0].mxu0 %v3554
      %v3653 = vpop.f32.mrb[0].mxu0
      %v3654 = vadd.f32 0.0, %v3653
      %v3655 = vpop.f32.mrb[0].mxu0
      %v3656 = vpop.f32.mrb[0].mxu0
      %v3657 = vadd.f32 0.0, %v3656
      %v3658 = vpop.f32.mrb[0].mxu0
      %3659 = vmatprep.mubr.bf16.mxu0 0
      %3660 = vmatmul.mubr.bf16.gmra.mrb[0].mxu0 %v3557
      %v3661 = vpop.f32.mrb[0].mxu0
      %v3662 = vadd.f32 0.0, %v3661
      %v3663 = vpop.f32.mrb[0].mxu0
      %v3664 = vpop.f32.mrb[0].mxu0
      %v3665 = vadd.f32 0.0, %v3664
      %v3666 = vpop.f32.mrb[0].mxu0
      %3667 = vmatprep.mubr.bf16.mxu0 0
      %3668 = vmatmul.mubr.bf16.gmra.mrb[0].mxu0 %v3560
      %v3669 = vpop.f32.mrb[0].mxu0
      %v3670 = vadd.f32 0.0, %v3669
      %v3671 = vpop.f32.mrb[0].mxu0
      %v3672 = vpop.f32.mrb[0].mxu0
      %v3673 = vadd.f32 0.0, %v3672
      %v3674 = vpop.f32.mrb[0].mxu0
      %3675 = vmatprep.mubr.bf16.mxu0 0
      %3676 = vmatmul.mubr.bf16.gmra.mrb[0].mxu0 %v3563
      %v3677 = vpop.f32.mrb[0].mxu0
      %v3678 = vadd.f32 0.0, %v3677
      %v3679 = vpop.f32.mrb[0].mxu0
      %v3680 = vpop.f32.mrb[0].mxu0
      %v3681 = vadd.f32 0.0, %v3680
      %v3682 = vpop.f32.mrb[0].mxu0
      %3683 = vmatprep.mubr.bf16.mxu0 0
      %3684 = vmatmul.mubr.bf16.gmra.mrb[0].mxu0 %v3566
      %v3685 = vpop.f32.mrb[0].mxu0
      %v3686 = vadd.f32 0.0, %v3685
      %v3687 = vpop.f32.mrb[0].mxu0
      %v3688 = vpop.f32.mrb[0].mxu0
      %v3689 = vadd.f32 0.0, %v3688
      %v3690 = vpop.f32.mrb[0].mxu0
      %3691 = vmatprep.mubr.bf16.mxu0 0
      %3692 = vmatmul.mubr.bf16.gmra.mrb[0].mxu0 %v3569
      %v3693 = vpop.f32.mrb[0].mxu0
      %v3694 = vadd.f32 0.0, %v3693
      %v3695 = vpop.f32.mrb[0].mxu0
      %v3696 = vpop.f32.mrb[0].mxu0
      %v3697 = vadd.f32 0.0, %v3696
      %v3698 = vpop.f32.mrb[0].mxu0
      %3699 = vmatprep.mubr.bf16.mxu0 0
      %3700 = vmatmul.mubr.bf16.gmra.mrb[0].mxu0 %v3572
      %v3701 = vpop.f32.mrb[0].mxu0
      %v3702 = vadd.f32 0.0, %v3701
      %v3703 = vpop.f32.mrb[0].mxu0
      %v3704 = vpop.f32.mrb[0].mxu0
      %v3705 = vadd.f32 0.0, %v3704
      %v3706 = vpop.f32.mrb[0].mxu0
      %3707 = vmatprep.mubr.bf16.mxu0 0
      %3708 = vmatmul.mubr.bf16.gmra.mrb[0].mxu0 %v3575
      %v3709 = vpop.f32.mrb[0].mxu0
      %v3710 = vadd.f32 0.0, %v3709
      %v3711 = vpop.f32.mrb[0].mxu0
      %v3712 = vpop.f32.mrb[0].mxu0
      %v3713 = vadd.f32 0.0, %v3712
      %v3714 = vpop.f32.mrb[0].mxu0
      %3715 = vmatprep.mubr.bf16.mxu0 0
      %3716 = vmatmul.mubr.bf16.gmra.mrb[0].mxu0 %v3578
      %v3717 = vpop.f32.mrb[0].mxu0
      %v3718 = vadd.f32 0.0, %v3717
      %v3719 = vpop.f32.mrb[0].mxu0
      %v3720 = vpop.f32.mrb[0].mxu0
      %v3721 = vadd.f32 0.0, %v3720
      %v3722 = vpop.f32.mrb[0].mxu0
      %3723 = vmatprep.mubr.bf16.mxu0 0
      %3724 = vmatmul.mubr.bf16.gmra.mrb[0].mxu0 %v3581
      %v3725 = vpop.f32.mrb[0].mxu0
      %v3726 = vadd.f32 0.0, %v3725
      %v3727 = vpop.f32.mrb[0].mxu0
      %v3728 = vpop.f32.mrb[0].mxu0
      %v3729 = vadd.f32 0.0, %v3728
      %v3730 = vpop.f32.mrb[0].mxu0
      %3731 = vmatprep.mubr.bf16.mxu0 0
      %3732 = vmatmul.mubr.bf16.gmra.mrb[0].mxu0 %v3584
      %v3733 = vpop.f32.mrb[0].mxu0
      %v3734 = vadd.f32 0.0, %v3733
      %v3735 = vpop.f32.mrb[0].mxu0
      %v3736 = vpop.f32.mrb[0].mxu0
      %v3737 = vadd.f32 0.0, %v3736
      %v3738 = vpop.f32.mrb[0].mxu0
      %3739 = vmatprep.mubr.bf16.mxu0 0
      %3740 = vmatmul.mubr.bf16.gmra.mrb[0].mxu0 %v3587
      %v3741 = vpop.f32.mrb[0].mxu0
      %v3742 = vadd.f32 0.0, %v3741
      %v3743 = vpop.f32.mrb[0].mxu0
      %v3744 = vpop.f32.mrb[0].mxu0
      %v3745 = vadd.f32 0.0, %v3744
      %v3746 = vpop.f32.mrb[0].mxu0
      %3747 = vmatprep.mubr.bf16.mxu0 0
      %3748 = vmatmul.mubr.bf16.gmra.mrb[0].mxu0 %v3590
      %v3749 = vpop.f32.mrb[0].mxu0
      %v3750 = vadd.f32 0.0, %v3749
      %v3751 = vpop.f32.mrb[0].mxu0
      %v3752 = vpop.f32.mrb[0].mxu0
      %v3753 = vadd.f32 0.0, %v3752
      %v3754 = vpop.f32.mrb[0].mxu0
      %3755 = vdwg.mxu0
      %v3756 = vadd.f32 %v3338, %v3630
      %v3757 = vadd.f32 %v3341, %v3633
      %v3758 = vadd.f32 %v3346, %v3638
      %v3759 = vadd.f32 %v3349, %v3641
      %v3760 = vadd.f32 %v3354, %v3646
      %v3761 = vadd.f32 %v3357, %v3649
      %v3762 = vadd.f32 %v3362, %v3654
      %v3763 = vadd.f32 %v3365, %v3657
      %v3764 = vadd.f32 %v3370, %v3662
      %v3765 = vadd.f32 %v3373, %v3665
      %v3766 = vadd.f32 %v3378, %v3670
      %v3767 = vadd.f32 %v3381, %v3673
      %v3768 = vadd.f32 %v3386, %v3678
      %v3769 = vadd.f32 %v3389, %v3681
      %v3770 = vadd.f32 %v3394, %v3686
      %v3771 = vadd.f32 %v3397, %v3689
      %v3772 = vadd.f32 %v3402, %v3694
      %v3773 = vadd.f32 %v3405, %v3697
      %v3774 = vadd.f32 %v3410, %v3702
      %v3775 = vadd.f32 %v3413, %v3705
      %v3776 = vadd.f32 %v3418, %v3710
      %v3777 = vadd.f32 %v3421, %v3713
      %v3778 = vadd.f32 %v3426, %v3718
      %v3779 = vadd.f32 %v3429, %v3721
      %v3780 = vadd.f32 %v3434, %v3726
      %v3781 = vadd.f32 %v3437, %v3729
      %v3782 = vadd.f32 %v3442, %v3734
      %v3783 = vadd.f32 %v3445, %v3737
      %v3784 = vadd.f32 %v3450, %v3742
      %v3785 = vadd.f32 %v3453, %v3745
      %v3786 = vadd.f32 %v3458, %v3750
      %v3787 = vadd.f32 %v3461, %v3753
      %v3788 = vmul.f32 %v1126, %v3756
      %v3789 = vmul.f32 %v1127, %v3757
      %v3790 = vmul.f32 %v1128, %v3758
      %v3791 = vmul.f32 %v1129, %v3759
      %v3792 = vmul.f32 %v1130, %v3760
      %v3793 = vmul.f32 %v1131, %v3761
      %v3794 = vmul.f32 %v1132, %v3762
      %v3795 = vmul.f32 %v1133, %v3763
      %v3796 = vmul.f32 %v1134, %v3764
      %v3797 = vmul.f32 %v1135, %v3765
      %v3798 = vmul.f32 %v1136, %v3766
      %v3799 = vmul.f32 %v1137, %v3767
      %v3800 = vmul.f32 %v1138, %v3768
      %v3801 = vmul.f32 %v1139, %v3769
      %v3802 = vmul.f32 %v1140, %v3770
      %v3803 = vmul.f32 %v1141, %v3771
      %v3804 = vmul.f32 %v1142, %v3772
      %v3805 = vmul.f32 %v1143, %v3773
      %v3806 = vmul.f32 %v1144, %v3774
      %v3807 = vmul.f32 %v1145, %v3775
      %v3808 = vmul.f32 %v1146, %v3776
      %v3809 = vmul.f32 %v1147, %v3777
      %v3810 = vmul.f32 %v1148, %v3778
      %v3811 = vmul.f32 %v1149, %v3779
      %v3812 = vmul.f32 %v1150, %v3780
      %v3813 = vmul.f32 %v1151, %v3781
      %v3814 = vmul.f32 %v1152, %v3782
      %v3815 = vmul.f32 %v1153, %v3783
      %v3816 = vmul.f32 %v1154, %v3784
      %v3817 = vmul.f32 %v1155, %v3785
      %v3818 = vmul.f32 %v1156, %v3786
      %v3819 = vmul.f32 %v1157, %v3787
      %v3820 = vadd.f32 %v2941, %v3788
      %v3821 = vadd.f32 %v2942, %v3789
      %v3822 = vadd.f32 %v2943, %v3790
      %v3823 = vadd.f32 %v2944, %v3791
      %v3824 = vadd.f32 %v2945, %v3792
      %v3825 = vadd.f32 %v2946, %v3793
      %v3826 = vadd.f32 %v2947, %v3794
      %v3827 = vadd.f32 %v2948, %v3795
      %v3828 = vadd.f32 %v2949, %v3796
      %v3829 = vadd.f32 %v2950, %v3797
      %v3830 = vadd.f32 %v2951, %v3798
      %v3831 = vadd.f32 %v2952, %v3799
      %v3832 = vadd.f32 %v2953, %v3800
      %v3833 = vadd.f32 %v2954, %v3801
      %v3834 = vadd.f32 %v2955, %v3802
      %v3835 = vadd.f32 %v2956, %v3803
      %v3836 = vadd.f32 %v2957, %v3804
      %v3837 = vadd.f32 %v2958, %v3805
      %v3838 = vadd.f32 %v2959, %v3806
      %v3839 = vadd.f32 %v2960, %v3807
      %v3840 = vadd.f32 %v2961, %v3808
      %v3841 = vadd.f32 %v2962, %v3809
      %v3842 = vadd.f32 %v2963, %v3810
      %v3843 = vadd.f32 %v2964, %v3811
      %v3844 = vadd.f32 %v2965, %v3812
      %v3845 = vadd.f32 %v2966, %v3813
      %v3846 = vadd.f32 %v2967, %v3814
      %v3847 = vadd.f32 %v2968, %v3815
      %v3848 = vadd.f32 %v2969, %v3816
      %v3849 = vadd.f32 %v2970, %v3817
      %v3850 = vadd.f32 %v2971, %v3818
      %v3851 = vadd.f32 %v2972, %v3819
      %v3852 = vpack.c.bf16 %v3821, %v3820
      %v3853 = vpack.c.bf16 %v3823, %v3822
      %v3854 = vpack.c.bf16 %v3825, %v3824
      %v3855 = vpack.c.bf16 %v3827, %v3826
      %v3856 = vpack.c.bf16 %v3829, %v3828
      %v3857 = vpack.c.bf16 %v3831, %v3830
      %v3858 = vpack.c.bf16 %v3833, %v3832
      %v3859 = vpack.c.bf16 %v3835, %v3834
      %v3860 = vpack.c.bf16 %v3837, %v3836
      %v3861 = vpack.c.bf16 %v3839, %v3838
      %v3862 = vpack.c.bf16 %v3841, %v3840
      %v3863 = vpack.c.bf16 %v3843, %v3842
      %v3864 = vpack.c.bf16 %v3845, %v3844
      %v3865 = vpack.c.bf16 %v3847, %v3846
      %v3866 = vpack.c.bf16 %v3849, %v3848
      %v3867 = vpack.c.bf16 %v3851, %v3850
      %v3884 = vunpack.c.l.b16 %v3852
      %v3885 = vunpack.c.h.b16 %v3852
      %v3886 = vunpack.c.l.b16 %v3853
      %v3887 = vunpack.c.h.b16 %v3853
      %v3888 = vunpack.c.l.b16 %v3854
      %v3889 = vunpack.c.h.b16 %v3854
      %v3890 = vunpack.c.l.b16 %v3855
      %v3891 = vunpack.c.h.b16 %v3855
      %v3892 = vunpack.c.l.b16 %v3856
      %v3893 = vunpack.c.h.b16 %v3856
      %v3894 = vunpack.c.l.b16 %v3857
      %v3895 = vunpack.c.h.b16 %v3857
      %v3896 = vunpack.c.l.b16 %v3858
      %v3897 = vunpack.c.h.b16 %v3858
      %v3898 = vunpack.c.l.b16 %v3859
      %v3899 = vunpack.c.h.b16 %v3859
      %v3900 = vunpack.c.l.b16 %v3860
      %v3901 = vunpack.c.h.b16 %v3860
      %v3902 = vunpack.c.l.b16 %v3861
      %v3903 = vunpack.c.h.b16 %v3861
      %v3904 = vunpack.c.l.b16 %v3862
      %v3905 = vunpack.c.h.b16 %v3862
      %v3906 = vunpack.c.l.b16 %v3863
      %v3907 = vunpack.c.h.b16 %v3863
      %v3908 = vunpack.c.l.b16 %v3864
      %v3909 = vunpack.c.h.b16 %v3864
      %v3910 = vunpack.c.l.b16 %v3865
      %v3911 = vunpack.c.h.b16 %v3865
      %v3912 = vunpack.c.l.b16 %v3866
      %v3913 = vunpack.c.h.b16 %v3866
      %v3914 = vunpack.c.l.b16 %v3867
      %v3915 = vunpack.c.h.b16 %v3867
      %v3916 = vpack.c.b16 %v3884, %v3884
      %v3917 = vpack.c.b16 %v3885, %v3885
      %v3918 = vpack.c.b16 %v3886, %v3886
      %v3919 = vpack.c.b16 %v3887, %v3887
      %v3920 = vpack.c.b16 %v3888, %v3888
      %v3921 = vpack.c.b16 %v3889, %v3889
      %v3922 = vpack.c.b16 %v3890, %v3890
      %v3923 = vpack.c.b16 %v3891, %v3891
      %v3924 = vpack.c.b16 %v3892, %v3892
      %v3925 = vpack.c.b16 %v3893, %v3893
      %v3926 = vpack.c.b16 %v3894, %v3894
      %v3927 = vpack.c.b16 %v3895, %v3895
      %v3928 = vpack.c.b16 %v3896, %v3896
      %v3929 = vpack.c.b16 %v3897, %v3897
      %v3930 = vpack.c.b16 %v3898, %v3898
      %v3931 = vpack.c.b16 %v3899, %v3899
      %v3932 = vpack.c.b16 %v3900, %v3900
      %v3933 = vpack.c.b16 %v3901, %v3901
      %v3934 = vpack.c.b16 %v3902, %v3902
      %v3935 = vpack.c.b16 %v3903, %v3903
      %v3936 = vpack.c.b16 %v3904, %v3904
      %v3937 = vpack.c.b16 %v3905, %v3905
      %v3938 = vpack.c.b16 %v3906, %v3906
      %v3939 = vpack.c.b16 %v3907, %v3907
      %v3940 = vpack.c.b16 %v3908, %v3908
      %v3941 = vpack.c.b16 %v3909, %v3909
      %v3942 = vpack.c.b16 %v3910, %v3910
      %v3943 = vpack.c.b16 %v3911, %v3911
      %v3944 = vpack.c.b16 %v3912, %v3912
      %v3945 = vpack.c.b16 %v3913, %v3913
      %v3946 = vpack.c.b16 %v3914, %v3914
      %v3947 = vpack.c.b16 %v3915, %v3915
      %3980 = vst.msk [vmem:[%s262] sm:$0xf] %vm446, %v3916
      %3981 = vst.msk [vmem:[%s262 + $0x4] sm:$0xf] %vm446, %v3917
      %3982 = vst.msk [vmem:[%s262 + $0x8] sm:$0xf] %vm446, %v3918
      %3983 = vst.msk [vmem:[%s262 + $0xc] sm:$0xf] %vm446, %v3919
      %3984 = vst.msk [vmem:[%s262 + $0x10] sm:$0xf] %vm446, %v3920
      %3985 = vst.msk [vmem:[%s262 + $0x14] sm:$0xf] %vm446, %v3921
      %3986 = vst.msk [vmem:[%s262 + $0x18] sm:$0xf] %vm446, %v3922
      %3987 = vst.msk [vmem:[%s262 + $0x1c] sm:$0xf] %vm446, %v3923
      %3988 = vst.msk [vmem:[%s262 + $0x20] sm:$0xf] %vm446, %v3924
      %3989 = vst.msk [vmem:[%s262 + $0x24] sm:$0xf] %vm446, %v3925
      %3990 = vst.msk [vmem:[%s262 + $0x28] sm:$0xf] %vm446, %v3926
      %3991 = vst.msk [vmem:[%s262 + $0x2c] sm:$0xf] %vm446, %v3927
      %3992 = vst.msk [vmem:[%s262 + $0x30] sm:$0xf] %vm446, %v3928
      %3993 = vst.msk [vmem:[%s262 + $0x34] sm:$0xf] %vm446, %v3929
      %3994 = vst.msk [vmem:[%s262 + $0x38] sm:$0xf] %vm446, %v3930
      %3995 = vst.msk [vmem:[%s262 + $0x3c] sm:$0xf] %vm446, %v3931
      %3996 = vst.msk [vmem:[%s262 + $0x40] sm:$0xf] %vm446, %v3932
      %3997 = vst.msk [vmem:[%s262 + $0x44] sm:$0xf] %vm446, %v3933
      %3998 = vst.msk [vmem:[%s262 + $0x48] sm:$0xf] %vm446, %v3934
      %3999 = vst.msk [vmem:[%s262 + $0x4c] sm:$0xf] %vm446, %v3935
      %4000 = vst.msk [vmem:[%s262 + $0x50] sm:$0xf] %vm446, %v3936
      %4001 = vst.msk [vmem:[%s262 + $0x54] sm:$0xf] %vm446, %v3937
      %4002 = vst.msk [vmem:[%s262 + $0x58] sm:$0xf] %vm446, %v3938
      %4003 = vst.msk [vmem:[%s262 + $0x5c] sm:$0xf] %vm446, %v3939
      %4004 = vst.msk [vmem:[%s262 + $0x60] sm:$0xf] %vm446, %v3940
      %4005 = vst.msk [vmem:[%s262 + $0x64] sm:$0xf] %vm446, %v3941
      %4006 = vst.msk [vmem:[%s262 + $0x68] sm:$0xf] %vm446, %v3942
      %4007 = vst.msk [vmem:[%s262 + $0x6c] sm:$0xf] %vm446, %v3943
      %4008 = vst.msk [vmem:[%s262 + $0x70] sm:$0xf] %vm446, %v3944
      %4009 = vst.msk [vmem:[%s262 + $0x74] sm:$0xf] %vm446, %v3945
      %4010 = vst.msk [vmem:[%s262 + $0x78] sm:$0xf] %vm446, %v3946
      %4011 = vst.msk [vmem:[%s262 + $0x7c] sm:$0xf] %vm446, %v3947
      %v4012 = vsel %vm444, %v3820, 0.0
      %v4013 = vsel %vm444, %v3821, 0.0
      %v4014 = vadd.f32 %v4012, %v4013
      %v4015 = vsel %vm444, %v3822, 0.0
      %v4016 = vadd.f32 %v4014, %v4015
      %v4017 = vsel %vm444, %v3823, 0.0
      %v4018 = vadd.f32 %v4016, %v4017
      %v4019 = vsel %vm444, %v3824, 0.0
      %v4020 = vadd.f32 %v4018, %v4019
      %v4021 = vsel %vm444, %v3825, 0.0
      %v4022 = vadd.f32 %v4020, %v4021
      %v4023 = vsel %vm444, %v3826, 0.0
      %v4024 = vadd.f32 %v4022, %v4023
      %v4025 = vsel %vm444, %v3827, 0.0
      %v4026 = vadd.f32 %v4024, %v4025
      %v4027 = vsel %vm444, %v3828, 0.0
      %v4028 = vadd.f32 %v4026, %v4027
      %v4029 = vsel %vm444, %v3829, 0.0
      %v4030 = vadd.f32 %v4028, %v4029
      %v4031 = vsel %vm444, %v3830, 0.0
      %v4032 = vadd.f32 %v4030, %v4031
      %v4033 = vsel %vm444, %v3831, 0.0
      %v4034 = vadd.f32 %v4032, %v4033
      %v4035 = vsel %vm444, %v3832, 0.0
      %v4036 = vadd.f32 %v4034, %v4035
      %v4037 = vsel %vm444, %v3833, 0.0
      %v4038 = vadd.f32 %v4036, %v4037
      %v4039 = vsel %vm444, %v3834, 0.0
      %v4040 = vadd.f32 %v4038, %v4039
      %v4041 = vsel %vm444, %v3835, 0.0
      %v4042 = vadd.f32 %v4040, %v4041
      %v4043 = vsel %vm444, %v3836, 0.0
      %v4044 = vadd.f32 %v4042, %v4043
      %v4045 = vsel %vm444, %v3837, 0.0
      %v4046 = vadd.f32 %v4044, %v4045
      %v4047 = vsel %vm444, %v3838, 0.0
      %v4048 = vadd.f32 %v4046, %v4047
      %v4049 = vsel %vm444, %v3839, 0.0
      %v4050 = vadd.f32 %v4048, %v4049
      %v4051 = vsel %vm444, %v3840, 0.0
      %v4052 = vadd.f32 %v4050, %v4051
      %v4053 = vsel %vm444, %v3841, 0.0
      %v4054 = vadd.f32 %v4052, %v4053
      %v4055 = vsel %vm444, %v3842, 0.0
      %v4056 = vadd.f32 %v4054, %v4055
      %v4057 = vsel %vm444, %v3843, 0.0
      %v4058 = vadd.f32 %v4056, %v4057
      %v4059 = vsel %vm444, %v3844, 0.0
      %v4060 = vadd.f32 %v4058, %v4059
      %v4061 = vsel %vm444, %v3845, 0.0
      %v4062 = vadd.f32 %v4060, %v4061
      %v4063 = vsel %vm444, %v3846, 0.0
      %v4064 = vadd.f32 %v4062, %v4063
      %v4065 = vsel %vm444, %v3847, 0.0
      %v4066 = vadd.f32 %v4064, %v4065
      %v4067 = vsel %vm444, %v3848, 0.0
      %v4068 = vadd.f32 %v4066, %v4067
      %v4069 = vsel %vm444, %v3849, 0.0
      %v4070 = vadd.f32 %v4068, %v4069
      %v4071 = vsel %vm444, %v3850, 0.0
      %v4072 = vadd.f32 %v4070, %v4071
      %v4073 = vsel %vm444, %v3851, 0.0
      %v4074 = vadd.f32 %v4072, %v4073
      %v4075 = vrot.slane %v4074, 4
      %v4076 = vadd.f32 %v4074, %v4075
      %v4077 = vrot.slane %v4076, 2
      %v4078 = vadd.f32 %v4076, %v4077
      %v4079 = vrot.slane %v4078, 1
      %v4080 = vadd.f32 %v4078, %v4079
      %vm4081 = vcmask 24576
      %4082 = vst.msk [vmem:[%s265] sm:$0x1] %vm4081, %v4080
      %v4083 = vmul.f32 %v3820, %v3820
      %v4084 = vmul.f32 %v3821, %v3821
      %v4085 = vmul.f32 %v3822, %v3822
      %v4086 = vmul.f32 %v3823, %v3823
      %v4087 = vmul.f32 %v3824, %v3824
      %v4088 = vmul.f32 %v3825, %v3825
      %v4089 = vmul.f32 %v3826, %v3826
      %v4090 = vmul.f32 %v3827, %v3827
      %v4091 = vmul.f32 %v3828, %v3828
      %v4092 = vmul.f32 %v3829, %v3829
      %v4093 = vmul.f32 %v3830, %v3830
      %v4094 = vmul.f32 %v3831, %v3831
      %v4095 = vmul.f32 %v3832, %v3832
      %v4096 = vmul.f32 %v3833, %v3833
      %v4097 = vmul.f32 %v3834, %v3834
      %v4098 = vmul.f32 %v3835, %v3835
      %v4099 = vmul.f32 %v3836, %v3836
      %v4100 = vmul.f32 %v3837, %v3837
      %v4101 = vmul.f32 %v3838, %v3838
      %v4102 = vmul.f32 %v3839, %v3839
      %v4103 = vmul.f32 %v3840, %v3840
      %v4104 = vmul.f32 %v3841, %v3841
      %v4105 = vmul.f32 %v3842, %v3842
      %v4106 = vmul.f32 %v3843, %v3843
      %v4107 = vmul.f32 %v3844, %v3844
      %v4108 = vmul.f32 %v3845, %v3845
      %v4109 = vmul.f32 %v3846, %v3846
      %v4110 = vmul.f32 %v3847, %v3847
      %v4111 = vmul.f32 %v3848, %v3848
      %v4112 = vmul.f32 %v3849, %v3849
      %v4113 = vmul.f32 %v3850, %v3850
      %v4114 = vmul.f32 %v3851, %v3851
      %v4115 = vsel %vm444, %v4083, 0.0
      %v4116 = vsel %vm444, %v4084, 0.0
      %v4117 = vadd.f32 %v4115, %v4116
      %v4118 = vsel %vm444, %v4085, 0.0
      %v4119 = vadd.f32 %v4117, %v4118
      %v4120 = vsel %vm444, %v4086, 0.0
      %v4121 = vadd.f32 %v4119, %v4120
      %v4122 = vsel %vm444, %v4087, 0.0
      %v4123 = vadd.f32 %v4121, %v4122
      %v4124 = vsel %vm444, %v4088, 0.0
      %v4125 = vadd.f32 %v4123, %v4124
      %v4126 = vsel %vm444, %v4089, 0.0
      %v4127 = vadd.f32 %v4125, %v4126
      %v4128 = vsel %vm444, %v4090, 0.0
      %v4129 = vadd.f32 %v4127, %v4128
      %v4130 = vsel %vm444, %v4091, 0.0
      %v4131 = vadd.f32 %v4129, %v4130
      %v4132 = vsel %vm444, %v4092, 0.0
      %v4133 = vadd.f32 %v4131, %v4132
      %v4134 = vsel %vm444, %v4093, 0.0
      %v4135 = vadd.f32 %v4133, %v4134
      %v4136 = vsel %vm444, %v4094, 0.0
      %v4137 = vadd.f32 %v4135, %v4136
      %v4138 = vsel %vm444, %v4095, 0.0
      %v4139 = vadd.f32 %v4137, %v4138
      %v4140 = vsel %vm444, %v4096, 0.0
      %v4141 = vadd.f32 %v4139, %v4140
      %v4142 = vsel %vm444, %v4097, 0.0
      %v4143 = vadd.f32 %v4141, %v4142
      %v4144 = vsel %vm444, %v4098, 0.0
      %v4145 = vadd.f32 %v4143, %v4144
      %v4146 = vsel %vm444, %v4099, 0.0
      %v4147 = vadd.f32 %v4145, %v4146
      %v4148 = vsel %vm444, %v4100, 0.0
      %v4149 = vadd.f32 %v4147, %v4148
      %v4150 = vsel %vm444, %v4101, 0.0
      %v4151 = vadd.f32 %v4149, %v4150
      %v4152 = vsel %vm444, %v4102, 0.0
      %v4153 = vadd.f32 %v4151, %v4152
      %v4154 = vsel %vm444, %v4103, 0.0
      %v4155 = vadd.f32 %v4153, %v4154
      %v4156 = vsel %vm444, %v4104, 0.0
      %v4157 = vadd.f32 %v4155, %v4156
      %v4158 = vsel %vm444, %v4105, 0.0
      %v4159 = vadd.f32 %v4157, %v4158
      %v4160 = vsel %vm444, %v4106, 0.0
      %v4161 = vadd.f32 %v4159, %v4160
      %v4162 = vsel %vm444, %v4107, 0.0
      %v4163 = vadd.f32 %v4161, %v4162
      %v4164 = vsel %vm444, %v4108, 0.0
      %v4165 = vadd.f32 %v4163, %v4164
      %v4166 = vsel %vm444, %v4109, 0.0
      %v4167 = vadd.f32 %v4165, %v4166
      %v4168 = vsel %vm444, %v4110, 0.0
      %v4169 = vadd.f32 %v4167, %v4168
      %v4170 = vsel %vm444, %v4111, 0.0
      %v4171 = vadd.f32 %v4169, %v4170
      %v4172 = vsel %vm444, %v4112, 0.0
      %v4173 = vadd.f32 %v4171, %v4172
      %v4174 = vsel %vm444, %v4113, 0.0
      %v4175 = vadd.f32 %v4173, %v4174
      %v4176 = vsel %vm444, %v4114, 0.0
      %v4177 = vadd.f32 %v4175, %v4176
      %v4178 = vrot.slane %v4177, 4
      %v4179 = vadd.f32 %v4177, %v4178
      %v4180 = vrot.slane %v4179, 2
      %v4181 = vadd.f32 %v4179, %v4180
      %v4182 = vrot.slane %v4181, 1
      %v4183 = vadd.f32 %v4181, %v4182
      %4184 = vst.msk [vmem:[%s268] sm:$0x1] %vm4081, %v4183
      %p4185 = scmp.lt.s32.totalorder %s18, 1
      %s4186 = scalar_select %p4185, %s18, 1
      %s4187 = smul.addr %s4186, 32
      %s4188 = smul.addr %s4187, 4
      %s4189 = scalar_lea.vmem %s4, %s4188
      %p4190 = scmp.lt.s32.totalorder %s18, 1
      %s4191 = scalar_select %p4190, %s18, 1
      %s4192 = scalar_lea.vmem %s5, %s4191
      %p4193 = scmp.lt.s32.totalorder %s18, 1
      %s4194 = scalar_select %p4193, %s18, 1
      %s4195 = scalar_lea.vmem %s6, %s4194
      // Predicated region
      $region37: #{resnet_block_forward.5} parent=35 // pred_check
        %p4196 = pneg %p125
      $region38: #{resnet_block_forward.5} parent=35 // pred_check_branch
        %4198 = sbr.rel (%p4196) target = $region40
      $region39: #{resnet_block_forward.5} parent=35 // pred_region
        _
      $region40: #{resnet_block_forward.5} parent=35 // pred_fallthru
        _
      // Predicated region
      $region41: #{resnet_block_forward.5} parent=35 // pred_check
        %p4199 = pneg %p151
      $region42: #{resnet_block_forward.5} parent=35 // pred_check_branch
        %4201 = sbr.rel (%p4199) target = $region44
      $region43: #{resnet_block_forward.5} parent=35 // pred_region
        _
      $region44: #{resnet_block_forward.5} parent=35 // pred_fallthru
        _
      // Predicated region
      $region45: #{resnet_block_forward.5} parent=35 // pred_check
        %p4202 = pneg %p177
      $region46: #{resnet_block_forward.5} parent=35 // pred_check_branch
        %4204 = sbr.rel (%p4202) target = $region48
      $region47: #{resnet_block_forward.5} parent=35 // pred_region
        _
      $region48: #{resnet_block_forward.5} parent=35 // pred_fallthru
        _
    $region36: #{resnet_block_forward.5} parent=5 // pred_fallthru
      _
    %p4205 = scmp.le.s32.totalorder 2, %s13
    // Predicated region
    $region49: #{resnet_block_forward.5} parent=5 // pred_check
      %p4206 = pneg %p4205
    $region50: #{resnet_block_forward.5} parent=5 // pred_check_branch
      %4208 = sbr.rel (%p4206) target = $region52
    $region51: #{resnet_block_forward.5} parent=5 // pred_region
      %s4209 = ssub.s32 %s13, 2
      // Predicated region
      $region53: #{resnet_block_forward.5} parent=51 // pred_check
        %p4210 = pneg %p131
      $region54: #{resnet_block_forward.5} parent=51 // pred_check_branch
        %4212 = sbr.rel (%p4210) target = $region56
      $region55: #{resnet_block_forward.5} parent=51 // pred_region
        %p4213 = scmp.lt.s32.totalorder %s19, 1
        %s4214 = scalar_select %p4213, %s19, 1
        %s4215 = smul.addr %s4214, 32
        %s4216 = smul.addr %s4215, 4
        %s4217 = scalar_lea.vmem %s4, %s4216
      $region56: #{resnet_block_forward.5} parent=51 // pred_fallthru
        _
      // Predicated region
      $region57: #{resnet_block_forward.5} parent=51 // pred_check
        %p4218 = pneg %p157
      $region58: #{resnet_block_forward.5} parent=51 // pred_check_branch
        %4220 = sbr.rel (%p4218) target = $region60
      $region59: #{resnet_block_forward.5} parent=51 // pred_region
        %p4221 = scmp.lt.s32.totalorder %s19, 1
        %s4222 = scalar_select %p4221, %s19, 1
        %s4223 = scalar_lea.vmem %s5, %s4222
      $region60: #{resnet_block_forward.5} parent=51 // pred_fallthru
        _
      // Predicated region
      $region61: #{resnet_block_forward.5} parent=51 // pred_check
        %p4224 = pneg %p183
      $region62: #{resnet_block_forward.5} parent=51 // pred_check_branch
        %4226 = sbr.rel (%p4224) target = $region64
      $region63: #{resnet_block_forward.5} parent=51 // pred_region
        %p4227 = scmp.lt.s32.totalorder %s19, 1
        %s4228 = scalar_select %p4227, %s19, 1
        %s4229 = scalar_lea.vmem %s6, %s4228
      $region64: #{resnet_block_forward.5} parent=51 // pred_fallthru
        _
    $region52: #{resnet_block_forward.5} parent=5 // pred_fallthru
      _
  $region6: #{resnet_block_forward.5} parent=0 // loop_footer
    %s17 = sadd.s32 1, %s13
  $region7: #{resnet_block_forward.5} parent=0 // loop_footer_branch
    %12 = sbr.rel target = $region3
  $region8: #{resnet_block_forward.5} parent=0 // loop_exit
    _

</llo_original>
